<compile_context>
chip_gen: v6e
topology: v6e:2x2x1
jax: 0.10.0
libtpu: 0.0.40
codegen_flags: <defaults>
</compile_context>

<pallas_src>
import functools

import jax
import jax.numpy as jnp
import numpy as np
from jax.experimental import pallas as pl
from jax.experimental.pallas import tpu as pltpu


N_CLASSES = 10
IN_FEATURES = 1 * 28 * 28        # NCHW-flattened MNIST image = 784 (8-aligned)
H1P = 1536                       # 10*12*12 = 1440 padded to a multiple of 128
H2P = 384                        # 20*4*4   = 320  padded
H3P = 128                        # 60 padded
NOUTP = 128                      # 10 padded (lane-dense output block)

WEIGHT_DTYPE = jnp.bfloat16      # MXU-native operand dtype on v5e/v6e/v7x


def _round_up(n, m):
    return (n + m - 1) // m * m


def _cdiv(a, b):
    return -(-a // b)


# ----------------------------- Pallas kernel ------------------------------ #
def _convnet_kernel(x_ref, w1_ref, b1_ref, w2_ref, b2_ref, w3_ref, b3_ref,
                    w4_ref, b4_ref, o_ref, *, n_classes):
    """Fused ConvNet forward on one (TILE_B, 784) row block.  All four layers
    run back-to-back; intermediates never leave VMEM/vregs.  Matmul operands
    are bf16 (MXU-native); accumulation and all vector math stay f32."""
    xb = x_ref[...].astype(WEIGHT_DTYPE)
    h = jnp.dot(xb, w1_ref[...], preferred_element_type=jnp.float32)
    h = jnp.maximum(h + b1_ref[...], 0.0)                    # conv1 + relu
    h = jnp.dot(h.astype(WEIGHT_DTYPE), w2_ref[...],
                preferred_element_type=jnp.float32)
    h = jnp.maximum(h + b2_ref[...], 0.0)                    # conv2 + relu
    h = jnp.dot(h.astype(WEIGHT_DTYPE), w3_ref[...],
                preferred_element_type=jnp.float32)
    h = jnp.maximum(h + b3_ref[...], 0.0)                    # fc1 + relu
    y = jnp.dot(h.astype(WEIGHT_DTYPE), w4_ref[...],
                preferred_element_type=jnp.float32)
    y = y + b4_ref[...]                                      # fc2 logits (padded)

    # log_softmax over the real classes; padded lanes pushed to a large finite
    # negative so they contribute nothing to the max / logsumexp.
    col = jax.lax.broadcasted_iota(jnp.int32, y.shape, 1)
    valid = col < n_classes
    y = jnp.where(valid, y, -1e30)
    m = jnp.max(y, axis=-1, keepdims=True)
    s = y - m
    lse = jnp.log(jnp.sum(jnp.exp(s), axis=-1, keepdims=True))
    o_ref[...] = jnp.where(valid, s - lse, 0.0).astype(o_ref.dtype)


# ------------------------- one-time weight packing ------------------------ #
def _conv_as_dense(w, h, w_in, stride):
    """Dense D such that flat_NCHW(conv2d(x, w, stride)) == flat_NCHW(x) @ D."""
    w = np.asarray(w, np.float32)
    oc, ic, kh, kw = w.shape
    oh = (h - kh) // stride + 1
    ow = (w_in - kw) // stride + 1
    d = np.zeros((ic, h, w_in, oc, oh, ow), np.float32)
    for i in range(oh):
        for j in range(ow):
            for ki in range(kh):
                for kj in range(kw):
                    d[:, stride * i + ki, stride * j + kj, :, i, j] = w[:, :, ki, kj].T
    return d.reshape(ic * h * w_in, oc * oh * ow), oh, ow


def pack_params(params, weight_dtype=WEIGHT_DTYPE):
    """Convert PyTorch-layout params into padded, lane-aligned dense matrices.
    Weights are cast to bf16 (MXU operands); biases stay f32 (VPU math).
    Runs once outside the jitted hot path (pure host-side numpy)."""
    w1, b1, w2, b2, fw1, fb1, fw2, fb2 = [np.asarray(p, np.float32) for p in params]

    d1, oh1, ow1 = _conv_as_dense(w1, 28, 28, 2)     # (784, 1440)
    d2, oh2, ow2 = _conv_as_dense(w2, oh1, ow1, 2)   # (1440, 320), NCHW flatten
    b1e = np.repeat(b1, oh1 * ow1)                   # channel-major bias
    b2e = np.repeat(b2, oh2 * ow2)

    def pad2(mat, rows, cols):
        out = np.zeros((rows, cols), np.float32)
        out[:mat.shape[0], :mat.shape[1]] = mat
        return out

    def pad_bias(b, cols):
        out = np.zeros((1, cols), np.float32)
        out[0, :b.shape[0]] = b
        return out

    return (
        jnp.asarray(pad2(d1, IN_FEATURES, H1P), weight_dtype),   # (784, 1536)
        jnp.asarray(pad_bias(b1e, H1P), jnp.float32),
        jnp.asarray(pad2(d2, H1P, H2P), weight_dtype),           # (1536, 384)
        jnp.asarray(pad_bias(b2e, H2P), jnp.float32),
        jnp.asarray(pad2(fw1.T, H2P, H3P), weight_dtype),        # (384, 128)
        jnp.asarray(pad_bias(fb1, H3P), jnp.float32),
        jnp.asarray(pad2(fw2.T, H3P, NOUTP), weight_dtype),      # (128, 128)
        jnp.asarray(pad_bias(fb2, NOUTP), jnp.float32),
    )


# ------------------------------- forward ---------------------------------- #
def _choose_tile(B, tile_b):
    """Batch tile: multiple of 8, <= tile_b, chosen to minimize batch padding
    and to give the grid >= 2 steps when B > 8 (so both v7x TensorCores work)."""
    cap = max(8, min(_round_up(tile_b, 8), _round_up(B, 8)))
    n_steps = _cdiv(B, cap)
    if B > 8:
        n_steps = max(n_steps, 2)
    return _round_up(_cdiv(B, n_steps), 8)


def convnet_forward(x, packed, *, tile_b=512):
    """x: (B, 1, 28, 28) NCHW.  Returns (B, 10) log-probabilities."""
    w1, b1, w2, b2, w3, b3, w4, b4 = packed
    B = x.shape[0]
    x_flat = x.reshape(B, IN_FEATURES).astype(jnp.float32)   # NCHW flatten
    tile = _choose_tile(B, tile_b)
    bp = _round_up(B, tile)
    xp = x_flat if bp == B else jnp.pad(x_flat, ((0, bp - B), (0, 0)))

    def full_spec(a):
        # Constant index_map => weight stays VMEM-resident across grid steps.
        return pl.BlockSpec(a.shape, lambda i: (0, 0))

    out = pl.pallas_call(
        functools.partial(_convnet_kernel, n_classes=N_CLASSES),
        out_shape=jax.ShapeDtypeStruct((bp, NOUTP), jnp.float32),
        grid=(bp // tile,),
        in_specs=[
            pl.BlockSpec((tile, IN_FEATURES), lambda i: (i, 0)),
            full_spec(w1), full_spec(b1),
            full_spec(w2), full_spec(b2),
            full_spec(w3), full_spec(b3),
            full_spec(w4), full_spec(b4),
        ],
        out_specs=pl.BlockSpec((tile, NOUTP), lambda i: (i, 0)),
        compiler_params=pltpu.CompilerParams(
            dimension_semantics=("parallel",),       # shard row blocks (v7x 2 TCs)
            vmem_limit_bytes=48 * 1024 * 1024,       # ~19 MiB used @ tile=512
        ),
    )(xp, w1, b1, w2, b2, w3, b3, w4, b4)
    return out[:B, :N_CLASSES]


# ------------------------------ validation --------------------------------- #
def reference_forward(x, params):
    """Pure-JAX f32 reference (matches the PyTorch ConvNet.forward)."""
    w1, b1, w2, b2, fw1, fb1, fw2, fb2 = params
    dn = ("NCHW", "OIHW", "NCHW")
    y = jax.lax.conv_general_dilated(x, w1, (2, 2), "VALID", dimension_numbers=dn)
    y = jax.nn.relu(y + b1.reshape(1, -1, 1, 1))
    y = jax.lax.conv_general_dilated(y, w2, (2, 2), "VALID", dimension_numbers=dn)
    y = jax.nn.relu(y + b2.reshape(1, -1, 1, 1))
    y = y.reshape(x.shape[0], 320)
    y = jax.nn.relu(y @ fw1.T + fb1)
    y = y @ fw2.T + fb2
    return jax.nn.log_softmax(y, axis=1)


def init_params(key):
    ks = jax.random.split(key, 8)

    def u(k, shape, fan_in):
        bound = 1.0 / np.sqrt(fan_in)
        return jax.random.uniform(k, shape, jnp.float32, -bound, bound)

    w1 = u(ks[0], (10, 1, 5, 5), 1 * 5 * 5)
    b1 = u(ks[1], (10,), 1 * 5 * 5)
    w2 = u(ks[2], (20, 10, 5, 5), 10 * 5 * 5)
    b2 = u(ks[3], (20,), 10 * 5 * 5)
    fw1 = u(ks[4], (60, 320), 320)
    fb1 = u(ks[5], (60,), 320)
    fw2 = u(ks[6], (10, 60), 60)
    fb2 = u(ks[7], (10,), 60)
    return (w1, b1, w2, b2, fw1, fb1, fw2, fb2)


if __name__ == "__main__":
    key = jax.random.PRNGKey(0)
    kx, kp = jax.random.split(key)

    # MNIST-shaped input (the 320-wide flatten requires 1x28x28 inputs).
    B = 2
    x = jax.random.uniform(kx, (B, 1, 28, 28), jnp.float32)
    params = init_params(kp)
    packed = pack_params(params)          # one-time, outside the hot path

    fwd = jax.jit(convnet_forward)
    out = jax.block_until_ready(fwd(x, packed))

    # bf16 MXU operands vs f32 reference => loosened tolerance (per review).
    ref = jax.block_until_ready(reference_forward(x, params))
    np.testing.assert_allclose(np.asarray(out), np.asarray(ref),
                               rtol=2e-2, atol=2e-2)

    assert out.shape == (B, N_CLASSES)
    print("KERNEL_OK")
</pallas_src>

<mosaic_0001>
module attributes {stable_mosaic.version = 11 : i64} {
  func.func @_convnet_kernel(%arg0: i32, %arg1: memref<8x784xf32, #tpu.memory_space<vmem>>, %arg2: memref<784x1536xbf16, #tpu.memory_space<vmem>>, %arg3: memref<1x1536xf32, #tpu.memory_space<vmem>>, %arg4: memref<1536x384xbf16, #tpu.memory_space<vmem>>, %arg5: memref<1x384xf32, #tpu.memory_space<vmem>>, %arg6: memref<384x128xbf16, #tpu.memory_space<vmem>>, %arg7: memref<1x128xf32, #tpu.memory_space<vmem>>, %arg8: memref<128x128xbf16, #tpu.memory_space<vmem>>, %arg9: memref<1x128xf32, #tpu.memory_space<vmem>>, %arg10: memref<8x128xf32, #tpu.memory_space<vmem>>) attributes {dimension_semantics = [#tpu.dimension_semantics<parallel>], iteration_bounds = array<i64: 1>, scalar_prefetch = 0 : i64, scratch_operands = 0 : i64, tpu.core_type = #tpu.core_type<tc>, window_params = [{transform_indices = @transform_0, window_bounds = array<i64: 8, 784>}, {pipeline_mode = #tpu.pipeline_mode<synchronous>, transform_indices = @transform_1, window_bounds = array<i64: 784, 1536>}, {pipeline_mode = #tpu.pipeline_mode<synchronous>, transform_indices = @transform_2, window_bounds = array<i64: 1, 1536>}, {pipeline_mode = #tpu.pipeline_mode<synchronous>, transform_indices = @transform_3, window_bounds = array<i64: 1536, 384>}, {pipeline_mode = #tpu.pipeline_mode<synchronous>, transform_indices = @transform_4, window_bounds = array<i64: 1, 384>}, {pipeline_mode = #tpu.pipeline_mode<synchronous>, transform_indices = @transform_5, window_bounds = array<i64: 384, 128>}, {pipeline_mode = #tpu.pipeline_mode<synchronous>, transform_indices = @transform_6, window_bounds = array<i64: 1, 128>}, {pipeline_mode = #tpu.pipeline_mode<synchronous>, transform_indices = @transform_7, window_bounds = array<i64: 128, 128>}, {pipeline_mode = #tpu.pipeline_mode<synchronous>, transform_indices = @transform_8, window_bounds = array<i64: 1, 128>}, {transform_indices = @transform_9, window_bounds = array<i64: 8, 128>}]} {
    %c0 = arith.constant 0 : index
    %c0_0 = arith.constant 0 : index
    %0 = vector.load %arg1[%c0, %c0_0] : memref<8x784xf32, #tpu.memory_space<vmem>>, vector<8x784xf32>
    %1 = arith.truncf %0 : vector<8x784xf32> to vector<8x784xbf16>
    %c0_1 = arith.constant 0 : index
    %c0_2 = arith.constant 0 : index
    %2 = vector.load %arg2[%c0_1, %c0_2] : memref<784x1536xbf16, #tpu.memory_space<vmem>>, vector<784x1536xbf16>
    %cst = arith.constant dense<0.000000e+00> : vector<8x1536xf32>
    %3 = tpu.matmul %1, %2, %cst {dimension_numbers = #tpu.dot_dimension_numbers<[1], [0], [0], [1], [0, 0, 1, 1], [], []>} : vector<8x784xbf16>, vector<784x1536xbf16>, vector<8x1536xf32> -> vector<8x1536xf32>
    %c0_3 = arith.constant 0 : index
    %c0_4 = arith.constant 0 : index
    %4 = vector.load %arg3[%c0_3, %c0_4] : memref<1x1536xf32, #tpu.memory_space<vmem>>, vector<1x1536xf32>
    %5 = vector.broadcast %4 : vector<1x1536xf32> to vector<8x1536xf32>
    %6 = arith.addf %3, %5 : vector<8x1536xf32>
    %cst_5 = arith.constant 0.000000e+00 : f32
    %7 = vector.broadcast %cst_5 : f32 to vector<8x1536xf32>
    %8 = arith.maximumf %6, %7 : vector<8x1536xf32>
    %9 = arith.truncf %8 : vector<8x1536xf32> to vector<8x1536xbf16>
    %c0_6 = arith.constant 0 : index
    %c0_7 = arith.constant 0 : index
    %10 = vector.load %arg4[%c0_6, %c0_7] : memref<1536x384xbf16, #tpu.memory_space<vmem>>, vector<1536x384xbf16>
    %cst_8 = arith.constant dense<0.000000e+00> : vector<8x384xf32>
    %11 = tpu.matmul %9, %10, %cst_8 {dimension_numbers = #tpu.dot_dimension_numbers<[1], [0], [0], [1], [0, 0, 1, 1], [], []>} : vector<8x1536xbf16>, vector<1536x384xbf16>, vector<8x384xf32> -> vector<8x384xf32>
    %c0_9 = arith.constant 0 : index
    %c0_10 = arith.constant 0 : index
    %12 = vector.load %arg5[%c0_9, %c0_10] : memref<1x384xf32, #tpu.memory_space<vmem>>, vector<1x384xf32>
    %13 = vector.broadcast %12 : vector<1x384xf32> to vector<8x384xf32>
    %14 = arith.addf %11, %13 : vector<8x384xf32>
    %cst_11 = arith.constant 0.000000e+00 : f32
    %15 = vector.broadcast %cst_11 : f32 to vector<8x384xf32>
    %16 = arith.maximumf %14, %15 : vector<8x384xf32>
    %17 = arith.truncf %16 : vector<8x384xf32> to vector<8x384xbf16>
    %c0_12 = arith.constant 0 : index
    %c0_13 = arith.constant 0 : index
    %18 = vector.load %arg6[%c0_12, %c0_13] : memref<384x128xbf16, #tpu.memory_space<vmem>>, vector<384x128xbf16>
    %cst_14 = arith.constant dense<0.000000e+00> : vector<8x128xf32>
    %19 = tpu.matmul %17, %18, %cst_14 {dimension_numbers = #tpu.dot_dimension_numbers<[1], [0], [0], [1], [0, 0, 1, 1], [], []>} : vector<8x384xbf16>, vector<384x128xbf16>, vector<8x128xf32> -> vector<8x128xf32>
    %c0_15 = arith.constant 0 : index
    %c0_16 = arith.constant 0 : index
    %20 = vector.load %arg7[%c0_15, %c0_16] : memref<1x128xf32, #tpu.memory_space<vmem>>, vector<1x128xf32>
    %21 = vector.broadcast %20 : vector<1x128xf32> to vector<8x128xf32>
    %22 = arith.addf %19, %21 : vector<8x128xf32>
    %cst_17 = arith.constant 0.000000e+00 : f32
    %23 = vector.broadcast %cst_17 : f32 to vector<8x128xf32>
    %24 = arith.maximumf %22, %23 : vector<8x128xf32>
    %25 = arith.truncf %24 : vector<8x128xf32> to vector<8x128xbf16>
    %c0_18 = arith.constant 0 : index
    %c0_19 = arith.constant 0 : index
    %26 = vector.load %arg8[%c0_18, %c0_19] : memref<128x128xbf16, #tpu.memory_space<vmem>>, vector<128x128xbf16>
    %cst_20 = arith.constant dense<0.000000e+00> : vector<8x128xf32>
    %27 = tpu.matmul %25, %26, %cst_20 {dimension_numbers = #tpu.dot_dimension_numbers<[1], [0], [0], [1], [0, 0, 1, 1], [], []>} : vector<8x128xbf16>, vector<128x128xbf16>, vector<8x128xf32> -> vector<8x128xf32>
    %c0_21 = arith.constant 0 : index
    %c0_22 = arith.constant 0 : index
    %28 = vector.load %arg9[%c0_21, %c0_22] : memref<1x128xf32, #tpu.memory_space<vmem>>, vector<1x128xf32>
    %29 = vector.broadcast %28 : vector<1x128xf32> to vector<8x128xf32>
    %30 = arith.addf %27, %29 : vector<8x128xf32>
    %31 = tpu.iota {dimensions = array<i32: 1>} : vector<8x128xi32>
    %c10_i32 = arith.constant 10 : i32
    %32 = vector.broadcast %c10_i32 : i32 to vector<8x128xi32>
    %33 = arith.cmpi slt, %31, %32 : vector<8x128xi32>
    %cst_23 = arith.constant -1.000000e+30 : f32
    %34 = vector.broadcast %cst_23 : f32 to vector<8x128xf32>
    %35 = arith.select %33, %30, %34 : vector<8x128xi1>, vector<8x128xf32>
    %cst_24 = arith.constant dense<0xFF800000> : vector<8xf32>
    %36 = vector.multi_reduction <maximumf>, %35, %cst_24 [1] : vector<8x128xf32> to vector<8xf32>
    %37 = vector.shape_cast %36 : vector<8xf32> to vector<8x1xf32>
    %38 = vector.broadcast %37 : vector<8x1xf32> to vector<8x128xf32>
    %39 = arith.subf %35, %38 : vector<8x128xf32>
    %40 = math.exp %39 : vector<8x128xf32>
    %cst_25 = arith.constant dense<0.000000e+00> : vector<8xf32>
    %41 = vector.multi_reduction <add>, %40, %cst_25 [1] : vector<8x128xf32> to vector<8xf32>
    %42 = vector.shape_cast %41 : vector<8xf32> to vector<8x1xf32>
    %43 = math.log %42 : vector<8x1xf32>
    %44 = vector.broadcast %43 : vector<8x1xf32> to vector<8x128xf32>
    %45 = arith.subf %39, %44 : vector<8x128xf32>
    %cst_26 = arith.constant 0.000000e+00 : f32
    %46 = vector.broadcast %cst_26 : f32 to vector<8x128xf32>
    %47 = arith.select %33, %45, %46 : vector<8x128xi1>, vector<8x128xf32>
    %c0_27 = arith.constant 0 : index
    %c0_28 = arith.constant 0 : index
    %48 = vector.load %arg10[%c0_27, %c0_28] : memref<8x128xf32, #tpu.memory_space<vmem>>, vector<8x128xf32>
    tpu.vector_store %arg10[%c0_27, %c0_28], %47 {strides = array<i32>} : memref<8x128xf32, #tpu.memory_space<vmem>>, vector<8x128xf32>,
    return
  }
  func.func @transform_0(%arg0: i32) -> (i32, i32) {
    %c0_i32 = arith.constant 0 : i32
    %c0_i32_0 = arith.constant 0 : i32
    return %arg0, %c0_i32 : i32, i32
  }
  func.func @transform_1(%arg0: i32) -> (i32, i32) {
    %c0_i32 = arith.constant 0 : i32
    %c0_i32_0 = arith.constant 0 : i32
    %c0_i32_1 = arith.constant 0 : i32
    return %c0_i32, %c0_i32_0 : i32, i32
  }
  func.func @transform_2(%arg0: i32) -> (i32, i32) {
    %c0_i32 = arith.constant 0 : i32
    %c0_i32_0 = arith.constant 0 : i32
    %c0_i32_1 = arith.constant 0 : i32
    return %c0_i32, %c0_i32_0 : i32, i32
  }
  func.func @transform_3(%arg0: i32) -> (i32, i32) {
    %c0_i32 = arith.constant 0 : i32
    %c0_i32_0 = arith.constant 0 : i32
    %c0_i32_1 = arith.constant 0 : i32
    return %c0_i32, %c0_i32_0 : i32, i32
  }
  func.func @transform_4(%arg0: i32) -> (i32, i32) {
    %c0_i32 = arith.constant 0 : i32
    %c0_i32_0 = arith.constant 0 : i32
    %c0_i32_1 = arith.constant 0 : i32
    return %c0_i32, %c0_i32_0 : i32, i32
  }
  func.func @transform_5(%arg0: i32) -> (i32, i32) {
    %c0_i32 = arith.constant 0 : i32
    %c0_i32_0 = arith.constant 0 : i32
    %c0_i32_1 = arith.constant 0 : i32
    return %c0_i32, %c0_i32_0 : i32, i32
  }
  func.func @transform_6(%arg0: i32) -> (i32, i32) {
    %c0_i32 = arith.constant 0 : i32
    %c0_i32_0 = arith.constant 0 : i32
    %c0_i32_1 = arith.constant 0 : i32
    return %c0_i32, %c0_i32_0 : i32, i32
  }
  func.func @transform_7(%arg0: i32) -> (i32, i32) {
    %c0_i32 = arith.constant 0 : i32
    %c0_i32_0 = arith.constant 0 : i32
    %c0_i32_1 = arith.constant 0 : i32
    return %c0_i32, %c0_i32_0 : i32, i32
  }
  func.func @transform_8(%arg0: i32) -> (i32, i32) {
    %c0_i32 = arith.constant 0 : i32
    %c0_i32_0 = arith.constant 0 : i32
    %c0_i32_1 = arith.constant 0 : i32
    return %c0_i32, %c0_i32_0 : i32, i32
  }
  func.func @transform_9(%arg0: i32) -> (i32, i32) {
    %c0_i32 = arith.constant 0 : i32
    %c0_i32_0 = arith.constant 0 : i32
    return %arg0, %c0_i32 : i32, i32
  }
}

</mosaic_0001>

<llo_original>
// kernel: convnet_forward.1
$region0: #{convnet_forward.1}
  #allocation0 [shape = 'u32[]', space=smem, size = 0x4, offset = 0x4, fixed_abs, tag = 'smem constant byte address 0x4 - core index']
  #allocation1 [shape = 'u32[144,128]{1,0:T(1,128)}', space=vmem, size = 0x12000, scoped, tag = 'internal scratch']
  %s0 = inlined_call_operand.vmem [shape: f32[8,784], index: 0, kind: input, shape index: {}]
  %s1 = inlined_call_operand.hbm [shape: bf16[784,1536], index: 1, kind: input, shape index: {}]
  %s2 = inlined_call_operand.hbm [shape: f32[1,1536], index: 2, kind: input, shape index: {}]
  %s3 = inlined_call_operand.hbm [shape: bf16[1536,384], index: 3, kind: input, shape index: {}]
  %s4 = inlined_call_operand.hbm [shape: f32[1,384], index: 4, kind: input, shape index: {}]
  %s5 = inlined_call_operand.hbm [shape: bf16[384,128], index: 5, kind: input, shape index: {}]
  %s6 = inlined_call_operand.hbm [shape: f32[1,128], index: 6, kind: input, shape index: {}]
  %s7 = inlined_call_operand.hbm [shape: bf16[128,128], index: 7, kind: input, shape index: {}]
  %s8 = inlined_call_operand.hbm [shape: f32[1,128], index: 8, kind: input, shape index: {}]
  %s9 = inlined_call_operand.vmem [shape: f32[8,128], index: 9, kind: output, shape index: {}]
  %s10 = sld [smem:[#allocation0]]
  $region78: #{convnet_forward.1} parent=0
    _
  %s12 = ssub.s32 1, %s10
  %s13 = scalar_select 0, %s12, %s10
  $region1: #{convnet_forward.1} parent=0
    #allocation2 [shape = 'u8[2408448]{0}', space=vmem, size = 0x24c000, scoped, tag = 'input window, operand 1, single buffered']
    #allocation3 [shape = 's32[1]{0}', space=sflag, size = 0x4, scoped, tag = 'scoped memory for convnet_forward.1']
    #allocation4 [shape = 'u8[6144]{0}', space=vmem, size = 0x1800, scoped, tag = 'input window, operand 2, single buffered']
    #allocation5 [shape = 's32[1]{0}', space=sflag, size = 0x4, scoped, tag = 'scoped memory for convnet_forward.1']
    #allocation6 [shape = 'u8[1179648]{0}', space=vmem, size = 0x120000, scoped, tag = 'input window, operand 3, single buffered']
    #allocation7 [shape = 'u8[1536]{0}', space=vmem, size = 0x800, scoped, tag = 'input window, operand 4, single buffered']
    #allocation8 [shape = 's32[1]{0}', space=sflag, size = 0x4, scoped, tag = 'scoped memory for convnet_forward.1']
    #allocation9 [shape = 'u8[98304]{0}', space=vmem, size = 0x18000, scoped, tag = 'input window, operand 5, single buffered']
    #allocation10 [shape = 'u8[512]{0}', space=vmem, size = 0x400, scoped, tag = 'input window, operand 6, single buffered']
    #allocation11 [shape = 's32[1]{0}', space=sflag, size = 0x4, scoped, tag = 'scoped memory for convnet_forward.1']
    #allocation12 [shape = 'u8[32768]{0}', space=vmem, size = 0x8000, scoped, tag = 'input window, operand 7, single buffered']
    #allocation13 [shape = 'u8[512]{0}', space=vmem, size = 0x400, scoped, tag = 'input window, operand 8, single buffered']
    #allocation14 [shape = 's32[1]{0}', space=sflag, size = 0x4, scoped, tag = 'scoped memory for convnet_forward.1']
    %14 = vsyncpa [#allocation3], 0
    %15 = vsyncpa [#allocation5], 0
    %16 = vsyncpa [#allocation8], 0
    %17 = vsyncpa [#allocation11], 0
    %18 = vsyncpa [#allocation14], 0
    // Predicated region
    $region2: #{convnet_forward.1} parent=1 // pred_check
      _
    $region3: #{convnet_forward.1} parent=1 // pred_check_branch
      %20 = sbr.rel (0) target = $region5
    $region4: #{convnet_forward.1} parent=1 // pred_region
      _
    $region5: #{convnet_forward.1} parent=1 // pred_fallthru
      _
    // Predicated region
    $region6: #{convnet_forward.1} parent=1 // pred_check
      _
    $region7: #{convnet_forward.1} parent=1 // pred_check_branch
      %22 = sbr.rel (0) target = $region9
    $region8: #{convnet_forward.1} parent=1 // pred_region
      %s24 = ssub.s32 75264, 75264
      %25 = vsyncadd [#allocation3], %s24
      %s26 = sshll.u32 [#allocation2], 4
      %s27 = int_to_ptr.vmem [resolvable:$true] %s26
      %32 = dma.hbm_to_vmem [thread:$0]  %s1, 75264, %s27, [#allocation3], 768, 768, 48
    $region9: #{convnet_forward.1} parent=1 // pred_fallthru
      _
    // Predicated region
    $region10: #{convnet_forward.1} parent=1 // pred_check
      _
    $region11: #{convnet_forward.1} parent=1 // pred_check_branch
      %34 = sbr.rel (0) target = $region13
    $region12: #{convnet_forward.1} parent=1 // pred_region
      %s36 = ssub.s32 192, 192
      %37 = vsyncadd [#allocation5], %s36
      %s39 = sshll.u32 [#allocation4], 4
      %s40 = int_to_ptr.vmem [resolvable:$true] %s39
      %42 = dma.hbm_to_vmem [thread:$0]  %s2, 192, %s40, [#allocation5]
    $region13: #{convnet_forward.1} parent=1 // pred_fallthru
      _
    // Predicated region
    $region14: #{convnet_forward.1} parent=1 // pred_check
      _
    $region15: #{convnet_forward.1} parent=1 // pred_check_branch
      %44 = sbr.rel (0) target = $region17
    $region16: #{convnet_forward.1} parent=1 // pred_region
      %s46 = ssub.s32 36864, 36864
      %47 = vsyncadd [#allocation5], %s46
      %s48 = sshll.u32 [#allocation6], 4
      %s49 = int_to_ptr.vmem [resolvable:$true] %s48
      %54 = dma.hbm_to_vmem [thread:$0]  %s3, 36864, %s49, [#allocation5], 192, 192, 12
    $region17: #{convnet_forward.1} parent=1 // pred_fallthru
      _
    // Predicated region
    $region18: #{convnet_forward.1} parent=1 // pred_check
      _
    $region19: #{convnet_forward.1} parent=1 // pred_check_branch
      %56 = sbr.rel (0) target = $region21
    $region20: #{convnet_forward.1} parent=1 // pred_region
      %s58 = ssub.s32 48, 48
      %59 = vsyncadd [#allocation8], %s58
      %s61 = sshll.u32 [#allocation7], 4
      %s62 = int_to_ptr.vmem [resolvable:$true] %s61
      %64 = dma.hbm_to_vmem [thread:$0]  %s4, 48, %s62, [#allocation8]
    $region21: #{convnet_forward.1} parent=1 // pred_fallthru
      _
    // Predicated region
    $region22: #{convnet_forward.1} parent=1 // pred_check
      _
    $region23: #{convnet_forward.1} parent=1 // pred_check_branch
      %66 = sbr.rel (0) target = $region25
    $region24: #{convnet_forward.1} parent=1 // pred_region
      %s68 = ssub.s32 3072, 3072
      %69 = vsyncadd [#allocation8], %s68
      %s70 = sshll.u32 [#allocation9], 4
      %s71 = int_to_ptr.vmem [resolvable:$true] %s70
      %76 = dma.hbm_to_vmem [thread:$0]  %s5, 3072, %s71, [#allocation8], 64, 64, 4
    $region25: #{convnet_forward.1} parent=1 // pred_fallthru
      _
    // Predicated region
    $region26: #{convnet_forward.1} parent=1 // pred_check
      _
    $region27: #{convnet_forward.1} parent=1 // pred_check_branch
      %78 = sbr.rel (0) target = $region29
    $region28: #{convnet_forward.1} parent=1 // pred_region
      %s80 = ssub.s32 16, 16
      %81 = vsyncadd [#allocation11], %s80
      %s83 = sshll.u32 [#allocation10], 4
      %s84 = int_to_ptr.vmem [resolvable:$true] %s83
      %86 = dma.hbm_to_vmem [thread:$0]  %s6, 16, %s84, [#allocation11]
    $region29: #{convnet_forward.1} parent=1 // pred_fallthru
      _
    // Predicated region
    $region30: #{convnet_forward.1} parent=1 // pred_check
      _
    $region31: #{convnet_forward.1} parent=1 // pred_check_branch
      %88 = sbr.rel (0) target = $region33
    $region32: #{convnet_forward.1} parent=1 // pred_region
      %s90 = ssub.s32 1024, 1024
      %91 = vsyncadd [#allocation11], %s90
      %s92 = sshll.u32 [#allocation12], 4
      %s93 = int_to_ptr.vmem [resolvable:$true] %s92
      %98 = dma.hbm_to_vmem [thread:$0]  %s7, 1024, %s93, [#allocation11], 64, 64, 4
    $region33: #{convnet_forward.1} parent=1 // pred_fallthru
      _
    // Predicated region
    $region34: #{convnet_forward.1} parent=1 // pred_check
      _
    $region35: #{convnet_forward.1} parent=1 // pred_check_branch
      %100 = sbr.rel (0) target = $region37
    $region36: #{convnet_forward.1} parent=1 // pred_region
      %s102 = ssub.s32 16, 16
      %103 = vsyncadd [#allocation14], %s102
      %s105 = sshll.u32 [#allocation13], 4
      %s106 = int_to_ptr.vmem [resolvable:$true] %s105
      %108 = dma.hbm_to_vmem [thread:$0]  %s8, 16, %s106, [#allocation14]
    $region37: #{convnet_forward.1} parent=1 // pred_fallthru
      _
    // Predicated region
    $region38: #{convnet_forward.1} parent=1 // pred_check
      _
    $region39: #{convnet_forward.1} parent=1 // pred_check_branch
      %110 = sbr.rel (0) target = $region41
    $region40: #{convnet_forward.1} parent=1 // pred_region
      %111 = dma.done [#allocation3], 75264
    $region41: #{convnet_forward.1} parent=1 // pred_fallthru
      _
    // Predicated region
    $region42: #{convnet_forward.1} parent=1 // pred_check
      _
    $region43: #{convnet_forward.1} parent=1 // pred_check_branch
      %113 = sbr.rel (0) target = $region45
    $region44: #{convnet_forward.1} parent=1 // pred_region
      %114 = dma.done [#allocation5], 192
    $region45: #{convnet_forward.1} parent=1 // pred_fallthru
      _
    // Predicated region
    $region46: #{convnet_forward.1} parent=1 // pred_check
      _
    $region47: #{convnet_forward.1} parent=1 // pred_check_branch
      %116 = sbr.rel (0) target = $region49
    $region48: #{convnet_forward.1} parent=1 // pred_region
      %117 = dma.done [#allocation5], 36864
    $region49: #{convnet_forward.1} parent=1 // pred_fallthru
      _
    // Predicated region
    $region50: #{convnet_forward.1} parent=1 // pred_check
      _
    $region51: #{convnet_forward.1} parent=1 // pred_check_branch
      %119 = sbr.rel (0) target = $region53
    $region52: #{convnet_forward.1} parent=1 // pred_region
      %120 = dma.done [#allocation8], 48
    $region53: #{convnet_forward.1} parent=1 // pred_fallthru
      _
    // Predicated region
    $region54: #{convnet_forward.1} parent=1 // pred_check
      _
    $region55: #{convnet_forward.1} parent=1 // pred_check_branch
      %122 = sbr.rel (0) target = $region57
    $region56: #{convnet_forward.1} parent=1 // pred_region
      %123 = dma.done [#allocation8], 3072
    $region57: #{convnet_forward.1} parent=1 // pred_fallthru
      _
    // Predicated region
    $region58: #{convnet_forward.1} parent=1 // pred_check
      _
    $region59: #{convnet_forward.1} parent=1 // pred_check_branch
      %125 = sbr.rel (0) target = $region61
    $region60: #{convnet_forward.1} parent=1 // pred_region
      %126 = dma.done [#allocation11], 16
    $region61: #{convnet_forward.1} parent=1 // pred_fallthru
      _
    // Predicated region
    $region62: #{convnet_forward.1} parent=1 // pred_check
      _
    $region63: #{convnet_forward.1} parent=1 // pred_check_branch
      %128 = sbr.rel (0) target = $region65
    $region64: #{convnet_forward.1} parent=1 // pred_region
      %129 = dma.done [#allocation11], 1024
    $region65: #{convnet_forward.1} parent=1 // pred_fallthru
      _
    // Predicated region
    $region66: #{convnet_forward.1} parent=1 // pred_check
      _
    $region67: #{convnet_forward.1} parent=1 // pred_check_branch
      %131 = sbr.rel (0) target = $region69
    $region68: #{convnet_forward.1} parent=1 // pred_region
      %132 = dma.done [#allocation14], 16
    $region69: #{convnet_forward.1} parent=1 // pred_fallthru
      _
    %v134 = vld [vmem:[%s0] sm:$0xff]
    %v135 = vld [vmem:[%s0 + $0x8] sm:$0xff]
    %v136 = vld [vmem:[%s0 + $0x10] sm:$0xff]
    %v137 = vld [vmem:[%s0 + $0x18] sm:$0xff]
    %v138 = vld [vmem:[%s0 + $0x20] sm:$0xff]
    %v139 = vld [vmem:[%s0 + $0x28] sm:$0xff]
    %v140 = vld [vmem:[%s0 + $0x30] sm:$0xff]
    %v141 = vpack.c.bf16 %v134, %v134
    %v142 = vpack.c.bf16 %v135, %v135
    %v143 = vpack.c.bf16 %v136, %v136
    %v144 = vpack.c.bf16 %v137, %v137
    %v145 = vpack.c.bf16 %v138, %v138
    %v146 = vpack.c.bf16 %v139, %v139
    %v147 = vpack.c.bf16 %v140, %v140
    %v148 = vld [vmem:[#allocation2] sm:$0xff]
    %v149 = vld [vmem:[#allocation2 + $0x8] sm:$0xff]
    %v150 = vld [vmem:[#allocation2 + $0x10] sm:$0xff]
    %v151 = vld [vmem:[#allocation2 + $0x18] sm:$0xff]
    %v152 = vld [vmem:[#allocation2 + $0x20] sm:$0xff]
    %v153 = vld [vmem:[#allocation2 + $0x28] sm:$0xff]
    %v154 = vld [vmem:[#allocation2 + $0x30] sm:$0xff]
    %v155 = vld [vmem:[#allocation2 + $0x38] sm:$0xff]
    %v156 = vld [vmem:[#allocation2 + $0x40] sm:$0xff]
    %v157 = vld [vmem:[#allocation2 + $0x48] sm:$0xff]
    %v158 = vld [vmem:[#allocation2 + $0x50] sm:$0xff]
    %v159 = vld [vmem:[#allocation2 + $0x58] sm:$0xff]
    %v160 = vld [vmem:[#allocation2 + $0x60] sm:$0xff]
    %v161 = vld [vmem:[#allocation2 + $0x68] sm:$0xff]
    %v162 = vld [vmem:[#allocation2 + $0x70] sm:$0xff]
    %v163 = vld [vmem:[#allocation2 + $0x78] sm:$0xff]
    %v164 = vld [vmem:[#allocation2 + $0x80] sm:$0xff]
    %v165 = vld [vmem:[#allocation2 + $0x88] sm:$0xff]
    %v166 = vld [vmem:[#allocation2 + $0x90] sm:$0xff]
    %v167 = vld [vmem:[#allocation2 + $0x98] sm:$0xff]
    %v168 = vld [vmem:[#allocation2 + $0xa0] sm:$0xff]
    %v169 = vld [vmem:[#allocation2 + $0xa8] sm:$0xff]
    %v170 = vld [vmem:[#allocation2 + $0xb0] sm:$0xff]
    %v171 = vld [vmem:[#allocation2 + $0xb8] sm:$0xff]
    %v172 = vld [vmem:[#allocation2 + $0xc0] sm:$0xff]
    %v173 = vld [vmem:[#allocation2 + $0xc8] sm:$0xff]
    %v174 = vld [vmem:[#allocation2 + $0xd0] sm:$0xff]
    %v175 = vld [vmem:[#allocation2 + $0xd8] sm:$0xff]
    %v176 = vld [vmem:[#allocation2 + $0xe0] sm:$0xff]
    %v177 = vld [vmem:[#allocation2 + $0xe8] sm:$0xff]
    %v178 = vld [vmem:[#allocation2 + $0xf0] sm:$0xff]
    %v179 = vld [vmem:[#allocation2 + $0xf8] sm:$0xff]
    %v180 = vld [vmem:[#allocation2 + $0x100] sm:$0xff]
    %v181 = vld [vmem:[#allocation2 + $0x108] sm:$0xff]
    %v182 = vld [vmem:[#allocation2 + $0x110] sm:$0xff]
    %v183 = vld [vmem:[#allocation2 + $0x118] sm:$0xff]
    %v184 = vld [vmem:[#allocation2 + $0x120] sm:$0xff]
    %v185 = vld [vmem:[#allocation2 + $0x128] sm:$0xff]
    %v186 = vld [vmem:[#allocation2 + $0x130] sm:$0xff]
    %v187 = vld [vmem:[#allocation2 + $0x138] sm:$0xff]
    %v188 = vld [vmem:[#allocation2 + $0x140] sm:$0xff]
    %v189 = vld [vmem:[#allocation2 + $0x148] sm:$0xff]
    %v190 = vld [vmem:[#allocation2 + $0x150] sm:$0xff]
    %v191 = vld [vmem:[#allocation2 + $0x158] sm:$0xff]
    %v192 = vld [vmem:[#allocation2 + $0x160] sm:$0xff]
    %v193 = vld [vmem:[#allocation2 + $0x168] sm:$0xff]
    %v194 = vld [vmem:[#allocation2 + $0x170] sm:$0xff]
    %v195 = vld [vmem:[#allocation2 + $0x178] sm:$0xff]
    %v196 = vld [vmem:[#allocation2 + $0x180] sm:$0xff]
    %v197 = vld [vmem:[#allocation2 + $0x188] sm:$0xff]
    %v198 = vld [vmem:[#allocation2 + $0x190] sm:$0xff]
    %v199 = vld [vmem:[#allocation2 + $0x198] sm:$0xff]
    %v200 = vld [vmem:[#allocation2 + $0x1a0] sm:$0xff]
    %v201 = vld [vmem:[#allocation2 + $0x1a8] sm:$0xff]
    %v202 = vld [vmem:[#allocation2 + $0x1b0] sm:$0xff]
    %v203 = vld [vmem:[#allocation2 + $0x1b8] sm:$0xff]
    %v204 = vld [vmem:[#allocation2 + $0x1c0] sm:$0xff]
    %v205 = vld [vmem:[#allocation2 + $0x1c8] sm:$0xff]
    %v206 = vld [vmem:[#allocation2 + $0x1d0] sm:$0xff]
    %v207 = vld [vmem:[#allocation2 + $0x1d8] sm:$0xff]
    %v208 = vld [vmem:[#allocation2 + $0x1e0] sm:$0xff]
    %v209 = vld [vmem:[#allocation2 + $0x1e8] sm:$0xff]
    %v210 = vld [vmem:[#allocation2 + $0x1f0] sm:$0xff]
    %v211 = vld [vmem:[#allocation2 + $0x1f8] sm:$0xff]
    %v212 = vld [vmem:[#allocation2 + $0x200] sm:$0xff]
    %v213 = vld [vmem:[#allocation2 + $0x208] sm:$0xff]
    %v214 = vld [vmem:[#allocation2 + $0x210] sm:$0xff]
    %v215 = vld [vmem:[#allocation2 + $0x218] sm:$0xff]
    %v216 = vld [vmem:[#allocation2 + $0x220] sm:$0xff]
    %v217 = vld [vmem:[#allocation2 + $0x228] sm:$0xff]
    %v218 = vld [vmem:[#allocation2 + $0x230] sm:$0xff]
    %v219 = vld [vmem:[#allocation2 + $0x238] sm:$0xff]
    %v220 = vld [vmem:[#allocation2 + $0x240] sm:$0xff]
    %v221 = vld [vmem:[#allocation2 + $0x248] sm:$0xff]
    %v222 = vld [vmem:[#allocation2 + $0x250] sm:$0xff]
    %v223 = vld [vmem:[#allocation2 + $0x258] sm:$0xff]
    %v224 = vld [vmem:[#allocation2 + $0x260] sm:$0xff]
    %v225 = vld [vmem:[#allocation2 + $0x268] sm:$0xff]
    %v226 = vld [vmem:[#allocation2 + $0x270] sm:$0xff]
    %v227 = vld [vmem:[#allocation2 + $0x278] sm:$0xff]
    %v228 = vld [vmem:[#allocation2 + $0x280] sm:$0xff]
    %v229 = vld [vmem:[#allocation2 + $0x288] sm:$0xff]
    %v230 = vld [vmem:[#allocation2 + $0x290] sm:$0xff]
    %v231 = vld [vmem:[#allocation2 + $0x298] sm:$0xff]
    %v232 = vld [vmem:[#allocation2 + $0x2a0] sm:$0xff]
    %v233 = vld [vmem:[#allocation2 + $0x2a8] sm:$0xff]
    %v234 = vld [vmem:[#allocation2 + $0x2b0] sm:$0xff]
    %v235 = vld [vmem:[#allocation2 + $0x2b8] sm:$0xff]
    %v236 = vld [vmem:[#allocation2 + $0x2c0] sm:$0xff]
    %v237 = vld [vmem:[#allocation2 + $0x2c8] sm:$0xff]
    %v238 = vld [vmem:[#allocation2 + $0x2d0] sm:$0xff]
    %v239 = vld [vmem:[#allocation2 + $0x2d8] sm:$0xff]
    %v240 = vld [vmem:[#allocation2 + $0x2e0] sm:$0xff]
    %v241 = vld [vmem:[#allocation2 + $0x2e8] sm:$0xff]
    %v242 = vld [vmem:[#allocation2 + $0x2f0] sm:$0xff]
    %v243 = vld [vmem:[#allocation2 + $0x2f8] sm:$0xff]
    %v244 = vld [vmem:[#allocation2 + $0x300] sm:$0xff]
    %v245 = vld [vmem:[#allocation2 + $0x308] sm:$0xff]
    %v246 = vld [vmem:[#allocation2 + $0x310] sm:$0xff]
    %v247 = vld [vmem:[#allocation2 + $0x318] sm:$0xff]
    %v248 = vld [vmem:[#allocation2 + $0x320] sm:$0xff]
    %v249 = vld [vmem:[#allocation2 + $0x328] sm:$0xff]
    %v250 = vld [vmem:[#allocation2 + $0x330] sm:$0xff]
    %v251 = vld [vmem:[#allocation2 + $0x338] sm:$0xff]
    %v252 = vld [vmem:[#allocation2 + $0x340] sm:$0xff]
    %v253 = vld [vmem:[#allocation2 + $0x348] sm:$0xff]
    %v254 = vld [vmem:[#allocation2 + $0x350] sm:$0xff]
    %v255 = vld [vmem:[#allocation2 + $0x358] sm:$0xff]
    %v256 = vld [vmem:[#allocation2 + $0x360] sm:$0xff]
    %v257 = vld [vmem:[#allocation2 + $0x368] sm:$0xff]
    %v258 = vld [vmem:[#allocation2 + $0x370] sm:$0xff]
    %v259 = vld [vmem:[#allocation2 + $0x378] sm:$0xff]
    %v260 = vld [vmem:[#allocation2 + $0x380] sm:$0xff]
    %v261 = vld [vmem:[#allocation2 + $0x388] sm:$0xff]
    %v262 = vld [vmem:[#allocation2 + $0x390] sm:$0xff]
    %v263 = vld [vmem:[#allocation2 + $0x398] sm:$0xff]
    %v264 = vld [vmem:[#allocation2 + $0x3a0] sm:$0xff]
    %v265 = vld [vmem:[#allocation2 + $0x3a8] sm:$0xff]
    %v266 = vld [vmem:[#allocation2 + $0x3b0] sm:$0xff]
    %v267 = vld [vmem:[#allocation2 + $0x3b8] sm:$0xff]
    %v268 = vld [vmem:[#allocation2 + $0x3c0] sm:$0xff]
    %v269 = vld [vmem:[#allocation2 + $0x3c8] sm:$0xff]
    %v270 = vld [vmem:[#allocation2 + $0x3d0] sm:$0xff]
    %v271 = vld [vmem:[#allocation2 + $0x3d8] sm:$0xff]
    %v272 = vld [vmem:[#allocation2 + $0x3e0] sm:$0xff]
    %v273 = vld [vmem:[#allocation2 + $0x3e8] sm:$0xff]
    %v274 = vld [vmem:[#allocation2 + $0x3f0] sm:$0xff]
    %v275 = vld [vmem:[#allocation2 + $0x3f8] sm:$0xff]
    %v276 = vld [vmem:[#allocation2 + $0x400] sm:$0xff]
    %v277 = vld [vmem:[#allocation2 + $0x408] sm:$0xff]
    %v278 = vld [vmem:[#allocation2 + $0x410] sm:$0xff]
    %v279 = vld [vmem:[#allocation2 + $0x418] sm:$0xff]
    %v280 = vld [vmem:[#allocation2 + $0x420] sm:$0xff]
    %v281 = vld [vmem:[#allocation2 + $0x428] sm:$0xff]
    %v282 = vld [vmem:[#allocation2 + $0x430] sm:$0xff]
    %v283 = vld [vmem:[#allocation2 + $0x438] sm:$0xff]
    %v284 = vld [vmem:[#allocation2 + $0x440] sm:$0xff]
    %v285 = vld [vmem:[#allocation2 + $0x448] sm:$0xff]
    %v286 = vld [vmem:[#allocation2 + $0x450] sm:$0xff]
    %v287 = vld [vmem:[#allocation2 + $0x458] sm:$0xff]
    %v288 = vld [vmem:[#allocation2 + $0x460] sm:$0xff]
    %v289 = vld [vmem:[#allocation2 + $0x468] sm:$0xff]
    %v290 = vld [vmem:[#allocation2 + $0x470] sm:$0xff]
    %v291 = vld [vmem:[#allocation2 + $0x478] sm:$0xff]
    %v292 = vld [vmem:[#allocation2 + $0x480] sm:$0xff]
    %v293 = vld [vmem:[#allocation2 + $0x488] sm:$0xff]
    %v294 = vld [vmem:[#allocation2 + $0x490] sm:$0xff]
    %v295 = vld [vmem:[#allocation2 + $0x498] sm:$0xff]
    %v296 = vld [vmem:[#allocation2 + $0x4a0] sm:$0xff]
    %v297 = vld [vmem:[#allocation2 + $0x4a8] sm:$0xff]
    %v298 = vld [vmem:[#allocation2 + $0x4b0] sm:$0xff]
    %v299 = vld [vmem:[#allocation2 + $0x4b8] sm:$0xff]
    %v300 = vld [vmem:[#allocation2 + $0x4c0] sm:$0xff]
    %v301 = vld [vmem:[#allocation2 + $0x4c8] sm:$0xff]
    %v302 = vld [vmem:[#allocation2 + $0x4d0] sm:$0xff]
    %v303 = vld [vmem:[#allocation2 + $0x4d8] sm:$0xff]
    %v304 = vld [vmem:[#allocation2 + $0x4e0] sm:$0xff]
    %v305 = vld [vmem:[#allocation2 + $0x4e8] sm:$0xff]
    %v306 = vld [vmem:[#allocation2 + $0x4f0] sm:$0xff]
    %v307 = vld [vmem:[#allocation2 + $0x4f8] sm:$0xff]
    %v308 = vld [vmem:[#allocation2 + $0x500] sm:$0xff]
    %v309 = vld [vmem:[#allocation2 + $0x508] sm:$0xff]
    %v310 = vld [vmem:[#allocation2 + $0x510] sm:$0xff]
    %v311 = vld [vmem:[#allocation2 + $0x518] sm:$0xff]
    %v312 = vld [vmem:[#allocation2 + $0x520] sm:$0xff]
    %v313 = vld [vmem:[#allocation2 + $0x528] sm:$0xff]
    %v314 = vld [vmem:[#allocation2 + $0x530] sm:$0xff]
    %v315 = vld [vmem:[#allocation2 + $0x538] sm:$0xff]
    %v316 = vld [vmem:[#allocation2 + $0x540] sm:$0xff]
    %v317 = vld [vmem:[#allocation2 + $0x548] sm:$0xff]
    %v318 = vld [vmem:[#allocation2 + $0x550] sm:$0xff]
    %v319 = vld [vmem:[#allocation2 + $0x558] sm:$0xff]
    %v320 = vld [vmem:[#allocation2 + $0x560] sm:$0xff]
    %v321 = vld [vmem:[#allocation2 + $0x568] sm:$0xff]
    %v322 = vld [vmem:[#allocation2 + $0x570] sm:$0xff]
    %v323 = vld [vmem:[#allocation2 + $0x578] sm:$0xff]
    %v324 = vld [vmem:[#allocation2 + $0x580] sm:$0xff]
    %v325 = vld [vmem:[#allocation2 + $0x588] sm:$0xff]
    %v326 = vld [vmem:[#allocation2 + $0x590] sm:$0xff]
    %v327 = vld [vmem:[#allocation2 + $0x598] sm:$0xff]
    %v328 = vld [vmem:[#allocation2 + $0x5a0] sm:$0xff]
    %v329 = vld [vmem:[#allocation2 + $0x5a8] sm:$0xff]
    %v330 = vld [vmem:[#allocation2 + $0x5b0] sm:$0xff]
    %v331 = vld [vmem:[#allocation2 + $0x5b8] sm:$0xff]
    %v332 = vld [vmem:[#allocation2 + $0x5c0] sm:$0xff]
    %v333 = vld [vmem:[#allocation2 + $0x5c8] sm:$0xff]
    %v334 = vld [vmem:[#allocation2 + $0x5d0] sm:$0xff]
    %v335 = vld [vmem:[#allocation2 + $0x5d8] sm:$0xff]
    %v336 = vld [vmem:[#allocation2 + $0x5e0] sm:$0xff]
    %v337 = vld [vmem:[#allocation2 + $0x5e8] sm:$0xff]
    %v338 = vld [vmem:[#allocation2 + $0x5f0] sm:$0xff]
    %v339 = vld [vmem:[#allocation2 + $0x5f8] sm:$0xff]
    %v340 = vld [vmem:[#allocation2 + $0x600] sm:$0xff]
    %v341 = vld [vmem:[#allocation2 + $0x608] sm:$0xff]
    %v342 = vld [vmem:[#allocation2 + $0x610] sm:$0xff]
    %v343 = vld [vmem:[#allocation2 + $0x618] sm:$0xff]
    %v344 = vld [vmem:[#allocation2 + $0x620] sm:$0xff]
    %v345 = vld [vmem:[#allocation2 + $0x628] sm:$0xff]
    %v346 = vld [vmem:[#allocation2 + $0x630] sm:$0xff]
    %v347 = vld [vmem:[#allocation2 + $0x638] sm:$0xff]
    %v348 = vld [vmem:[#allocation2 + $0x640] sm:$0xff]
    %v349 = vld [vmem:[#allocation2 + $0x648] sm:$0xff]
    %v350 = vld [vmem:[#allocation2 + $0x650] sm:$0xff]
    %v351 = vld [vmem:[#allocation2 + $0x658] sm:$0xff]
    %v352 = vld [vmem:[#allocation2 + $0x660] sm:$0xff]
    %v353 = vld [vmem:[#allocation2 + $0x668] sm:$0xff]
    %v354 = vld [vmem:[#allocation2 + $0x670] sm:$0xff]
    %v355 = vld [vmem:[#allocation2 + $0x678] sm:$0xff]
    %v356 = vld [vmem:[#allocation2 + $0x680] sm:$0xff]
    %v357 = vld [vmem:[#allocation2 + $0x688] sm:$0xff]
    %v358 = vld [vmem:[#allocation2 + $0x690] sm:$0xff]
    %v359 = vld [vmem:[#allocation2 + $0x698] sm:$0xff]
    %v360 = vld [vmem:[#allocation2 + $0x6a0] sm:$0xff]
    %v361 = vld [vmem:[#allocation2 + $0x6a8] sm:$0xff]
    %v362 = vld [vmem:[#allocation2 + $0x6b0] sm:$0xff]
    %v363 = vld [vmem:[#allocation2 + $0x6b8] sm:$0xff]
    %v364 = vld [vmem:[#allocation2 + $0x6c0] sm:$0xff]
    %v365 = vld [vmem:[#allocation2 + $0x6c8] sm:$0xff]
    %v366 = vld [vmem:[#allocation2 + $0x6d0] sm:$0xff]
    %v367 = vld [vmem:[#allocation2 + $0x6d8] sm:$0xff]
    %v368 = vld [vmem:[#allocation2 + $0x6e0] sm:$0xff]
    %v369 = vld [vmem:[#allocation2 + $0x6e8] sm:$0xff]
    %v370 = vld [vmem:[#allocation2 + $0x6f0] sm:$0xff]
    %v371 = vld [vmem:[#allocation2 + $0x6f8] sm:$0xff]
    %v372 = vld [vmem:[#allocation2 + $0x700] sm:$0xff]
    %v373 = vld [vmem:[#allocation2 + $0x708] sm:$0xff]
    %v374 = vld [vmem:[#allocation2 + $0x710] sm:$0xff]
    %v375 = vld [vmem:[#allocation2 + $0x718] sm:$0xff]
    %v376 = vld [vmem:[#allocation2 + $0x720] sm:$0xff]
    %v377 = vld [vmem:[#allocation2 + $0x728] sm:$0xff]
    %v378 = vld [vmem:[#allocation2 + $0x730] sm:$0xff]
    %v379 = vld [vmem:[#allocation2 + $0x738] sm:$0xff]
    %v380 = vld [vmem:[#allocation2 + $0x740] sm:$0xff]
    %v381 = vld [vmem:[#allocation2 + $0x748] sm:$0xff]
    %v382 = vld [vmem:[#allocation2 + $0x750] sm:$0xff]
    %v383 = vld [vmem:[#allocation2 + $0x758] sm:$0xff]
    %v384 = vld [vmem:[#allocation2 + $0x760] sm:$0xff]
    %v385 = vld [vmem:[#allocation2 + $0x768] sm:$0xff]
    %v386 = vld [vmem:[#allocation2 + $0x770] sm:$0xff]
    %v387 = vld [vmem:[#allocation2 + $0x778] sm:$0xff]
    %v388 = vld [vmem:[#allocation2 + $0x780] sm:$0xff]
    %v389 = vld [vmem:[#allocation2 + $0x788] sm:$0xff]
    %v390 = vld [vmem:[#allocation2 + $0x790] sm:$0xff]
    %v391 = vld [vmem:[#allocation2 + $0x798] sm:$0xff]
    %v392 = vld [vmem:[#allocation2 + $0x7a0] sm:$0xff]
    %v393 = vld [vmem:[#allocation2 + $0x7a8] sm:$0xff]
    %v394 = vld [vmem:[#allocation2 + $0x7b0] sm:$0xff]
    %v395 = vld [vmem:[#allocation2 + $0x7b8] sm:$0xff]
    %v396 = vld [vmem:[#allocation2 + $0x7c0] sm:$0xff]
    %v397 = vld [vmem:[#allocation2 + $0x7c8] sm:$0xff]
    %v398 = vld [vmem:[#allocation2 + $0x7d0] sm:$0xff]
    %v399 = vld [vmem:[#allocation2 + $0x7d8] sm:$0xff]
    %v400 = vld [vmem:[#allocation2 + $0x7e0] sm:$0xff]
    %v401 = vld [vmem:[#allocation2 + $0x7e8] sm:$0xff]
    %v402 = vld [vmem:[#allocation2 + $0x7f0] sm:$0xff]
    %v403 = vld [vmem:[#allocation2 + $0x7f8] sm:$0xff]
    %v404 = vld [vmem:[#allocation2 + $0x800] sm:$0xff]
    %v405 = vld [vmem:[#allocation2 + $0x808] sm:$0xff]
    %v406 = vld [vmem:[#allocation2 + $0x810] sm:$0xff]
    %v407 = vld [vmem:[#allocation2 + $0x818] sm:$0xff]
    %v408 = vld [vmem:[#allocation2 + $0x820] sm:$0xff]
    %v409 = vld [vmem:[#allocation2 + $0x828] sm:$0xff]
    %v410 = vld [vmem:[#allocation2 + $0x830] sm:$0xff]
    %v411 = vld [vmem:[#allocation2 + $0x838] sm:$0xff]
    %v412 = vld [vmem:[#allocation2 + $0x840] sm:$0xff]
    %v413 = vld [vmem:[#allocation2 + $0x848] sm:$0xff]
    %v414 = vld [vmem:[#allocation2 + $0x850] sm:$0xff]
    %v415 = vld [vmem:[#allocation2 + $0x858] sm:$0xff]
    %v416 = vld [vmem:[#allocation2 + $0x860] sm:$0xff]
    %v417 = vld [vmem:[#allocation2 + $0x868] sm:$0xff]
    %v418 = vld [vmem:[#allocation2 + $0x870] sm:$0xff]
    %v419 = vld [vmem:[#allocation2 + $0x878] sm:$0xff]
    %v420 = vld [vmem:[#allocation2 + $0x880] sm:$0xff]
    %v421 = vld [vmem:[#allocation2 + $0x888] sm:$0xff]
    %v422 = vld [vmem:[#allocation2 + $0x890] sm:$0xff]
    %v423 = vld [vmem:[#allocation2 + $0x898] sm:$0xff]
    %v424 = vld [vmem:[#allocation2 + $0x8a0] sm:$0xff]
    %v425 = vld [vmem:[#allocation2 + $0x8a8] sm:$0xff]
    %v426 = vld [vmem:[#allocation2 + $0x8b0] sm:$0xff]
    %v427 = vld [vmem:[#allocation2 + $0x8b8] sm:$0xff]
    %v428 = vld [vmem:[#allocation2 + $0x8c0] sm:$0xff]
    %v429 = vld [vmem:[#allocation2 + $0x8c8] sm:$0xff]
    %v430 = vld [vmem:[#allocation2 + $0x8d0] sm:$0xff]
    %v431 = vld [vmem:[#allocation2 + $0x8d8] sm:$0xff]
    %v432 = vld [vmem:[#allocation2 + $0x8e0] sm:$0xff]
    %v433 = vld [vmem:[#allocation2 + $0x8e8] sm:$0xff]
    %v434 = vld [vmem:[#allocation2 + $0x8f0] sm:$0xff]
    %v435 = vld [vmem:[#allocation2 + $0x8f8] sm:$0xff]
    %v436 = vld [vmem:[#allocation2 + $0x900] sm:$0xff]
    %v437 = vld [vmem:[#allocation2 + $0x908] sm:$0xff]
    %v438 = vld [vmem:[#allocation2 + $0x910] sm:$0xff]
    %v439 = vld [vmem:[#allocation2 + $0x918] sm:$0xff]
    %v440 = vld [vmem:[#allocation2 + $0x920] sm:$0xff]
    %v441 = vld [vmem:[#allocation2 + $0x928] sm:$0xff]
    %v442 = vld [vmem:[#allocation2 + $0x930] sm:$0xff]
    %v443 = vld [vmem:[#allocation2 + $0x938] sm:$0xff]
    %v444 = vld [vmem:[#allocation2 + $0x940] sm:$0xff]
    %v445 = vld [vmem:[#allocation2 + $0x948] sm:$0xff]
    %v446 = vld [vmem:[#allocation2 + $0x950] sm:$0xff]
    %v447 = vld [vmem:[#allocation2 + $0x958] sm:$0xff]
    %v448 = vld [vmem:[#allocation2 + $0x960] sm:$0xff]
    %v449 = vld [vmem:[#allocation2 + $0x968] sm:$0xff]
    %v450 = vld [vmem:[#allocation2 + $0x970] sm:$0xff]
    %v451 = vld [vmem:[#allocation2 + $0x978] sm:$0xff]
    %v452 = vld [vmem:[#allocation2 + $0x980] sm:$0xff]
    %v453 = vld [vmem:[#allocation2 + $0x988] sm:$0xff]
    %v454 = vld [vmem:[#allocation2 + $0x990] sm:$0xff]
    %v455 = vld [vmem:[#allocation2 + $0x998] sm:$0xff]
    %v456 = vld [vmem:[#allocation2 + $0x9a0] sm:$0xff]
    %v457 = vld [vmem:[#allocation2 + $0x9a8] sm:$0xff]
    %v458 = vld [vmem:[#allocation2 + $0x9b0] sm:$0xff]
    %v459 = vld [vmem:[#allocation2 + $0x9b8] sm:$0xff]
    %v460 = vld [vmem:[#allocation2 + $0x9c0] sm:$0xff]
    %v461 = vld [vmem:[#allocation2 + $0x9c8] sm:$0xff]
    %v462 = vld [vmem:[#allocation2 + $0x9d0] sm:$0xff]
    %v463 = vld [vmem:[#allocation2 + $0x9d8] sm:$0xff]
    %v464 = vld [vmem:[#allocation2 + $0x9e0] sm:$0xff]
    %v465 = vld [vmem:[#allocation2 + $0x9e8] sm:$0xff]
    %v466 = vld [vmem:[#allocation2 + $0x9f0] sm:$0xff]
    %v467 = vld [vmem:[#allocation2 + $0x9f8] sm:$0xff]
    %v468 = vld [vmem:[#allocation2 + $0xa00] sm:$0xff]
    %v469 = vld [vmem:[#allocation2 + $0xa08] sm:$0xff]
    %v470 = vld [vmem:[#allocation2 + $0xa10] sm:$0xff]
    %v471 = vld [vmem:[#allocation2 + $0xa18] sm:$0xff]
    %v472 = vld [vmem:[#allocation2 + $0xa20] sm:$0xff]
    %v473 = vld [vmem:[#allocation2 + $0xa28] sm:$0xff]
    %v474 = vld [vmem:[#allocation2 + $0xa30] sm:$0xff]
    %v475 = vld [vmem:[#allocation2 + $0xa38] sm:$0xff]
    %v476 = vld [vmem:[#allocation2 + $0xa40] sm:$0xff]
    %v477 = vld [vmem:[#allocation2 + $0xa48] sm:$0xff]
    %v478 = vld [vmem:[#allocation2 + $0xa50] sm:$0xff]
    %v479 = vld [vmem:[#allocation2 + $0xa58] sm:$0xff]
    %v480 = vld [vmem:[#allocation2 + $0xa60] sm:$0xff]
    %v481 = vld [vmem:[#allocation2 + $0xa68] sm:$0xff]
    %v482 = vld [vmem:[#allocation2 + $0xa70] sm:$0xff]
    %v483 = vld [vmem:[#allocation2 + $0xa78] sm:$0xff]
    %v484 = vld [vmem:[#allocation2 + $0xa80] sm:$0xff]
    %v485 = vld [vmem:[#allocation2 + $0xa88] sm:$0xff]
    %v486 = vld [vmem:[#allocation2 + $0xa90] sm:$0xff]
    %v487 = vld [vmem:[#allocation2 + $0xa98] sm:$0xff]
    %v488 = vld [vmem:[#allocation2 + $0xaa0] sm:$0xff]
    %v489 = vld [vmem:[#allocation2 + $0xaa8] sm:$0xff]
    %v490 = vld [vmem:[#allocation2 + $0xab0] sm:$0xff]
    %v491 = vld [vmem:[#allocation2 + $0xab8] sm:$0xff]
    %v492 = vld [vmem:[#allocation2 + $0xac0] sm:$0xff]
    %v493 = vld [vmem:[#allocation2 + $0xac8] sm:$0xff]
    %v494 = vld [vmem:[#allocation2 + $0xad0] sm:$0xff]
    %v495 = vld [vmem:[#allocation2 + $0xad8] sm:$0xff]
    %v496 = vld [vmem:[#allocation2 + $0xae0] sm:$0xff]
    %v497 = vld [vmem:[#allocation2 + $0xae8] sm:$0xff]
    %v498 = vld [vmem:[#allocation2 + $0xaf0] sm:$0xff]
    %v499 = vld [vmem:[#allocation2 + $0xaf8] sm:$0xff]
    %v500 = vld [vmem:[#allocation2 + $0xb00] sm:$0xff]
    %v501 = vld [vmem:[#allocation2 + $0xb08] sm:$0xff]
    %v502 = vld [vmem:[#allocation2 + $0xb10] sm:$0xff]
    %v503 = vld [vmem:[#allocation2 + $0xb18] sm:$0xff]
    %v504 = vld [vmem:[#allocation2 + $0xb20] sm:$0xff]
    %v505 = vld [vmem:[#allocation2 + $0xb28] sm:$0xff]
    %v506 = vld [vmem:[#allocation2 + $0xb30] sm:$0xff]
    %v507 = vld [vmem:[#allocation2 + $0xb38] sm:$0xff]
    %v508 = vld [vmem:[#allocation2 + $0xb40] sm:$0xff]
    %v509 = vld [vmem:[#allocation2 + $0xb48] sm:$0xff]
    %v510 = vld [vmem:[#allocation2 + $0xb50] sm:$0xff]
    %v511 = vld [vmem:[#allocation2 + $0xb58] sm:$0xff]
    %v512 = vld [vmem:[#allocation2 + $0xb60] sm:$0xff]
    %v513 = vld [vmem:[#allocation2 + $0xb68] sm:$0xff]
    %v514 = vld [vmem:[#allocation2 + $0xb70] sm:$0xff]
    %v515 = vld [vmem:[#allocation2 + $0xb78] sm:$0xff]
    %v516 = vld [vmem:[#allocation2 + $0xb80] sm:$0xff]
    %v517 = vld [vmem:[#allocation2 + $0xb88] sm:$0xff]
    %v518 = vld [vmem:[#allocation2 + $0xb90] sm:$0xff]
    %v519 = vld [vmem:[#allocation2 + $0xb98] sm:$0xff]
    %v520 = vld [vmem:[#allocation2 + $0xba0] sm:$0xff]
    %v521 = vld [vmem:[#allocation2 + $0xba8] sm:$0xff]
    %v522 = vld [vmem:[#allocation2 + $0xbb0] sm:$0xff]
    %v523 = vld [vmem:[#allocation2 + $0xbb8] sm:$0xff]
    %v524 = vld [vmem:[#allocation2 + $0xbc0] sm:$0xff]
    %v525 = vld [vmem:[#allocation2 + $0xbc8] sm:$0xff]
    %v526 = vld [vmem:[#allocation2 + $0xbd0] sm:$0xff]
    %v527 = vld [vmem:[#allocation2 + $0xbd8] sm:$0xff]
    %v528 = vld [vmem:[#allocation2 + $0xbe0] sm:$0xff]
    %v529 = vld [vmem:[#allocation2 + $0xbe8] sm:$0xff]
    %v530 = vld [vmem:[#allocation2 + $0xbf0] sm:$0xff]
    %v531 = vld [vmem:[#allocation2 + $0xbf8] sm:$0xff]
    %v532 = vld [vmem:[#allocation2 + $0xc00] sm:$0xff]
    %v533 = vld [vmem:[#allocation2 + $0xc08] sm:$0xff]
    %v534 = vld [vmem:[#allocation2 + $0xc10] sm:$0xff]
    %v535 = vld [vmem:[#allocation2 + $0xc18] sm:$0xff]
    %v536 = vld [vmem:[#allocation2 + $0xc20] sm:$0xff]
    %v537 = vld [vmem:[#allocation2 + $0xc28] sm:$0xff]
    %v538 = vld [vmem:[#allocation2 + $0xc30] sm:$0xff]
    %v539 = vld [vmem:[#allocation2 + $0xc38] sm:$0xff]
    %v540 = vld [vmem:[#allocation2 + $0xc40] sm:$0xff]
    %v541 = vld [vmem:[#allocation2 + $0xc48] sm:$0xff]
    %v542 = vld [vmem:[#allocation2 + $0xc50] sm:$0xff]
    %v543 = vld [vmem:[#allocation2 + $0xc58] sm:$0xff]
    %v544 = vld [vmem:[#allocation2 + $0xc60] sm:$0xff]
    %v545 = vld [vmem:[#allocation2 + $0xc68] sm:$0xff]
    %v546 = vld [vmem:[#allocation2 + $0xc70] sm:$0xff]
    %v547 = vld [vmem:[#allocation2 + $0xc78] sm:$0xff]
    %v548 = vld [vmem:[#allocation2 + $0xc80] sm:$0xff]
    %v549 = vld [vmem:[#allocation2 + $0xc88] sm:$0xff]
    %v550 = vld [vmem:[#allocation2 + $0xc90] sm:$0xff]
    %v551 = vld [vmem:[#allocation2 + $0xc98] sm:$0xff]
    %v552 = vld [vmem:[#allocation2 + $0xca0] sm:$0xff]
    %v553 = vld [vmem:[#allocation2 + $0xca8] sm:$0xff]
    %v554 = vld [vmem:[#allocation2 + $0xcb0] sm:$0xff]
    %v555 = vld [vmem:[#allocation2 + $0xcb8] sm:$0xff]
    %v556 = vld [vmem:[#allocation2 + $0xcc0] sm:$0xff]
    %v557 = vld [vmem:[#allocation2 + $0xcc8] sm:$0xff]
    %v558 = vld [vmem:[#allocation2 + $0xcd0] sm:$0xff]
    %v559 = vld [vmem:[#allocation2 + $0xcd8] sm:$0xff]
    %v560 = vld [vmem:[#allocation2 + $0xce0] sm:$0xff]
    %v561 = vld [vmem:[#allocation2 + $0xce8] sm:$0xff]
    %v562 = vld [vmem:[#allocation2 + $0xcf0] sm:$0xff]
    %v563 = vld [vmem:[#allocation2 + $0xcf8] sm:$0xff]
    %v564 = vld [vmem:[#allocation2 + $0xd00] sm:$0xff]
    %v565 = vld [vmem:[#allocation2 + $0xd08] sm:$0xff]
    %v566 = vld [vmem:[#allocation2 + $0xd10] sm:$0xff]
    %v567 = vld [vmem:[#allocation2 + $0xd18] sm:$0xff]
    %v568 = vld [vmem:[#allocation2 + $0xd20] sm:$0xff]
    %v569 = vld [vmem:[#allocation2 + $0xd28] sm:$0xff]
    %v570 = vld [vmem:[#allocation2 + $0xd30] sm:$0xff]
    %v571 = vld [vmem:[#allocation2 + $0xd38] sm:$0xff]
    %v572 = vld [vmem:[#allocation2 + $0xd40] sm:$0xff]
    %v573 = vld [vmem:[#allocation2 + $0xd48] sm:$0xff]
    %v574 = vld [vmem:[#allocation2 + $0xd50] sm:$0xff]
    %v575 = vld [vmem:[#allocation2 + $0xd58] sm:$0xff]
    %v576 = vld [vmem:[#allocation2 + $0xd60] sm:$0xff]
    %v577 = vld [vmem:[#allocation2 + $0xd68] sm:$0xff]
    %v578 = vld [vmem:[#allocation2 + $0xd70] sm:$0xff]
    %v579 = vld [vmem:[#allocation2 + $0xd78] sm:$0xff]
    %v580 = vld [vmem:[#allocation2 + $0xd80] sm:$0xff]
    %v581 = vld [vmem:[#allocation2 + $0xd88] sm:$0xff]
    %v582 = vld [vmem:[#allocation2 + $0xd90] sm:$0xff]
    %v583 = vld [vmem:[#allocation2 + $0xd98] sm:$0xff]
    %v584 = vld [vmem:[#allocation2 + $0xda0] sm:$0xff]
    %v585 = vld [vmem:[#allocation2 + $0xda8] sm:$0xff]
    %v586 = vld [vmem:[#allocation2 + $0xdb0] sm:$0xff]
    %v587 = vld [vmem:[#allocation2 + $0xdb8] sm:$0xff]
    %v588 = vld [vmem:[#allocation2 + $0xdc0] sm:$0xff]
    %v589 = vld [vmem:[#allocation2 + $0xdc8] sm:$0xff]
    %v590 = vld [vmem:[#allocation2 + $0xdd0] sm:$0xff]
    %v591 = vld [vmem:[#allocation2 + $0xdd8] sm:$0xff]
    %v592 = vld [vmem:[#allocation2 + $0xde0] sm:$0xff]
    %v593 = vld [vmem:[#allocation2 + $0xde8] sm:$0xff]
    %v594 = vld [vmem:[#allocation2 + $0xdf0] sm:$0xff]
    %v595 = vld [vmem:[#allocation2 + $0xdf8] sm:$0xff]
    %v596 = vld [vmem:[#allocation2 + $0xe00] sm:$0xff]
    %v597 = vld [vmem:[#allocation2 + $0xe08] sm:$0xff]
    %v598 = vld [vmem:[#allocation2 + $0xe10] sm:$0xff]
    %v599 = vld [vmem:[#allocation2 + $0xe18] sm:$0xff]
    %v600 = vld [vmem:[#allocation2 + $0xe20] sm:$0xff]
    %v601 = vld [vmem:[#allocation2 + $0xe28] sm:$0xff]
    %v602 = vld [vmem:[#allocation2 + $0xe30] sm:$0xff]
    %v603 = vld [vmem:[#allocation2 + $0xe38] sm:$0xff]
    %v604 = vld [vmem:[#allocation2 + $0xe40] sm:$0xff]
    %v605 = vld [vmem:[#allocation2 + $0xe48] sm:$0xff]
    %v606 = vld [vmem:[#allocation2 + $0xe50] sm:$0xff]
    %v607 = vld [vmem:[#allocation2 + $0xe58] sm:$0xff]
    %v608 = vld [vmem:[#allocation2 + $0xe60] sm:$0xff]
    %v609 = vld [vmem:[#allocation2 + $0xe68] sm:$0xff]
    %v610 = vld [vmem:[#allocation2 + $0xe70] sm:$0xff]
    %v611 = vld [vmem:[#allocation2 + $0xe78] sm:$0xff]
    %v612 = vld [vmem:[#allocation2 + $0xe80] sm:$0xff]
    %v613 = vld [vmem:[#allocation2 + $0xe88] sm:$0xff]
    %v614 = vld [vmem:[#allocation2 + $0xe90] sm:$0xff]
    %v615 = vld [vmem:[#allocation2 + $0xe98] sm:$0xff]
    %v616 = vld [vmem:[#allocation2 + $0xea0] sm:$0xff]
    %v617 = vld [vmem:[#allocation2 + $0xea8] sm:$0xff]
    %v618 = vld [vmem:[#allocation2 + $0xeb0] sm:$0xff]
    %v619 = vld [vmem:[#allocation2 + $0xeb8] sm:$0xff]
    %v620 = vld [vmem:[#allocation2 + $0xec0] sm:$0xff]
    %v621 = vld [vmem:[#allocation2 + $0xec8] sm:$0xff]
    %v622 = vld [vmem:[#allocation2 + $0xed0] sm:$0xff]
    %v623 = vld [vmem:[#allocation2 + $0xed8] sm:$0xff]
    %v624 = vld [vmem:[#allocation2 + $0xee0] sm:$0xff]
    %v625 = vld [vmem:[#allocation2 + $0xee8] sm:$0xff]
    %v626 = vld [vmem:[#allocation2 + $0xef0] sm:$0xff]
    %v627 = vld [vmem:[#allocation2 + $0xef8] sm:$0xff]
    %v628 = vld [vmem:[#allocation2 + $0xf00] sm:$0xff]
    %v629 = vld [vmem:[#allocation2 + $0xf08] sm:$0xff]
    %v630 = vld [vmem:[#allocation2 + $0xf10] sm:$0xff]
    %v631 = vld [vmem:[#allocation2 + $0xf18] sm:$0xff]
    %v632 = vld [vmem:[#allocation2 + $0xf20] sm:$0xff]
    %v633 = vld [vmem:[#allocation2 + $0xf28] sm:$0xff]
    %v634 = vld [vmem:[#allocation2 + $0xf30] sm:$0xff]
    %v635 = vld [vmem:[#allocation2 + $0xf38] sm:$0xff]
    %v636 = vld [vmem:[#allocation2 + $0xf40] sm:$0xff]
    %v637 = vld [vmem:[#allocation2 + $0xf48] sm:$0xff]
    %v638 = vld [vmem:[#allocation2 + $0xf50] sm:$0xff]
    %v639 = vld [vmem:[#allocation2 + $0xf58] sm:$0xff]
    %v640 = vld [vmem:[#allocation2 + $0xf60] sm:$0xff]
    %v641 = vld [vmem:[#allocation2 + $0xf68] sm:$0xff]
    %v642 = vld [vmem:[#allocation2 + $0xf70] sm:$0xff]
    %v643 = vld [vmem:[#allocation2 + $0xf78] sm:$0xff]
    %v644 = vld [vmem:[#allocation2 + $0xf80] sm:$0xff]
    %v645 = vld [vmem:[#allocation2 + $0xf88] sm:$0xff]
    %v646 = vld [vmem:[#allocation2 + $0xf90] sm:$0xff]
    %v647 = vld [vmem:[#allocation2 + $0xf98] sm:$0xff]
    %v648 = vld [vmem:[#allocation2 + $0xfa0] sm:$0xff]
    %v649 = vld [vmem:[#allocation2 + $0xfa8] sm:$0xff]
    %v650 = vld [vmem:[#allocation2 + $0xfb0] sm:$0xff]
    %v651 = vld [vmem:[#allocation2 + $0xfb8] sm:$0xff]
    %v652 = vld [vmem:[#allocation2 + $0xfc0] sm:$0xff]
    %v653 = vld [vmem:[#allocation2 + $0xfc8] sm:$0xff]
    %v654 = vld [vmem:[#allocation2 + $0xfd0] sm:$0xff]
    %v655 = vld [vmem:[#allocation2 + $0xfd8] sm:$0xff]
    %v656 = vld [vmem:[#allocation2 + $0xfe0] sm:$0xff]
    %v657 = vld [vmem:[#allocation2 + $0xfe8] sm:$0xff]
    %v658 = vld [vmem:[#allocation2 + $0xff0] sm:$0xff]
    %v659 = vld [vmem:[#allocation2 + $0xff8] sm:$0xff]
    %v660 = vld [vmem:[#allocation2 + $0x1000] sm:$0xff]
    %v661 = vld [vmem:[#allocation2 + $0x1008] sm:$0xff]
    %v662 = vld [vmem:[#allocation2 + $0x1010] sm:$0xff]
    %v663 = vld [vmem:[#allocation2 + $0x1018] sm:$0xff]
    %v664 = vld [vmem:[#allocation2 + $0x1020] sm:$0xff]
    %v665 = vld [vmem:[#allocation2 + $0x1028] sm:$0xff]
    %v666 = vld [vmem:[#allocation2 + $0x1030] sm:$0xff]
    %v667 = vld [vmem:[#allocation2 + $0x1038] sm:$0xff]
    %v668 = vld [vmem:[#allocation2 + $0x1040] sm:$0xff]
    %v669 = vld [vmem:[#allocation2 + $0x1048] sm:$0xff]
    %v670 = vld [vmem:[#allocation2 + $0x1050] sm:$0xff]
    %v671 = vld [vmem:[#allocation2 + $0x1058] sm:$0xff]
    %v672 = vld [vmem:[#allocation2 + $0x1060] sm:$0xff]
    %v673 = vld [vmem:[#allocation2 + $0x1068] sm:$0xff]
    %v674 = vld [vmem:[#allocation2 + $0x1070] sm:$0xff]
    %v675 = vld [vmem:[#allocation2 + $0x1078] sm:$0xff]
    %v676 = vld [vmem:[#allocation2 + $0x1080] sm:$0xff]
    %v677 = vld [vmem:[#allocation2 + $0x1088] sm:$0xff]
    %v678 = vld [vmem:[#allocation2 + $0x1090] sm:$0xff]
    %v679 = vld [vmem:[#allocation2 + $0x1098] sm:$0xff]
    %v680 = vld [vmem:[#allocation2 + $0x10a0] sm:$0xff]
    %v681 = vld [vmem:[#allocation2 + $0x10a8] sm:$0xff]
    %v682 = vld [vmem:[#allocation2 + $0x10b0] sm:$0xff]
    %v683 = vld [vmem:[#allocation2 + $0x10b8] sm:$0xff]
    %v684 = vld [vmem:[#allocation2 + $0x10c0] sm:$0xff]
    %v685 = vld [vmem:[#allocation2 + $0x10c8] sm:$0xff]
    %v686 = vld [vmem:[#allocation2 + $0x10d0] sm:$0xff]
    %v687 = vld [vmem:[#allocation2 + $0x10d8] sm:$0xff]
    %v688 = vld [vmem:[#allocation2 + $0x10e0] sm:$0xff]
    %v689 = vld [vmem:[#allocation2 + $0x10e8] sm:$0xff]
    %v690 = vld [vmem:[#allocation2 + $0x10f0] sm:$0xff]
    %v691 = vld [vmem:[#allocation2 + $0x10f8] sm:$0xff]
    %v692 = vld [vmem:[#allocation2 + $0x1100] sm:$0xff]
    %v693 = vld [vmem:[#allocation2 + $0x1108] sm:$0xff]
    %v694 = vld [vmem:[#allocation2 + $0x1110] sm:$0xff]
    %v695 = vld [vmem:[#allocation2 + $0x1118] sm:$0xff]
    %v696 = vld [vmem:[#allocation2 + $0x1120] sm:$0xff]
    %v697 = vld [vmem:[#allocation2 + $0x1128] sm:$0xff]
    %v698 = vld [vmem:[#allocation2 + $0x1130] sm:$0xff]
    %v699 = vld [vmem:[#allocation2 + $0x1138] sm:$0xff]
    %v700 = vld [vmem:[#allocation2 + $0x1140] sm:$0xff]
    %v701 = vld [vmem:[#allocation2 + $0x1148] sm:$0xff]
    %v702 = vld [vmem:[#allocation2 + $0x1150] sm:$0xff]
    %v703 = vld [vmem:[#allocation2 + $0x1158] sm:$0xff]
    %v704 = vld [vmem:[#allocation2 + $0x1160] sm:$0xff]
    %v705 = vld [vmem:[#allocation2 + $0x1168] sm:$0xff]
    %v706 = vld [vmem:[#allocation2 + $0x1170] sm:$0xff]
    %v707 = vld [vmem:[#allocation2 + $0x1178] sm:$0xff]
    %v708 = vld [vmem:[#allocation2 + $0x1180] sm:$0xff]
    %v709 = vld [vmem:[#allocation2 + $0x1188] sm:$0xff]
    %v710 = vld [vmem:[#allocation2 + $0x1190] sm:$0xff]
    %v711 = vld [vmem:[#allocation2 + $0x1198] sm:$0xff]
    %v712 = vld [vmem:[#allocation2 + $0x11a0] sm:$0xff]
    %v713 = vld [vmem:[#allocation2 + $0x11a8] sm:$0xff]
    %v714 = vld [vmem:[#allocation2 + $0x11b0] sm:$0xff]
    %v715 = vld [vmem:[#allocation2 + $0x11b8] sm:$0xff]
    %v716 = vld [vmem:[#allocation2 + $0x11c0] sm:$0xff]
    %v717 = vld [vmem:[#allocation2 + $0x11c8] sm:$0xff]
    %v718 = vld [vmem:[#allocation2 + $0x11d0] sm:$0xff]
    %v719 = vld [vmem:[#allocation2 + $0x11d8] sm:$0xff]
    %v720 = vld [vmem:[#allocation2 + $0x11e0] sm:$0xff]
    %v721 = vld [vmem:[#allocation2 + $0x11e8] sm:$0xff]
    %v722 = vld [vmem:[#allocation2 + $0x11f0] sm:$0xff]
    %v723 = vld [vmem:[#allocation2 + $0x11f8] sm:$0xff]
    %v724 = vld [vmem:[#allocation2 + $0x1200] sm:$0xff]
    %v725 = vld [vmem:[#allocation2 + $0x1208] sm:$0xff]
    %v726 = vld [vmem:[#allocation2 + $0x1210] sm:$0xff]
    %v727 = vld [vmem:[#allocation2 + $0x1218] sm:$0xff]
    %v728 = vld [vmem:[#allocation2 + $0x1220] sm:$0xff]
    %v729 = vld [vmem:[#allocation2 + $0x1228] sm:$0xff]
    %v730 = vld [vmem:[#allocation2 + $0x1230] sm:$0xff]
    %v731 = vld [vmem:[#allocation2 + $0x1238] sm:$0xff]
    %v732 = vld [vmem:[#allocation2 + $0x1240] sm:$0xff]
    %v733 = vld [vmem:[#allocation2 + $0x1248] sm:$0xff]
    %v734 = vld [vmem:[#allocation2 + $0x1250] sm:$0xff]
    %v735 = vld [vmem:[#allocation2 + $0x1258] sm:$0xff]
    %v736 = vld [vmem:[#allocation4] sm:$0xff]
    %v737 = vld [vmem:[#allocation4 + $0x8] sm:$0xf]
    %v740 = vlaneseq
    %v741 = vshrl.u32 %v740, 7
    %v742 = vsub.s32 0, %v741
    %v743 = vrot.slane %v736, %v742
    %v744 = vlaneseq
    %v745 = vshrl.u32 %v744, 7
    %v746 = vsub.s32 1, %v745
    %v747 = vrot.slane %v736, %v746
    %v748 = vlaneseq
    %v749 = vshrl.u32 %v748, 7
    %v750 = vsub.s32 2, %v749
    %v751 = vrot.slane %v736, %v750
    %v752 = vlaneseq
    %v753 = vshrl.u32 %v752, 7
    %v754 = vsub.s32 3, %v753
    %v755 = vrot.slane %v736, %v754
    %v756 = vlaneseq
    %v757 = vshrl.u32 %v756, 7
    %v758 = vsub.s32 4, %v757
    %v759 = vrot.slane %v736, %v758
    %v760 = vlaneseq
    %v761 = vshrl.u32 %v760, 7
    %v762 = vsub.s32 5, %v761
    %v763 = vrot.slane %v736, %v762
    %v764 = vlaneseq
    %v765 = vshrl.u32 %v764, 7
    %v766 = vsub.s32 6, %v765
    %v767 = vrot.slane %v736, %v766
    %v768 = vlaneseq
    %v769 = vshrl.u32 %v768, 7
    %v770 = vsub.s32 7, %v769
    %v771 = vrot.slane %v736, %v770
    %v772 = vlaneseq
    %v773 = vshrl.u32 %v772, 7
    %v774 = vsub.s32 0, %v773
    %v775 = vrot.slane %v737, %v774
    %v776 = vlaneseq
    %v777 = vshrl.u32 %v776, 7
    %v778 = vsub.s32 1, %v777
    %v779 = vrot.slane %v737, %v778
    %v780 = vlaneseq
    %v781 = vshrl.u32 %v780, 7
    %v782 = vsub.s32 2, %v781
    %v783 = vrot.slane %v737, %v782
    %v784 = vlaneseq
    %v785 = vshrl.u32 %v784, 7
    %v786 = vsub.s32 3, %v785
    %v787 = vrot.slane %v737, %v786
    %v1388 = vunpack.c.l.b16 %v148
    %v1389 = vunpack.c.h.b16 %v148
    %v1390 = vunpack.c.l.b16 %v149
    %v1391 = vunpack.c.h.b16 %v149
    %v1392 = vunpack.c.l.b16 %v150
    %v1393 = vunpack.c.h.b16 %v150
    %v1394 = vunpack.c.l.b16 %v151
    %v1395 = vunpack.c.h.b16 %v151
    %v1396 = vunpack.c.l.b16 %v152
    %v1397 = vunpack.c.h.b16 %v152
    %v1398 = vunpack.c.l.b16 %v153
    %v1399 = vunpack.c.h.b16 %v153
    %v1400 = vunpack.c.l.b16 %v154
    %v1401 = vunpack.c.h.b16 %v154
    %v1402 = vunpack.c.l.b16 %v155
    %v1403 = vunpack.c.h.b16 %v155
    %v1404 = vunpack.c.l.b16 %v156
    %v1405 = vunpack.c.h.b16 %v156
    %v1406 = vunpack.c.l.b16 %v157
    %v1407 = vunpack.c.h.b16 %v157
    %v1408 = vunpack.c.l.b16 %v158
    %v1409 = vunpack.c.h.b16 %v158
    %v1410 = vunpack.c.l.b16 %v159
    %v1411 = vunpack.c.h.b16 %v159
    %v1412 = vunpack.c.l.b16 %v160
    %v1413 = vunpack.c.h.b16 %v160
    %v1414 = vunpack.c.l.b16 %v161
    %v1415 = vunpack.c.h.b16 %v161
    %v1416 = vunpack.c.l.b16 %v162
    %v1417 = vunpack.c.h.b16 %v162
    %v1418 = vunpack.c.l.b16 %v163
    %v1419 = vunpack.c.h.b16 %v163
    %v1420 = vunpack.c.l.b16 %v164
    %v1421 = vunpack.c.h.b16 %v164
    %v1422 = vunpack.c.l.b16 %v165
    %v1423 = vunpack.c.h.b16 %v165
    %v1424 = vunpack.c.l.b16 %v166
    %v1425 = vunpack.c.h.b16 %v166
    %v1426 = vunpack.c.l.b16 %v167
    %v1427 = vunpack.c.h.b16 %v167
    %v1428 = vunpack.c.l.b16 %v168
    %v1429 = vunpack.c.h.b16 %v168
    %v1430 = vunpack.c.l.b16 %v169
    %v1431 = vunpack.c.h.b16 %v169
    %v1432 = vunpack.c.l.b16 %v170
    %v1433 = vunpack.c.h.b16 %v170
    %v1434 = vunpack.c.l.b16 %v171
    %v1435 = vunpack.c.h.b16 %v171
    %v1436 = vunpack.c.l.b16 %v172
    %v1437 = vunpack.c.h.b16 %v172
    %v1438 = vunpack.c.l.b16 %v173
    %v1439 = vunpack.c.h.b16 %v173
    %v1440 = vunpack.c.l.b16 %v174
    %v1441 = vunpack.c.h.b16 %v174
    %v1442 = vunpack.c.l.b16 %v175
    %v1443 = vunpack.c.h.b16 %v175
    %v1444 = vunpack.c.l.b16 %v176
    %v1445 = vunpack.c.h.b16 %v176
    %v1446 = vunpack.c.l.b16 %v177
    %v1447 = vunpack.c.h.b16 %v177
    %v1448 = vunpack.c.l.b16 %v178
    %v1449 = vunpack.c.h.b16 %v178
    %v1450 = vunpack.c.l.b16 %v179
    %v1451 = vunpack.c.h.b16 %v179
    %v1452 = vunpack.c.l.b16 %v180
    %v1453 = vunpack.c.h.b16 %v180
    %v1454 = vunpack.c.l.b16 %v181
    %v1455 = vunpack.c.h.b16 %v181
    %v1456 = vunpack.c.l.b16 %v182
    %v1457 = vunpack.c.h.b16 %v182
    %v1458 = vunpack.c.l.b16 %v183
    %v1459 = vunpack.c.h.b16 %v183
    %v1460 = vunpack.c.l.b16 %v184
    %v1461 = vunpack.c.h.b16 %v184
    %v1462 = vunpack.c.l.b16 %v185
    %v1463 = vunpack.c.h.b16 %v185
    %v1464 = vunpack.c.l.b16 %v186
    %v1465 = vunpack.c.h.b16 %v186
    %v1466 = vunpack.c.l.b16 %v187
    %v1467 = vunpack.c.h.b16 %v187
    %v1468 = vunpack.c.l.b16 %v188
    %v1469 = vunpack.c.h.b16 %v188
    %v1470 = vunpack.c.l.b16 %v189
    %v1471 = vunpack.c.h.b16 %v189
    %v1472 = vunpack.c.l.b16 %v190
    %v1473 = vunpack.c.h.b16 %v190
    %v1474 = vunpack.c.l.b16 %v191
    %v1475 = vunpack.c.h.b16 %v191
    %v1476 = vunpack.c.l.b16 %v192
    %v1477 = vunpack.c.h.b16 %v192
    %v1478 = vunpack.c.l.b16 %v193
    %v1479 = vunpack.c.h.b16 %v193
    %v1480 = vunpack.c.l.b16 %v194
    %v1481 = vunpack.c.h.b16 %v194
    %v1482 = vunpack.c.l.b16 %v195
    %v1483 = vunpack.c.h.b16 %v195
    %v1484 = vunpack.c.l.b16 %v196
    %v1485 = vunpack.c.h.b16 %v196
    %v1486 = vunpack.c.l.b16 %v197
    %v1487 = vunpack.c.h.b16 %v197
    %v1488 = vunpack.c.l.b16 %v198
    %v1489 = vunpack.c.h.b16 %v198
    %v1490 = vunpack.c.l.b16 %v199
    %v1491 = vunpack.c.h.b16 %v199
    %v1492 = vunpack.c.l.b16 %v200
    %v1493 = vunpack.c.h.b16 %v200
    %v1494 = vunpack.c.l.b16 %v201
    %v1495 = vunpack.c.h.b16 %v201
    %v1496 = vunpack.c.l.b16 %v202
    %v1497 = vunpack.c.h.b16 %v202
    %v1498 = vunpack.c.l.b16 %v203
    %v1499 = vunpack.c.h.b16 %v203
    %v1500 = vunpack.c.l.b16 %v204
    %v1501 = vunpack.c.h.b16 %v204
    %v1502 = vunpack.c.l.b16 %v205
    %v1503 = vunpack.c.h.b16 %v205
    %v1504 = vunpack.c.l.b16 %v206
    %v1505 = vunpack.c.h.b16 %v206
    %v1506 = vunpack.c.l.b16 %v207
    %v1507 = vunpack.c.h.b16 %v207
    %v1508 = vunpack.c.l.b16 %v208
    %v1509 = vunpack.c.h.b16 %v208
    %v1510 = vunpack.c.l.b16 %v209
    %v1511 = vunpack.c.h.b16 %v209
    %v1512 = vunpack.c.l.b16 %v210
    %v1513 = vunpack.c.h.b16 %v210
    %v1514 = vunpack.c.l.b16 %v211
    %v1515 = vunpack.c.h.b16 %v211
    %v1516 = vunpack.c.l.b16 %v212
    %v1517 = vunpack.c.h.b16 %v212
    %v1518 = vunpack.c.l.b16 %v213
    %v1519 = vunpack.c.h.b16 %v213
    %v1520 = vunpack.c.l.b16 %v214
    %v1521 = vunpack.c.h.b16 %v214
    %v1522 = vunpack.c.l.b16 %v215
    %v1523 = vunpack.c.h.b16 %v215
    %v1524 = vunpack.c.l.b16 %v216
    %v1525 = vunpack.c.h.b16 %v216
    %v1526 = vunpack.c.l.b16 %v217
    %v1527 = vunpack.c.h.b16 %v217
    %v1528 = vunpack.c.l.b16 %v218
    %v1529 = vunpack.c.h.b16 %v218
    %v1530 = vunpack.c.l.b16 %v219
    %v1531 = vunpack.c.h.b16 %v219
    %v1532 = vunpack.c.l.b16 %v220
    %v1533 = vunpack.c.h.b16 %v220
    %v1534 = vunpack.c.l.b16 %v221
    %v1535 = vunpack.c.h.b16 %v221
    %v1536 = vunpack.c.l.b16 %v222
    %v1537 = vunpack.c.h.b16 %v222
    %v1538 = vunpack.c.l.b16 %v223
    %v1539 = vunpack.c.h.b16 %v223
    %v1540 = vunpack.c.l.b16 %v224
    %v1541 = vunpack.c.h.b16 %v224
    %v1542 = vunpack.c.l.b16 %v225
    %v1543 = vunpack.c.h.b16 %v225
    %v1544 = vunpack.c.l.b16 %v226
    %v1545 = vunpack.c.h.b16 %v226
    %v1546 = vunpack.c.l.b16 %v227
    %v1547 = vunpack.c.h.b16 %v227
    %v1548 = vunpack.c.l.b16 %v228
    %v1549 = vunpack.c.h.b16 %v228
    %v1550 = vunpack.c.l.b16 %v229
    %v1551 = vunpack.c.h.b16 %v229
    %v1552 = vunpack.c.l.b16 %v230
    %v1553 = vunpack.c.h.b16 %v230
    %v1554 = vunpack.c.l.b16 %v231
    %v1555 = vunpack.c.h.b16 %v231
    %v1556 = vunpack.c.l.b16 %v232
    %v1557 = vunpack.c.h.b16 %v232
    %v1558 = vunpack.c.l.b16 %v233
    %v1559 = vunpack.c.h.b16 %v233
    %v1560 = vunpack.c.l.b16 %v234
    %v1561 = vunpack.c.h.b16 %v234
    %v1562 = vunpack.c.l.b16 %v235
    %v1563 = vunpack.c.h.b16 %v235
    %v1564 = vunpack.c.l.b16 %v236
    %v1565 = vunpack.c.h.b16 %v236
    %v1566 = vunpack.c.l.b16 %v237
    %v1567 = vunpack.c.h.b16 %v237
    %v1568 = vunpack.c.l.b16 %v238
    %v1569 = vunpack.c.h.b16 %v238
    %v1570 = vunpack.c.l.b16 %v239
    %v1571 = vunpack.c.h.b16 %v239
    %v1572 = vunpack.c.l.b16 %v240
    %v1573 = vunpack.c.h.b16 %v240
    %v1574 = vunpack.c.l.b16 %v241
    %v1575 = vunpack.c.h.b16 %v241
    %v1576 = vunpack.c.l.b16 %v242
    %v1577 = vunpack.c.h.b16 %v242
    %v1578 = vunpack.c.l.b16 %v243
    %v1579 = vunpack.c.h.b16 %v243
    %v1580 = vunpack.c.l.b16 %v244
    %v1581 = vunpack.c.h.b16 %v244
    %v1582 = vunpack.c.l.b16 %v245
    %v1583 = vunpack.c.h.b16 %v245
    %v1584 = vunpack.c.l.b16 %v246
    %v1585 = vunpack.c.h.b16 %v246
    %v1586 = vunpack.c.l.b16 %v247
    %v1587 = vunpack.c.h.b16 %v247
    %v1588 = vunpack.c.l.b16 %v248
    %v1589 = vunpack.c.h.b16 %v248
    %v1590 = vunpack.c.l.b16 %v249
    %v1591 = vunpack.c.h.b16 %v249
    %v1592 = vunpack.c.l.b16 %v250
    %v1593 = vunpack.c.h.b16 %v250
    %v1594 = vunpack.c.l.b16 %v251
    %v1595 = vunpack.c.h.b16 %v251
    %v1596 = vunpack.c.l.b16 %v252
    %v1597 = vunpack.c.h.b16 %v252
    %v1598 = vunpack.c.l.b16 %v253
    %v1599 = vunpack.c.h.b16 %v253
    %v1600 = vunpack.c.l.b16 %v254
    %v1601 = vunpack.c.h.b16 %v254
    %v1602 = vunpack.c.l.b16 %v255
    %v1603 = vunpack.c.h.b16 %v255
    %v1604 = vunpack.c.l.b16 %v256
    %v1605 = vunpack.c.h.b16 %v256
    %v1606 = vunpack.c.l.b16 %v257
    %v1607 = vunpack.c.h.b16 %v257
    %v1608 = vunpack.c.l.b16 %v258
    %v1609 = vunpack.c.h.b16 %v258
    %v1610 = vunpack.c.l.b16 %v259
    %v1611 = vunpack.c.h.b16 %v259
    %v1612 = vunpack.c.l.b16 %v260
    %v1613 = vunpack.c.h.b16 %v260
    %v1614 = vunpack.c.l.b16 %v261
    %v1615 = vunpack.c.h.b16 %v261
    %v1616 = vunpack.c.l.b16 %v262
    %v1617 = vunpack.c.h.b16 %v262
    %v1618 = vunpack.c.l.b16 %v263
    %v1619 = vunpack.c.h.b16 %v263
    %v1620 = vunpack.c.l.b16 %v264
    %v1621 = vunpack.c.h.b16 %v264
    %v1622 = vunpack.c.l.b16 %v265
    %v1623 = vunpack.c.h.b16 %v265
    %v1624 = vunpack.c.l.b16 %v266
    %v1625 = vunpack.c.h.b16 %v266
    %v1626 = vunpack.c.l.b16 %v267
    %v1627 = vunpack.c.h.b16 %v267
    %v1628 = vunpack.c.l.b16 %v268
    %v1629 = vunpack.c.h.b16 %v268
    %v1630 = vunpack.c.l.b16 %v269
    %v1631 = vunpack.c.h.b16 %v269
    %v1632 = vunpack.c.l.b16 %v270
    %v1633 = vunpack.c.h.b16 %v270
    %v1634 = vunpack.c.l.b16 %v271
    %v1635 = vunpack.c.h.b16 %v271
    %v1636 = vunpack.c.l.b16 %v272
    %v1637 = vunpack.c.h.b16 %v272
    %v1638 = vunpack.c.l.b16 %v273
    %v1639 = vunpack.c.h.b16 %v273
    %v1640 = vunpack.c.l.b16 %v274
    %v1641 = vunpack.c.h.b16 %v274
    %v1642 = vunpack.c.l.b16 %v275
    %v1643 = vunpack.c.h.b16 %v275
    %v1644 = vunpack.c.l.b16 %v276
    %v1645 = vunpack.c.h.b16 %v276
    %v1646 = vunpack.c.l.b16 %v277
    %v1647 = vunpack.c.h.b16 %v277
    %v1648 = vunpack.c.l.b16 %v278
    %v1649 = vunpack.c.h.b16 %v278
    %v1650 = vunpack.c.l.b16 %v279
    %v1651 = vunpack.c.h.b16 %v279
    %v1652 = vunpack.c.l.b16 %v280
    %v1653 = vunpack.c.h.b16 %v280
    %v1654 = vunpack.c.l.b16 %v281
    %v1655 = vunpack.c.h.b16 %v281
    %v1656 = vunpack.c.l.b16 %v282
    %v1657 = vunpack.c.h.b16 %v282
    %v1658 = vunpack.c.l.b16 %v283
    %v1659 = vunpack.c.h.b16 %v283
    %v1660 = vunpack.c.l.b16 %v284
    %v1661 = vunpack.c.h.b16 %v284
    %v1662 = vunpack.c.l.b16 %v285
    %v1663 = vunpack.c.h.b16 %v285
    %v1664 = vunpack.c.l.b16 %v286
    %v1665 = vunpack.c.h.b16 %v286
    %v1666 = vunpack.c.l.b16 %v287
    %v1667 = vunpack.c.h.b16 %v287
    %v1668 = vunpack.c.l.b16 %v288
    %v1669 = vunpack.c.h.b16 %v288
    %v1670 = vunpack.c.l.b16 %v289
    %v1671 = vunpack.c.h.b16 %v289
    %v1672 = vunpack.c.l.b16 %v290
    %v1673 = vunpack.c.h.b16 %v290
    %v1674 = vunpack.c.l.b16 %v291
    %v1675 = vunpack.c.h.b16 %v291
    %v1676 = vunpack.c.l.b16 %v292
    %v1677 = vunpack.c.h.b16 %v292
    %v1678 = vunpack.c.l.b16 %v293
    %v1679 = vunpack.c.h.b16 %v293
    %v1680 = vunpack.c.l.b16 %v294
    %v1681 = vunpack.c.h.b16 %v294
    %v1682 = vunpack.c.l.b16 %v295
    %v1683 = vunpack.c.h.b16 %v295
    %v1684 = vunpack.c.l.b16 %v296
    %v1685 = vunpack.c.h.b16 %v296
    %v1686 = vunpack.c.l.b16 %v297
    %v1687 = vunpack.c.h.b16 %v297
    %v1688 = vunpack.c.l.b16 %v298
    %v1689 = vunpack.c.h.b16 %v298
    %v1690 = vunpack.c.l.b16 %v299
    %v1691 = vunpack.c.h.b16 %v299
    %v1692 = vunpack.c.l.b16 %v300
    %v1693 = vunpack.c.h.b16 %v300
    %v1694 = vunpack.c.l.b16 %v301
    %v1695 = vunpack.c.h.b16 %v301
    %v1696 = vunpack.c.l.b16 %v302
    %v1697 = vunpack.c.h.b16 %v302
    %v1698 = vunpack.c.l.b16 %v303
    %v1699 = vunpack.c.h.b16 %v303
    %v1700 = vunpack.c.l.b16 %v304
    %v1701 = vunpack.c.h.b16 %v304
    %v1702 = vunpack.c.l.b16 %v305
    %v1703 = vunpack.c.h.b16 %v305
    %v1704 = vunpack.c.l.b16 %v306
    %v1705 = vunpack.c.h.b16 %v306
    %v1706 = vunpack.c.l.b16 %v307
    %v1707 = vunpack.c.h.b16 %v307
    %v1708 = vunpack.c.l.b16 %v308
    %v1709 = vunpack.c.h.b16 %v308
    %v1710 = vunpack.c.l.b16 %v309
    %v1711 = vunpack.c.h.b16 %v309
    %v1712 = vunpack.c.l.b16 %v310
    %v1713 = vunpack.c.h.b16 %v310
    %v1714 = vunpack.c.l.b16 %v311
    %v1715 = vunpack.c.h.b16 %v311
    %v1716 = vunpack.c.l.b16 %v312
    %v1717 = vunpack.c.h.b16 %v312
    %v1718 = vunpack.c.l.b16 %v313
    %v1719 = vunpack.c.h.b16 %v313
    %v1720 = vunpack.c.l.b16 %v314
    %v1721 = vunpack.c.h.b16 %v314
    %v1722 = vunpack.c.l.b16 %v315
    %v1723 = vunpack.c.h.b16 %v315
    %v1724 = vunpack.c.l.b16 %v316
    %v1725 = vunpack.c.h.b16 %v316
    %v1726 = vunpack.c.l.b16 %v317
    %v1727 = vunpack.c.h.b16 %v317
    %v1728 = vunpack.c.l.b16 %v318
    %v1729 = vunpack.c.h.b16 %v318
    %v1730 = vunpack.c.l.b16 %v319
    %v1731 = vunpack.c.h.b16 %v319
    %v1732 = vunpack.c.l.b16 %v320
    %v1733 = vunpack.c.h.b16 %v320
    %v1734 = vunpack.c.l.b16 %v321
    %v1735 = vunpack.c.h.b16 %v321
    %v1736 = vunpack.c.l.b16 %v322
    %v1737 = vunpack.c.h.b16 %v322
    %v1738 = vunpack.c.l.b16 %v323
    %v1739 = vunpack.c.h.b16 %v323
    %v1740 = vunpack.c.l.b16 %v324
    %v1741 = vunpack.c.h.b16 %v324
    %v1742 = vunpack.c.l.b16 %v325
    %v1743 = vunpack.c.h.b16 %v325
    %v1744 = vunpack.c.l.b16 %v326
    %v1745 = vunpack.c.h.b16 %v326
    %v1746 = vunpack.c.l.b16 %v327
    %v1747 = vunpack.c.h.b16 %v327
    %v1748 = vunpack.c.l.b16 %v328
    %v1749 = vunpack.c.h.b16 %v328
    %v1750 = vunpack.c.l.b16 %v329
    %v1751 = vunpack.c.h.b16 %v329
    %v1752 = vunpack.c.l.b16 %v330
    %v1753 = vunpack.c.h.b16 %v330
    %v1754 = vunpack.c.l.b16 %v331
    %v1755 = vunpack.c.h.b16 %v331
    %v1756 = vunpack.c.l.b16 %v332
    %v1757 = vunpack.c.h.b16 %v332
    %v1758 = vunpack.c.l.b16 %v333
    %v1759 = vunpack.c.h.b16 %v333
    %v1760 = vunpack.c.l.b16 %v334
    %v1761 = vunpack.c.h.b16 %v334
    %v1762 = vunpack.c.l.b16 %v335
    %v1763 = vunpack.c.h.b16 %v335
    %v1764 = vunpack.c.l.b16 %v336
    %v1765 = vunpack.c.h.b16 %v336
    %v1766 = vunpack.c.l.b16 %v337
    %v1767 = vunpack.c.h.b16 %v337
    %v1768 = vunpack.c.l.b16 %v338
    %v1769 = vunpack.c.h.b16 %v338
    %v1770 = vunpack.c.l.b16 %v339
    %v1771 = vunpack.c.h.b16 %v339
    %v1772 = vunpack.c.l.b16 %v340
    %v1773 = vunpack.c.h.b16 %v340
    %v1774 = vunpack.c.l.b16 %v341
    %v1775 = vunpack.c.h.b16 %v341
    %v1776 = vunpack.c.l.b16 %v342
    %v1777 = vunpack.c.h.b16 %v342
    %v1778 = vunpack.c.l.b16 %v343
    %v1779 = vunpack.c.h.b16 %v343
    %v1780 = vunpack.c.l.b16 %v344
    %v1781 = vunpack.c.h.b16 %v344
    %v1782 = vunpack.c.l.b16 %v345
    %v1783 = vunpack.c.h.b16 %v345
    %v1784 = vunpack.c.l.b16 %v346
    %v1785 = vunpack.c.h.b16 %v346
    %v1786 = vunpack.c.l.b16 %v347
    %v1787 = vunpack.c.h.b16 %v347
    %v1788 = vunpack.c.l.b16 %v348
    %v1789 = vunpack.c.h.b16 %v348
    %v1790 = vunpack.c.l.b16 %v349
    %v1791 = vunpack.c.h.b16 %v349
    %v1792 = vunpack.c.l.b16 %v350
    %v1793 = vunpack.c.h.b16 %v350
    %v1794 = vunpack.c.l.b16 %v351
    %v1795 = vunpack.c.h.b16 %v351
    %v1796 = vunpack.c.l.b16 %v352
    %v1797 = vunpack.c.h.b16 %v352
    %v1798 = vunpack.c.l.b16 %v353
    %v1799 = vunpack.c.h.b16 %v353
    %v1800 = vunpack.c.l.b16 %v354
    %v1801 = vunpack.c.h.b16 %v354
    %v1802 = vunpack.c.l.b16 %v355
    %v1803 = vunpack.c.h.b16 %v355
    %v1804 = vunpack.c.l.b16 %v356
    %v1805 = vunpack.c.h.b16 %v356
    %v1806 = vunpack.c.l.b16 %v357
    %v1807 = vunpack.c.h.b16 %v357
    %v1808 = vunpack.c.l.b16 %v358
    %v1809 = vunpack.c.h.b16 %v358
    %v1810 = vunpack.c.l.b16 %v359
    %v1811 = vunpack.c.h.b16 %v359
    %v1812 = vunpack.c.l.b16 %v360
    %v1813 = vunpack.c.h.b16 %v360
    %v1814 = vunpack.c.l.b16 %v361
    %v1815 = vunpack.c.h.b16 %v361
    %v1816 = vunpack.c.l.b16 %v362
    %v1817 = vunpack.c.h.b16 %v362
    %v1818 = vunpack.c.l.b16 %v363
    %v1819 = vunpack.c.h.b16 %v363
    %v1820 = vunpack.c.l.b16 %v364
    %v1821 = vunpack.c.h.b16 %v364
    %v1822 = vunpack.c.l.b16 %v365
    %v1823 = vunpack.c.h.b16 %v365
    %v1824 = vunpack.c.l.b16 %v366
    %v1825 = vunpack.c.h.b16 %v366
    %v1826 = vunpack.c.l.b16 %v367
    %v1827 = vunpack.c.h.b16 %v367
    %v1828 = vunpack.c.l.b16 %v368
    %v1829 = vunpack.c.h.b16 %v368
    %v1830 = vunpack.c.l.b16 %v369
    %v1831 = vunpack.c.h.b16 %v369
    %v1832 = vunpack.c.l.b16 %v370
    %v1833 = vunpack.c.h.b16 %v370
    %v1834 = vunpack.c.l.b16 %v371
    %v1835 = vunpack.c.h.b16 %v371
    %v1836 = vunpack.c.l.b16 %v372
    %v1837 = vunpack.c.h.b16 %v372
    %v1838 = vunpack.c.l.b16 %v373
    %v1839 = vunpack.c.h.b16 %v373
    %v1840 = vunpack.c.l.b16 %v374
    %v1841 = vunpack.c.h.b16 %v374
    %v1842 = vunpack.c.l.b16 %v375
    %v1843 = vunpack.c.h.b16 %v375
    %v1844 = vunpack.c.l.b16 %v376
    %v1845 = vunpack.c.h.b16 %v376
    %v1846 = vunpack.c.l.b16 %v377
    %v1847 = vunpack.c.h.b16 %v377
    %v1848 = vunpack.c.l.b16 %v378
    %v1849 = vunpack.c.h.b16 %v378
    %v1850 = vunpack.c.l.b16 %v379
    %v1851 = vunpack.c.h.b16 %v379
    %v1852 = vunpack.c.l.b16 %v380
    %v1853 = vunpack.c.h.b16 %v380
    %v1854 = vunpack.c.l.b16 %v381
    %v1855 = vunpack.c.h.b16 %v381
    %v1856 = vunpack.c.l.b16 %v382
    %v1857 = vunpack.c.h.b16 %v382
    %v1858 = vunpack.c.l.b16 %v383
    %v1859 = vunpack.c.h.b16 %v383
    %v1860 = vunpack.c.l.b16 %v384
    %v1861 = vunpack.c.h.b16 %v384
    %v1862 = vunpack.c.l.b16 %v385
    %v1863 = vunpack.c.h.b16 %v385
    %v1864 = vunpack.c.l.b16 %v386
    %v1865 = vunpack.c.h.b16 %v386
    %v1866 = vunpack.c.l.b16 %v387
    %v1867 = vunpack.c.h.b16 %v387
    %v1868 = vunpack.c.l.b16 %v388
    %v1869 = vunpack.c.h.b16 %v388
    %v1870 = vunpack.c.l.b16 %v389
    %v1871 = vunpack.c.h.b16 %v389
    %v1872 = vunpack.c.l.b16 %v390
    %v1873 = vunpack.c.h.b16 %v390
    %v1874 = vunpack.c.l.b16 %v391
    %v1875 = vunpack.c.h.b16 %v391
    %v1876 = vunpack.c.l.b16 %v392
    %v1877 = vunpack.c.h.b16 %v392
    %v1878 = vunpack.c.l.b16 %v393
    %v1879 = vunpack.c.h.b16 %v393
    %v1880 = vunpack.c.l.b16 %v394
    %v1881 = vunpack.c.h.b16 %v394
    %v1882 = vunpack.c.l.b16 %v395
    %v1883 = vunpack.c.h.b16 %v395
    %v1884 = vunpack.c.l.b16 %v396
    %v1885 = vunpack.c.h.b16 %v396
    %v1886 = vunpack.c.l.b16 %v397
    %v1887 = vunpack.c.h.b16 %v397
    %v1888 = vunpack.c.l.b16 %v398
    %v1889 = vunpack.c.h.b16 %v398
    %v1890 = vunpack.c.l.b16 %v399
    %v1891 = vunpack.c.h.b16 %v399
    %v1892 = vunpack.c.l.b16 %v400
    %v1893 = vunpack.c.h.b16 %v400
    %v1894 = vunpack.c.l.b16 %v401
    %v1895 = vunpack.c.h.b16 %v401
    %v1896 = vunpack.c.l.b16 %v402
    %v1897 = vunpack.c.h.b16 %v402
    %v1898 = vunpack.c.l.b16 %v403
    %v1899 = vunpack.c.h.b16 %v403
    %v1900 = vunpack.c.l.b16 %v404
    %v1901 = vunpack.c.h.b16 %v404
    %v1902 = vunpack.c.l.b16 %v405
    %v1903 = vunpack.c.h.b16 %v405
    %v1904 = vunpack.c.l.b16 %v406
    %v1905 = vunpack.c.h.b16 %v406
    %v1906 = vunpack.c.l.b16 %v407
    %v1907 = vunpack.c.h.b16 %v407
    %v1908 = vunpack.c.l.b16 %v408
    %v1909 = vunpack.c.h.b16 %v408
    %v1910 = vunpack.c.l.b16 %v409
    %v1911 = vunpack.c.h.b16 %v409
    %v1912 = vunpack.c.l.b16 %v410
    %v1913 = vunpack.c.h.b16 %v410
    %v1914 = vunpack.c.l.b16 %v411
    %v1915 = vunpack.c.h.b16 %v411
    %v1916 = vunpack.c.l.b16 %v412
    %v1917 = vunpack.c.h.b16 %v412
    %v1918 = vunpack.c.l.b16 %v413
    %v1919 = vunpack.c.h.b16 %v413
    %v1920 = vunpack.c.l.b16 %v414
    %v1921 = vunpack.c.h.b16 %v414
    %v1922 = vunpack.c.l.b16 %v415
    %v1923 = vunpack.c.h.b16 %v415
    %v1924 = vunpack.c.l.b16 %v416
    %v1925 = vunpack.c.h.b16 %v416
    %v1926 = vunpack.c.l.b16 %v417
    %v1927 = vunpack.c.h.b16 %v417
    %v1928 = vunpack.c.l.b16 %v418
    %v1929 = vunpack.c.h.b16 %v418
    %v1930 = vunpack.c.l.b16 %v419
    %v1931 = vunpack.c.h.b16 %v419
    %v1932 = vunpack.c.l.b16 %v420
    %v1933 = vunpack.c.h.b16 %v420
    %v1934 = vunpack.c.l.b16 %v421
    %v1935 = vunpack.c.h.b16 %v421
    %v1936 = vunpack.c.l.b16 %v422
    %v1937 = vunpack.c.h.b16 %v422
    %v1938 = vunpack.c.l.b16 %v423
    %v1939 = vunpack.c.h.b16 %v423
    %v1940 = vunpack.c.l.b16 %v424
    %v1941 = vunpack.c.h.b16 %v424
    %v1942 = vunpack.c.l.b16 %v425
    %v1943 = vunpack.c.h.b16 %v425
    %v1944 = vunpack.c.l.b16 %v426
    %v1945 = vunpack.c.h.b16 %v426
    %v1946 = vunpack.c.l.b16 %v427
    %v1947 = vunpack.c.h.b16 %v427
    %v1948 = vunpack.c.l.b16 %v428
    %v1949 = vunpack.c.h.b16 %v428
    %v1950 = vunpack.c.l.b16 %v429
    %v1951 = vunpack.c.h.b16 %v429
    %v1952 = vunpack.c.l.b16 %v430
    %v1953 = vunpack.c.h.b16 %v430
    %v1954 = vunpack.c.l.b16 %v431
    %v1955 = vunpack.c.h.b16 %v431
    %v1956 = vunpack.c.l.b16 %v432
    %v1957 = vunpack.c.h.b16 %v432
    %v1958 = vunpack.c.l.b16 %v433
    %v1959 = vunpack.c.h.b16 %v433
    %v1960 = vunpack.c.l.b16 %v434
    %v1961 = vunpack.c.h.b16 %v434
    %v1962 = vunpack.c.l.b16 %v435
    %v1963 = vunpack.c.h.b16 %v435
    %v1964 = vunpack.c.l.b16 %v436
    %v1965 = vunpack.c.h.b16 %v436
    %v1966 = vunpack.c.l.b16 %v437
    %v1967 = vunpack.c.h.b16 %v437
    %v1968 = vunpack.c.l.b16 %v438
    %v1969 = vunpack.c.h.b16 %v438
    %v1970 = vunpack.c.l.b16 %v439
    %v1971 = vunpack.c.h.b16 %v439
    %v1972 = vunpack.c.l.b16 %v440
    %v1973 = vunpack.c.h.b16 %v440
    %v1974 = vunpack.c.l.b16 %v441
    %v1975 = vunpack.c.h.b16 %v441
    %v1976 = vunpack.c.l.b16 %v442
    %v1977 = vunpack.c.h.b16 %v442
    %v1978 = vunpack.c.l.b16 %v443
    %v1979 = vunpack.c.h.b16 %v443
    %v1980 = vunpack.c.l.b16 %v444
    %v1981 = vunpack.c.h.b16 %v444
    %v1982 = vunpack.c.l.b16 %v445
    %v1983 = vunpack.c.h.b16 %v445
    %v1984 = vunpack.c.l.b16 %v446
    %v1985 = vunpack.c.h.b16 %v446
    %v1986 = vunpack.c.l.b16 %v447
    %v1987 = vunpack.c.h.b16 %v447
    %v1988 = vunpack.c.l.b16 %v448
    %v1989 = vunpack.c.h.b16 %v448
    %v1990 = vunpack.c.l.b16 %v449
    %v1991 = vunpack.c.h.b16 %v449
    %v1992 = vunpack.c.l.b16 %v450
    %v1993 = vunpack.c.h.b16 %v450
    %v1994 = vunpack.c.l.b16 %v451
    %v1995 = vunpack.c.h.b16 %v451
    %v1996 = vunpack.c.l.b16 %v452
    %v1997 = vunpack.c.h.b16 %v452
    %v1998 = vunpack.c.l.b16 %v453
    %v1999 = vunpack.c.h.b16 %v453
    %v2000 = vunpack.c.l.b16 %v454
    %v2001 = vunpack.c.h.b16 %v454
    %v2002 = vunpack.c.l.b16 %v455
    %v2003 = vunpack.c.h.b16 %v455
    %v2004 = vunpack.c.l.b16 %v456
    %v2005 = vunpack.c.h.b16 %v456
    %v2006 = vunpack.c.l.b16 %v457
    %v2007 = vunpack.c.h.b16 %v457
    %v2008 = vunpack.c.l.b16 %v458
    %v2009 = vunpack.c.h.b16 %v458
    %v2010 = vunpack.c.l.b16 %v459
    %v2011 = vunpack.c.h.b16 %v459
    %v2012 = vunpack.c.l.b16 %v460
    %v2013 = vunpack.c.h.b16 %v460
    %v2014 = vunpack.c.l.b16 %v461
    %v2015 = vunpack.c.h.b16 %v461
    %v2016 = vunpack.c.l.b16 %v462
    %v2017 = vunpack.c.h.b16 %v462
    %v2018 = vunpack.c.l.b16 %v463
    %v2019 = vunpack.c.h.b16 %v463
    %v2020 = vunpack.c.l.b16 %v464
    %v2021 = vunpack.c.h.b16 %v464
    %v2022 = vunpack.c.l.b16 %v465
    %v2023 = vunpack.c.h.b16 %v465
    %v2024 = vunpack.c.l.b16 %v466
    %v2025 = vunpack.c.h.b16 %v466
    %v2026 = vunpack.c.l.b16 %v467
    %v2027 = vunpack.c.h.b16 %v467
    %v2028 = vunpack.c.l.b16 %v468
    %v2029 = vunpack.c.h.b16 %v468
    %v2030 = vunpack.c.l.b16 %v469
    %v2031 = vunpack.c.h.b16 %v469
    %v2032 = vunpack.c.l.b16 %v470
    %v2033 = vunpack.c.h.b16 %v470
    %v2034 = vunpack.c.l.b16 %v471
    %v2035 = vunpack.c.h.b16 %v471
    %v2036 = vunpack.c.l.b16 %v472
    %v2037 = vunpack.c.h.b16 %v472
    %v2038 = vunpack.c.l.b16 %v473
    %v2039 = vunpack.c.h.b16 %v473
    %v2040 = vunpack.c.l.b16 %v474
    %v2041 = vunpack.c.h.b16 %v474
    %v2042 = vunpack.c.l.b16 %v475
    %v2043 = vunpack.c.h.b16 %v475
    %v2044 = vunpack.c.l.b16 %v476
    %v2045 = vunpack.c.h.b16 %v476
    %v2046 = vunpack.c.l.b16 %v477
    %v2047 = vunpack.c.h.b16 %v477
    %v2048 = vunpack.c.l.b16 %v478
    %v2049 = vunpack.c.h.b16 %v478
    %v2050 = vunpack.c.l.b16 %v479
    %v2051 = vunpack.c.h.b16 %v479
    %v2052 = vunpack.c.l.b16 %v480
    %v2053 = vunpack.c.h.b16 %v480
    %v2054 = vunpack.c.l.b16 %v481
    %v2055 = vunpack.c.h.b16 %v481
    %v2056 = vunpack.c.l.b16 %v482
    %v2057 = vunpack.c.h.b16 %v482
    %v2058 = vunpack.c.l.b16 %v483
    %v2059 = vunpack.c.h.b16 %v483
    %v2060 = vunpack.c.l.b16 %v484
    %v2061 = vunpack.c.h.b16 %v484
    %v2062 = vunpack.c.l.b16 %v485
    %v2063 = vunpack.c.h.b16 %v485
    %v2064 = vunpack.c.l.b16 %v486
    %v2065 = vunpack.c.h.b16 %v486
    %v2066 = vunpack.c.l.b16 %v487
    %v2067 = vunpack.c.h.b16 %v487
    %v2068 = vunpack.c.l.b16 %v488
    %v2069 = vunpack.c.h.b16 %v488
    %v2070 = vunpack.c.l.b16 %v489
    %v2071 = vunpack.c.h.b16 %v489
    %v2072 = vunpack.c.l.b16 %v490
    %v2073 = vunpack.c.h.b16 %v490
    %v2074 = vunpack.c.l.b16 %v491
    %v2075 = vunpack.c.h.b16 %v491
    %v2076 = vunpack.c.l.b16 %v492
    %v2077 = vunpack.c.h.b16 %v492
    %v2078 = vunpack.c.l.b16 %v493
    %v2079 = vunpack.c.h.b16 %v493
    %v2080 = vunpack.c.l.b16 %v494
    %v2081 = vunpack.c.h.b16 %v494
    %v2082 = vunpack.c.l.b16 %v495
    %v2083 = vunpack.c.h.b16 %v495
    %v2084 = vunpack.c.l.b16 %v496
    %v2085 = vunpack.c.h.b16 %v496
    %v2086 = vunpack.c.l.b16 %v497
    %v2087 = vunpack.c.h.b16 %v497
    %v2088 = vunpack.c.l.b16 %v498
    %v2089 = vunpack.c.h.b16 %v498
    %v2090 = vunpack.c.l.b16 %v499
    %v2091 = vunpack.c.h.b16 %v499
    %v2092 = vunpack.c.l.b16 %v500
    %v2093 = vunpack.c.h.b16 %v500
    %v2094 = vunpack.c.l.b16 %v501
    %v2095 = vunpack.c.h.b16 %v501
    %v2096 = vunpack.c.l.b16 %v502
    %v2097 = vunpack.c.h.b16 %v502
    %v2098 = vunpack.c.l.b16 %v503
    %v2099 = vunpack.c.h.b16 %v503
    %v2100 = vunpack.c.l.b16 %v504
    %v2101 = vunpack.c.h.b16 %v504
    %v2102 = vunpack.c.l.b16 %v505
    %v2103 = vunpack.c.h.b16 %v505
    %v2104 = vunpack.c.l.b16 %v506
    %v2105 = vunpack.c.h.b16 %v506
    %v2106 = vunpack.c.l.b16 %v507
    %v2107 = vunpack.c.h.b16 %v507
    %v2108 = vunpack.c.l.b16 %v508
    %v2109 = vunpack.c.h.b16 %v508
    %v2110 = vunpack.c.l.b16 %v509
    %v2111 = vunpack.c.h.b16 %v509
    %v2112 = vunpack.c.l.b16 %v510
    %v2113 = vunpack.c.h.b16 %v510
    %v2114 = vunpack.c.l.b16 %v511
    %v2115 = vunpack.c.h.b16 %v511
    %v2116 = vunpack.c.l.b16 %v512
    %v2117 = vunpack.c.h.b16 %v512
    %v2118 = vunpack.c.l.b16 %v513
    %v2119 = vunpack.c.h.b16 %v513
    %v2120 = vunpack.c.l.b16 %v514
    %v2121 = vunpack.c.h.b16 %v514
    %v2122 = vunpack.c.l.b16 %v515
    %v2123 = vunpack.c.h.b16 %v515
    %v2124 = vunpack.c.l.b16 %v516
    %v2125 = vunpack.c.h.b16 %v516
    %v2126 = vunpack.c.l.b16 %v517
    %v2127 = vunpack.c.h.b16 %v517
    %v2128 = vunpack.c.l.b16 %v518
    %v2129 = vunpack.c.h.b16 %v518
    %v2130 = vunpack.c.l.b16 %v519
    %v2131 = vunpack.c.h.b16 %v519
    %v2132 = vunpack.c.l.b16 %v520
    %v2133 = vunpack.c.h.b16 %v520
    %v2134 = vunpack.c.l.b16 %v521
    %v2135 = vunpack.c.h.b16 %v521
    %v2136 = vunpack.c.l.b16 %v522
    %v2137 = vunpack.c.h.b16 %v522
    %v2138 = vunpack.c.l.b16 %v523
    %v2139 = vunpack.c.h.b16 %v523
    %v2140 = vunpack.c.l.b16 %v524
    %v2141 = vunpack.c.h.b16 %v524
    %v2142 = vunpack.c.l.b16 %v525
    %v2143 = vunpack.c.h.b16 %v525
    %v2144 = vunpack.c.l.b16 %v526
    %v2145 = vunpack.c.h.b16 %v526
    %v2146 = vunpack.c.l.b16 %v527
    %v2147 = vunpack.c.h.b16 %v527
    %v2148 = vunpack.c.l.b16 %v528
    %v2149 = vunpack.c.h.b16 %v528
    %v2150 = vunpack.c.l.b16 %v529
    %v2151 = vunpack.c.h.b16 %v529
    %v2152 = vunpack.c.l.b16 %v530
    %v2153 = vunpack.c.h.b16 %v530
    %v2154 = vunpack.c.l.b16 %v531
    %v2155 = vunpack.c.h.b16 %v531
    %v2156 = vunpack.c.l.b16 %v532
    %v2157 = vunpack.c.h.b16 %v532
    %v2158 = vunpack.c.l.b16 %v533
    %v2159 = vunpack.c.h.b16 %v533
    %v2160 = vunpack.c.l.b16 %v534
    %v2161 = vunpack.c.h.b16 %v534
    %v2162 = vunpack.c.l.b16 %v535
    %v2163 = vunpack.c.h.b16 %v535
    %v2164 = vunpack.c.l.b16 %v536
    %v2165 = vunpack.c.h.b16 %v536
    %v2166 = vunpack.c.l.b16 %v537
    %v2167 = vunpack.c.h.b16 %v537
    %v2168 = vunpack.c.l.b16 %v538
    %v2169 = vunpack.c.h.b16 %v538
    %v2170 = vunpack.c.l.b16 %v539
    %v2171 = vunpack.c.h.b16 %v539
    %v2172 = vunpack.c.l.b16 %v540
    %v2173 = vunpack.c.h.b16 %v540
    %v2174 = vunpack.c.l.b16 %v541
    %v2175 = vunpack.c.h.b16 %v541
    %v2176 = vunpack.c.l.b16 %v542
    %v2177 = vunpack.c.h.b16 %v542
    %v2178 = vunpack.c.l.b16 %v543
    %v2179 = vunpack.c.h.b16 %v543
    %v2180 = vunpack.c.l.b16 %v544
    %v2181 = vunpack.c.h.b16 %v544
    %v2182 = vunpack.c.l.b16 %v545
    %v2183 = vunpack.c.h.b16 %v545
    %v2184 = vunpack.c.l.b16 %v546
    %v2185 = vunpack.c.h.b16 %v546
    %v2186 = vunpack.c.l.b16 %v547
    %v2187 = vunpack.c.h.b16 %v547
    %v2188 = vunpack.c.l.b16 %v548
    %v2189 = vunpack.c.h.b16 %v548
    %v2190 = vunpack.c.l.b16 %v549
    %v2191 = vunpack.c.h.b16 %v549
    %v2192 = vunpack.c.l.b16 %v550
    %v2193 = vunpack.c.h.b16 %v550
    %v2194 = vunpack.c.l.b16 %v551
    %v2195 = vunpack.c.h.b16 %v551
    %v2196 = vunpack.c.l.b16 %v552
    %v2197 = vunpack.c.h.b16 %v552
    %v2198 = vunpack.c.l.b16 %v553
    %v2199 = vunpack.c.h.b16 %v553
    %v2200 = vunpack.c.l.b16 %v554
    %v2201 = vunpack.c.h.b16 %v554
    %v2202 = vunpack.c.l.b16 %v555
    %v2203 = vunpack.c.h.b16 %v555
    %v2204 = vunpack.c.l.b16 %v556
    %v2205 = vunpack.c.h.b16 %v556
    %v2206 = vunpack.c.l.b16 %v557
    %v2207 = vunpack.c.h.b16 %v557
    %v2208 = vunpack.c.l.b16 %v558
    %v2209 = vunpack.c.h.b16 %v558
    %v2210 = vunpack.c.l.b16 %v559
    %v2211 = vunpack.c.h.b16 %v559
    %v2212 = vunpack.c.l.b16 %v560
    %v2213 = vunpack.c.h.b16 %v560
    %v2214 = vunpack.c.l.b16 %v561
    %v2215 = vunpack.c.h.b16 %v561
    %v2216 = vunpack.c.l.b16 %v562
    %v2217 = vunpack.c.h.b16 %v562
    %v2218 = vunpack.c.l.b16 %v563
    %v2219 = vunpack.c.h.b16 %v563
    %v2220 = vunpack.c.l.b16 %v564
    %v2221 = vunpack.c.h.b16 %v564
    %v2222 = vunpack.c.l.b16 %v565
    %v2223 = vunpack.c.h.b16 %v565
    %v2224 = vunpack.c.l.b16 %v566
    %v2225 = vunpack.c.h.b16 %v566
    %v2226 = vunpack.c.l.b16 %v567
    %v2227 = vunpack.c.h.b16 %v567
    %v2228 = vunpack.c.l.b16 %v568
    %v2229 = vunpack.c.h.b16 %v568
    %v2230 = vunpack.c.l.b16 %v569
    %v2231 = vunpack.c.h.b16 %v569
    %v2232 = vunpack.c.l.b16 %v570
    %v2233 = vunpack.c.h.b16 %v570
    %v2234 = vunpack.c.l.b16 %v571
    %v2235 = vunpack.c.h.b16 %v571
    %v2236 = vunpack.c.l.b16 %v572
    %v2237 = vunpack.c.h.b16 %v572
    %v2238 = vunpack.c.l.b16 %v573
    %v2239 = vunpack.c.h.b16 %v573
    %v2240 = vunpack.c.l.b16 %v574
    %v2241 = vunpack.c.h.b16 %v574
    %v2242 = vunpack.c.l.b16 %v575
    %v2243 = vunpack.c.h.b16 %v575
    %v2244 = vunpack.c.l.b16 %v576
    %v2245 = vunpack.c.h.b16 %v576
    %v2246 = vunpack.c.l.b16 %v577
    %v2247 = vunpack.c.h.b16 %v577
    %v2248 = vunpack.c.l.b16 %v578
    %v2249 = vunpack.c.h.b16 %v578
    %v2250 = vunpack.c.l.b16 %v579
    %v2251 = vunpack.c.h.b16 %v579
    %v2252 = vunpack.c.l.b16 %v580
    %v2253 = vunpack.c.h.b16 %v580
    %v2254 = vunpack.c.l.b16 %v581
    %v2255 = vunpack.c.h.b16 %v581
    %v2256 = vunpack.c.l.b16 %v582
    %v2257 = vunpack.c.h.b16 %v582
    %v2258 = vunpack.c.l.b16 %v583
    %v2259 = vunpack.c.h.b16 %v583
    %v2260 = vunpack.c.l.b16 %v584
    %v2261 = vunpack.c.h.b16 %v584
    %v2262 = vunpack.c.l.b16 %v585
    %v2263 = vunpack.c.h.b16 %v585
    %v2264 = vunpack.c.l.b16 %v586
    %v2265 = vunpack.c.h.b16 %v586
    %v2266 = vunpack.c.l.b16 %v587
    %v2267 = vunpack.c.h.b16 %v587
    %v2268 = vunpack.c.l.b16 %v588
    %v2269 = vunpack.c.h.b16 %v588
    %v2270 = vunpack.c.l.b16 %v589
    %v2271 = vunpack.c.h.b16 %v589
    %v2272 = vunpack.c.l.b16 %v590
    %v2273 = vunpack.c.h.b16 %v590
    %v2274 = vunpack.c.l.b16 %v591
    %v2275 = vunpack.c.h.b16 %v591
    %v2276 = vunpack.c.l.b16 %v592
    %v2277 = vunpack.c.h.b16 %v592
    %v2278 = vunpack.c.l.b16 %v593
    %v2279 = vunpack.c.h.b16 %v593
    %v2280 = vunpack.c.l.b16 %v594
    %v2281 = vunpack.c.h.b16 %v594
    %v2282 = vunpack.c.l.b16 %v595
    %v2283 = vunpack.c.h.b16 %v595
    %v2284 = vunpack.c.l.b16 %v596
    %v2285 = vunpack.c.h.b16 %v596
    %v2286 = vunpack.c.l.b16 %v597
    %v2287 = vunpack.c.h.b16 %v597
    %v2288 = vunpack.c.l.b16 %v598
    %v2289 = vunpack.c.h.b16 %v598
    %v2290 = vunpack.c.l.b16 %v599
    %v2291 = vunpack.c.h.b16 %v599
    %v2292 = vunpack.c.l.b16 %v600
    %v2293 = vunpack.c.h.b16 %v600
    %v2294 = vunpack.c.l.b16 %v601
    %v2295 = vunpack.c.h.b16 %v601
    %v2296 = vunpack.c.l.b16 %v602
    %v2297 = vunpack.c.h.b16 %v602
    %v2298 = vunpack.c.l.b16 %v603
    %v2299 = vunpack.c.h.b16 %v603
    %v2300 = vunpack.c.l.b16 %v604
    %v2301 = vunpack.c.h.b16 %v604
    %v2302 = vunpack.c.l.b16 %v605
    %v2303 = vunpack.c.h.b16 %v605
    %v2304 = vunpack.c.l.b16 %v606
    %v2305 = vunpack.c.h.b16 %v606
    %v2306 = vunpack.c.l.b16 %v607
    %v2307 = vunpack.c.h.b16 %v607
    %v2308 = vunpack.c.l.b16 %v608
    %v2309 = vunpack.c.h.b16 %v608
    %v2310 = vunpack.c.l.b16 %v609
    %v2311 = vunpack.c.h.b16 %v609
    %v2312 = vunpack.c.l.b16 %v610
    %v2313 = vunpack.c.h.b16 %v610
    %v2314 = vunpack.c.l.b16 %v611
    %v2315 = vunpack.c.h.b16 %v611
    %v2316 = vunpack.c.l.b16 %v612
    %v2317 = vunpack.c.h.b16 %v612
    %v2318 = vunpack.c.l.b16 %v613
    %v2319 = vunpack.c.h.b16 %v613
    %v2320 = vunpack.c.l.b16 %v614
    %v2321 = vunpack.c.h.b16 %v614
    %v2322 = vunpack.c.l.b16 %v615
    %v2323 = vunpack.c.h.b16 %v615
    %v2324 = vunpack.c.l.b16 %v616
    %v2325 = vunpack.c.h.b16 %v616
    %v2326 = vunpack.c.l.b16 %v617
    %v2327 = vunpack.c.h.b16 %v617
    %v2328 = vunpack.c.l.b16 %v618
    %v2329 = vunpack.c.h.b16 %v618
    %v2330 = vunpack.c.l.b16 %v619
    %v2331 = vunpack.c.h.b16 %v619
    %v2332 = vunpack.c.l.b16 %v620
    %v2333 = vunpack.c.h.b16 %v620
    %v2334 = vunpack.c.l.b16 %v621
    %v2335 = vunpack.c.h.b16 %v621
    %v2336 = vunpack.c.l.b16 %v622
    %v2337 = vunpack.c.h.b16 %v622
    %v2338 = vunpack.c.l.b16 %v623
    %v2339 = vunpack.c.h.b16 %v623
    %v2340 = vunpack.c.l.b16 %v624
    %v2341 = vunpack.c.h.b16 %v624
    %v2342 = vunpack.c.l.b16 %v625
    %v2343 = vunpack.c.h.b16 %v625
    %v2344 = vunpack.c.l.b16 %v626
    %v2345 = vunpack.c.h.b16 %v626
    %v2346 = vunpack.c.l.b16 %v627
    %v2347 = vunpack.c.h.b16 %v627
    %v2348 = vunpack.c.l.b16 %v628
    %v2349 = vunpack.c.h.b16 %v628
    %v2350 = vunpack.c.l.b16 %v629
    %v2351 = vunpack.c.h.b16 %v629
    %v2352 = vunpack.c.l.b16 %v630
    %v2353 = vunpack.c.h.b16 %v630
    %v2354 = vunpack.c.l.b16 %v631
    %v2355 = vunpack.c.h.b16 %v631
    %v2356 = vunpack.c.l.b16 %v632
    %v2357 = vunpack.c.h.b16 %v632
    %v2358 = vunpack.c.l.b16 %v633
    %v2359 = vunpack.c.h.b16 %v633
    %v2360 = vunpack.c.l.b16 %v634
    %v2361 = vunpack.c.h.b16 %v634
    %v2362 = vunpack.c.l.b16 %v635
    %v2363 = vunpack.c.h.b16 %v635
    %v2364 = vunpack.c.l.b16 %v636
    %v2365 = vunpack.c.h.b16 %v636
    %v2366 = vunpack.c.l.b16 %v637
    %v2367 = vunpack.c.h.b16 %v637
    %v2368 = vunpack.c.l.b16 %v638
    %v2369 = vunpack.c.h.b16 %v638
    %v2370 = vunpack.c.l.b16 %v639
    %v2371 = vunpack.c.h.b16 %v639
    %v2372 = vunpack.c.l.b16 %v640
    %v2373 = vunpack.c.h.b16 %v640
    %v2374 = vunpack.c.l.b16 %v641
    %v2375 = vunpack.c.h.b16 %v641
    %v2376 = vunpack.c.l.b16 %v642
    %v2377 = vunpack.c.h.b16 %v642
    %v2378 = vunpack.c.l.b16 %v643
    %v2379 = vunpack.c.h.b16 %v643
    %v2380 = vunpack.c.l.b16 %v644
    %v2381 = vunpack.c.h.b16 %v644
    %v2382 = vunpack.c.l.b16 %v645
    %v2383 = vunpack.c.h.b16 %v645
    %v2384 = vunpack.c.l.b16 %v646
    %v2385 = vunpack.c.h.b16 %v646
    %v2386 = vunpack.c.l.b16 %v647
    %v2387 = vunpack.c.h.b16 %v647
    %v2388 = vunpack.c.l.b16 %v648
    %v2389 = vunpack.c.h.b16 %v648
    %v2390 = vunpack.c.l.b16 %v649
    %v2391 = vunpack.c.h.b16 %v649
    %v2392 = vunpack.c.l.b16 %v650
    %v2393 = vunpack.c.h.b16 %v650
    %v2394 = vunpack.c.l.b16 %v651
    %v2395 = vunpack.c.h.b16 %v651
    %v2396 = vunpack.c.l.b16 %v652
    %v2397 = vunpack.c.h.b16 %v652
    %v2398 = vunpack.c.l.b16 %v653
    %v2399 = vunpack.c.h.b16 %v653
    %v2400 = vunpack.c.l.b16 %v654
    %v2401 = vunpack.c.h.b16 %v654
    %v2402 = vunpack.c.l.b16 %v655
    %v2403 = vunpack.c.h.b16 %v655
    %v2404 = vunpack.c.l.b16 %v656
    %v2405 = vunpack.c.h.b16 %v656
    %v2406 = vunpack.c.l.b16 %v657
    %v2407 = vunpack.c.h.b16 %v657
    %v2408 = vunpack.c.l.b16 %v658
    %v2409 = vunpack.c.h.b16 %v658
    %v2410 = vunpack.c.l.b16 %v659
    %v2411 = vunpack.c.h.b16 %v659
    %v2412 = vunpack.c.l.b16 %v660
    %v2413 = vunpack.c.h.b16 %v660
    %v2414 = vunpack.c.l.b16 %v661
    %v2415 = vunpack.c.h.b16 %v661
    %v2416 = vunpack.c.l.b16 %v662
    %v2417 = vunpack.c.h.b16 %v662
    %v2418 = vunpack.c.l.b16 %v663
    %v2419 = vunpack.c.h.b16 %v663
    %v2420 = vunpack.c.l.b16 %v664
    %v2421 = vunpack.c.h.b16 %v664
    %v2422 = vunpack.c.l.b16 %v665
    %v2423 = vunpack.c.h.b16 %v665
    %v2424 = vunpack.c.l.b16 %v666
    %v2425 = vunpack.c.h.b16 %v666
    %v2426 = vunpack.c.l.b16 %v667
    %v2427 = vunpack.c.h.b16 %v667
    %v2428 = vunpack.c.l.b16 %v668
    %v2429 = vunpack.c.h.b16 %v668
    %v2430 = vunpack.c.l.b16 %v669
    %v2431 = vunpack.c.h.b16 %v669
    %v2432 = vunpack.c.l.b16 %v670
    %v2433 = vunpack.c.h.b16 %v670
    %v2434 = vunpack.c.l.b16 %v671
    %v2435 = vunpack.c.h.b16 %v671
    %v2436 = vunpack.c.l.b16 %v672
    %v2437 = vunpack.c.h.b16 %v672
    %v2438 = vunpack.c.l.b16 %v673
    %v2439 = vunpack.c.h.b16 %v673
    %v2440 = vunpack.c.l.b16 %v674
    %v2441 = vunpack.c.h.b16 %v674
    %v2442 = vunpack.c.l.b16 %v675
    %v2443 = vunpack.c.h.b16 %v675
    %v2444 = vunpack.c.l.b16 %v676
    %v2445 = vunpack.c.h.b16 %v676
    %v2446 = vunpack.c.l.b16 %v677
    %v2447 = vunpack.c.h.b16 %v677
    %v2448 = vunpack.c.l.b16 %v678
    %v2449 = vunpack.c.h.b16 %v678
    %v2450 = vunpack.c.l.b16 %v679
    %v2451 = vunpack.c.h.b16 %v679
    %v2452 = vunpack.c.l.b16 %v680
    %v2453 = vunpack.c.h.b16 %v680
    %v2454 = vunpack.c.l.b16 %v681
    %v2455 = vunpack.c.h.b16 %v681
    %v2456 = vunpack.c.l.b16 %v682
    %v2457 = vunpack.c.h.b16 %v682
    %v2458 = vunpack.c.l.b16 %v683
    %v2459 = vunpack.c.h.b16 %v683
    %v2460 = vunpack.c.l.b16 %v684
    %v2461 = vunpack.c.h.b16 %v684
    %v2462 = vunpack.c.l.b16 %v685
    %v2463 = vunpack.c.h.b16 %v685
    %v2464 = vunpack.c.l.b16 %v686
    %v2465 = vunpack.c.h.b16 %v686
    %v2466 = vunpack.c.l.b16 %v687
    %v2467 = vunpack.c.h.b16 %v687
    %v2468 = vunpack.c.l.b16 %v688
    %v2469 = vunpack.c.h.b16 %v688
    %v2470 = vunpack.c.l.b16 %v689
    %v2471 = vunpack.c.h.b16 %v689
    %v2472 = vunpack.c.l.b16 %v690
    %v2473 = vunpack.c.h.b16 %v690
    %v2474 = vunpack.c.l.b16 %v691
    %v2475 = vunpack.c.h.b16 %v691
    %v2476 = vunpack.c.l.b16 %v692
    %v2477 = vunpack.c.h.b16 %v692
    %v2478 = vunpack.c.l.b16 %v693
    %v2479 = vunpack.c.h.b16 %v693
    %v2480 = vunpack.c.l.b16 %v694
    %v2481 = vunpack.c.h.b16 %v694
    %v2482 = vunpack.c.l.b16 %v695
    %v2483 = vunpack.c.h.b16 %v695
    %v2484 = vunpack.c.l.b16 %v696
    %v2485 = vunpack.c.h.b16 %v696
    %v2486 = vunpack.c.l.b16 %v697
    %v2487 = vunpack.c.h.b16 %v697
    %v2488 = vunpack.c.l.b16 %v698
    %v2489 = vunpack.c.h.b16 %v698
    %v2490 = vunpack.c.l.b16 %v699
    %v2491 = vunpack.c.h.b16 %v699
    %v2492 = vunpack.c.l.b16 %v700
    %v2493 = vunpack.c.h.b16 %v700
    %v2494 = vunpack.c.l.b16 %v701
    %v2495 = vunpack.c.h.b16 %v701
    %v2496 = vunpack.c.l.b16 %v702
    %v2497 = vunpack.c.h.b16 %v702
    %v2498 = vunpack.c.l.b16 %v703
    %v2499 = vunpack.c.h.b16 %v703
    %v2500 = vunpack.c.l.b16 %v704
    %v2501 = vunpack.c.h.b16 %v704
    %v2502 = vunpack.c.l.b16 %v705
    %v2503 = vunpack.c.h.b16 %v705
    %v2504 = vunpack.c.l.b16 %v706
    %v2505 = vunpack.c.h.b16 %v706
    %v2506 = vunpack.c.l.b16 %v707
    %v2507 = vunpack.c.h.b16 %v707
    %v2508 = vunpack.c.l.b16 %v708
    %v2509 = vunpack.c.h.b16 %v708
    %v2510 = vunpack.c.l.b16 %v709
    %v2511 = vunpack.c.h.b16 %v709
    %v2512 = vunpack.c.l.b16 %v710
    %v2513 = vunpack.c.h.b16 %v710
    %v2514 = vunpack.c.l.b16 %v711
    %v2515 = vunpack.c.h.b16 %v711
    %v2516 = vunpack.c.l.b16 %v712
    %v2517 = vunpack.c.h.b16 %v712
    %v2518 = vunpack.c.l.b16 %v713
    %v2519 = vunpack.c.h.b16 %v713
    %v2520 = vunpack.c.l.b16 %v714
    %v2521 = vunpack.c.h.b16 %v714
    %v2522 = vunpack.c.l.b16 %v715
    %v2523 = vunpack.c.h.b16 %v715
    %v2524 = vunpack.c.l.b16 %v716
    %v2525 = vunpack.c.h.b16 %v716
    %v2526 = vunpack.c.l.b16 %v717
    %v2527 = vunpack.c.h.b16 %v717
    %v2528 = vunpack.c.l.b16 %v718
    %v2529 = vunpack.c.h.b16 %v718
    %v2530 = vunpack.c.l.b16 %v719
    %v2531 = vunpack.c.h.b16 %v719
    %v2532 = vunpack.c.l.b16 %v720
    %v2533 = vunpack.c.h.b16 %v720
    %v2534 = vunpack.c.l.b16 %v721
    %v2535 = vunpack.c.h.b16 %v721
    %v2536 = vunpack.c.l.b16 %v722
    %v2537 = vunpack.c.h.b16 %v722
    %v2538 = vunpack.c.l.b16 %v723
    %v2539 = vunpack.c.h.b16 %v723
    %v2540 = vunpack.c.l.b16 %v724
    %v2541 = vunpack.c.h.b16 %v724
    %v2542 = vunpack.c.l.b16 %v725
    %v2543 = vunpack.c.h.b16 %v725
    %v2544 = vunpack.c.l.b16 %v726
    %v2545 = vunpack.c.h.b16 %v726
    %v2546 = vunpack.c.l.b16 %v727
    %v2547 = vunpack.c.h.b16 %v727
    %v2548 = vunpack.c.l.b16 %v728
    %v2549 = vunpack.c.h.b16 %v728
    %v2550 = vunpack.c.l.b16 %v729
    %v2551 = vunpack.c.h.b16 %v729
    %v2552 = vunpack.c.l.b16 %v730
    %v2553 = vunpack.c.h.b16 %v730
    %v2554 = vunpack.c.l.b16 %v731
    %v2555 = vunpack.c.h.b16 %v731
    %v2556 = vunpack.c.l.b16 %v732
    %v2557 = vunpack.c.h.b16 %v732
    %v2558 = vunpack.c.l.b16 %v733
    %v2559 = vunpack.c.h.b16 %v733
    %v2560 = vunpack.c.l.b16 %v734
    %v2561 = vunpack.c.h.b16 %v734
    %v2562 = vunpack.c.l.b16 %v735
    %v2563 = vunpack.c.h.b16 %v735
    %v2564 = vpack.c.b16 %v1400, %v1388
    %v2565 = vpack.c.b16 %v1401, %v1389
    %v2566 = vpack.c.b16 %v1402, %v1390
    %v2567 = vpack.c.b16 %v1403, %v1391
    %v2568 = vpack.c.b16 %v1404, %v1392
    %v2569 = vpack.c.b16 %v1405, %v1393
    %v2570 = vpack.c.b16 %v1406, %v1394
    %v2571 = vpack.c.b16 %v1407, %v1395
    %v2572 = vpack.c.b16 %v1408, %v1396
    %v2573 = vpack.c.b16 %v1409, %v1397
    %v2574 = vpack.c.b16 %v1410, %v1398
    %v2575 = vpack.c.b16 %v1411, %v1399
    %v2576 = vpack.c.b16 %v1424, %v1412
    %v2577 = vpack.c.b16 %v1425, %v1413
    %v2578 = vpack.c.b16 %v1426, %v1414
    %v2579 = vpack.c.b16 %v1427, %v1415
    %v2580 = vpack.c.b16 %v1428, %v1416
    %v2581 = vpack.c.b16 %v1429, %v1417
    %v2582 = vpack.c.b16 %v1430, %v1418
    %v2583 = vpack.c.b16 %v1431, %v1419
    %v2584 = vpack.c.b16 %v1432, %v1420
    %v2585 = vpack.c.b16 %v1433, %v1421
    %v2586 = vpack.c.b16 %v1434, %v1422
    %v2587 = vpack.c.b16 %v1435, %v1423
    %v2588 = vpack.c.b16 %v1448, %v1436
    %v2589 = vpack.c.b16 %v1449, %v1437
    %v2590 = vpack.c.b16 %v1450, %v1438
    %v2591 = vpack.c.b16 %v1451, %v1439
    %v2592 = vpack.c.b16 %v1452, %v1440
    %v2593 = vpack.c.b16 %v1453, %v1441
    %v2594 = vpack.c.b16 %v1454, %v1442
    %v2595 = vpack.c.b16 %v1455, %v1443
    %v2596 = vpack.c.b16 %v1456, %v1444
    %v2597 = vpack.c.b16 %v1457, %v1445
    %v2598 = vpack.c.b16 %v1458, %v1446
    %v2599 = vpack.c.b16 %v1459, %v1447
    %v2600 = vpack.c.b16 %v1472, %v1460
    %v2601 = vpack.c.b16 %v1473, %v1461
    %v2602 = vpack.c.b16 %v1474, %v1462
    %v2603 = vpack.c.b16 %v1475, %v1463
    %v2604 = vpack.c.b16 %v1476, %v1464
    %v2605 = vpack.c.b16 %v1477, %v1465
    %v2606 = vpack.c.b16 %v1478, %v1466
    %v2607 = vpack.c.b16 %v1479, %v1467
    %v2608 = vpack.c.b16 %v1480, %v1468
    %v2609 = vpack.c.b16 %v1481, %v1469
    %v2610 = vpack.c.b16 %v1482, %v1470
    %v2611 = vpack.c.b16 %v1483, %v1471
    %v2612 = vpack.c.b16 %v1496, %v1484
    %v2613 = vpack.c.b16 %v1497, %v1485
    %v2614 = vpack.c.b16 %v1498, %v1486
    %v2615 = vpack.c.b16 %v1499, %v1487
    %v2616 = vpack.c.b16 %v1500, %v1488
    %v2617 = vpack.c.b16 %v1501, %v1489
    %v2618 = vpack.c.b16 %v1502, %v1490
    %v2619 = vpack.c.b16 %v1503, %v1491
    %v2620 = vpack.c.b16 %v1504, %v1492
    %v2621 = vpack.c.b16 %v1505, %v1493
    %v2622 = vpack.c.b16 %v1506, %v1494
    %v2623 = vpack.c.b16 %v1507, %v1495
    %v2624 = vpack.c.b16 %v1520, %v1508
    %v2625 = vpack.c.b16 %v1521, %v1509
    %v2626 = vpack.c.b16 %v1522, %v1510
    %v2627 = vpack.c.b16 %v1523, %v1511
    %v2628 = vpack.c.b16 %v1524, %v1512
    %v2629 = vpack.c.b16 %v1525, %v1513
    %v2630 = vpack.c.b16 %v1526, %v1514
    %v2631 = vpack.c.b16 %v1527, %v1515
    %v2632 = vpack.c.b16 %v1528, %v1516
    %v2633 = vpack.c.b16 %v1529, %v1517
    %v2634 = vpack.c.b16 %v1530, %v1518
    %v2635 = vpack.c.b16 %v1531, %v1519
    %v2636 = vpack.c.b16 %v1544, %v1532
    %v2637 = vpack.c.b16 %v1545, %v1533
    %v2638 = vpack.c.b16 %v1546, %v1534
    %v2639 = vpack.c.b16 %v1547, %v1535
    %v2640 = vpack.c.b16 %v1548, %v1536
    %v2641 = vpack.c.b16 %v1549, %v1537
    %v2642 = vpack.c.b16 %v1550, %v1538
    %v2643 = vpack.c.b16 %v1551, %v1539
    %v2644 = vpack.c.b16 %v1552, %v1540
    %v2645 = vpack.c.b16 %v1553, %v1541
    %v2646 = vpack.c.b16 %v1554, %v1542
    %v2647 = vpack.c.b16 %v1555, %v1543
    %v2648 = vpack.c.b16 %v1568, %v1556
    %v2649 = vpack.c.b16 %v1569, %v1557
    %v2650 = vpack.c.b16 %v1570, %v1558
    %v2651 = vpack.c.b16 %v1571, %v1559
    %v2652 = vpack.c.b16 %v1572, %v1560
    %v2653 = vpack.c.b16 %v1573, %v1561
    %v2654 = vpack.c.b16 %v1574, %v1562
    %v2655 = vpack.c.b16 %v1575, %v1563
    %v2656 = vpack.c.b16 %v1576, %v1564
    %v2657 = vpack.c.b16 %v1577, %v1565
    %v2658 = vpack.c.b16 %v1578, %v1566
    %v2659 = vpack.c.b16 %v1579, %v1567
    %v2660 = vpack.c.b16 %v1592, %v1580
    %v2661 = vpack.c.b16 %v1593, %v1581
    %v2662 = vpack.c.b16 %v1594, %v1582
    %v2663 = vpack.c.b16 %v1595, %v1583
    %v2664 = vpack.c.b16 %v1596, %v1584
    %v2665 = vpack.c.b16 %v1597, %v1585
    %v2666 = vpack.c.b16 %v1598, %v1586
    %v2667 = vpack.c.b16 %v1599, %v1587
    %v2668 = vpack.c.b16 %v1600, %v1588
    %v2669 = vpack.c.b16 %v1601, %v1589
    %v2670 = vpack.c.b16 %v1602, %v1590
    %v2671 = vpack.c.b16 %v1603, %v1591
    %v2672 = vpack.c.b16 %v1616, %v1604
    %v2673 = vpack.c.b16 %v1617, %v1605
    %v2674 = vpack.c.b16 %v1618, %v1606
    %v2675 = vpack.c.b16 %v1619, %v1607
    %v2676 = vpack.c.b16 %v1620, %v1608
    %v2677 = vpack.c.b16 %v1621, %v1609
    %v2678 = vpack.c.b16 %v1622, %v1610
    %v2679 = vpack.c.b16 %v1623, %v1611
    %v2680 = vpack.c.b16 %v1624, %v1612
    %v2681 = vpack.c.b16 %v1625, %v1613
    %v2682 = vpack.c.b16 %v1626, %v1614
    %v2683 = vpack.c.b16 %v1627, %v1615
    %v2684 = vpack.c.b16 %v1640, %v1628
    %v2685 = vpack.c.b16 %v1641, %v1629
    %v2686 = vpack.c.b16 %v1642, %v1630
    %v2687 = vpack.c.b16 %v1643, %v1631
    %v2688 = vpack.c.b16 %v1644, %v1632
    %v2689 = vpack.c.b16 %v1645, %v1633
    %v2690 = vpack.c.b16 %v1646, %v1634
    %v2691 = vpack.c.b16 %v1647, %v1635
    %v2692 = vpack.c.b16 %v1648, %v1636
    %v2693 = vpack.c.b16 %v1649, %v1637
    %v2694 = vpack.c.b16 %v1650, %v1638
    %v2695 = vpack.c.b16 %v1651, %v1639
    %v2696 = vpack.c.b16 %v1664, %v1652
    %v2697 = vpack.c.b16 %v1665, %v1653
    %v2698 = vpack.c.b16 %v1666, %v1654
    %v2699 = vpack.c.b16 %v1667, %v1655
    %v2700 = vpack.c.b16 %v1668, %v1656
    %v2701 = vpack.c.b16 %v1669, %v1657
    %v2702 = vpack.c.b16 %v1670, %v1658
    %v2703 = vpack.c.b16 %v1671, %v1659
    %v2704 = vpack.c.b16 %v1672, %v1660
    %v2705 = vpack.c.b16 %v1673, %v1661
    %v2706 = vpack.c.b16 %v1674, %v1662
    %v2707 = vpack.c.b16 %v1675, %v1663
    %v2708 = vpack.c.b16 %v1688, %v1676
    %v2709 = vpack.c.b16 %v1689, %v1677
    %v2710 = vpack.c.b16 %v1690, %v1678
    %v2711 = vpack.c.b16 %v1691, %v1679
    %v2712 = vpack.c.b16 %v1692, %v1680
    %v2713 = vpack.c.b16 %v1693, %v1681
    %v2714 = vpack.c.b16 %v1694, %v1682
    %v2715 = vpack.c.b16 %v1695, %v1683
    %v2716 = vpack.c.b16 %v1696, %v1684
    %v2717 = vpack.c.b16 %v1697, %v1685
    %v2718 = vpack.c.b16 %v1698, %v1686
    %v2719 = vpack.c.b16 %v1699, %v1687
    %v2720 = vpack.c.b16 %v1712, %v1700
    %v2721 = vpack.c.b16 %v1713, %v1701
    %v2722 = vpack.c.b16 %v1714, %v1702
    %v2723 = vpack.c.b16 %v1715, %v1703
    %v2724 = vpack.c.b16 %v1716, %v1704
    %v2725 = vpack.c.b16 %v1717, %v1705
    %v2726 = vpack.c.b16 %v1718, %v1706
    %v2727 = vpack.c.b16 %v1719, %v1707
    %v2728 = vpack.c.b16 %v1720, %v1708
    %v2729 = vpack.c.b16 %v1721, %v1709
    %v2730 = vpack.c.b16 %v1722, %v1710
    %v2731 = vpack.c.b16 %v1723, %v1711
    %v2732 = vpack.c.b16 %v1736, %v1724
    %v2733 = vpack.c.b16 %v1737, %v1725
    %v2734 = vpack.c.b16 %v1738, %v1726
    %v2735 = vpack.c.b16 %v1739, %v1727
    %v2736 = vpack.c.b16 %v1740, %v1728
    %v2737 = vpack.c.b16 %v1741, %v1729
    %v2738 = vpack.c.b16 %v1742, %v1730
    %v2739 = vpack.c.b16 %v1743, %v1731
    %v2740 = vpack.c.b16 %v1744, %v1732
    %v2741 = vpack.c.b16 %v1745, %v1733
    %v2742 = vpack.c.b16 %v1746, %v1734
    %v2743 = vpack.c.b16 %v1747, %v1735
    %v2744 = vpack.c.b16 %v1760, %v1748
    %v2745 = vpack.c.b16 %v1761, %v1749
    %v2746 = vpack.c.b16 %v1762, %v1750
    %v2747 = vpack.c.b16 %v1763, %v1751
    %v2748 = vpack.c.b16 %v1764, %v1752
    %v2749 = vpack.c.b16 %v1765, %v1753
    %v2750 = vpack.c.b16 %v1766, %v1754
    %v2751 = vpack.c.b16 %v1767, %v1755
    %v2752 = vpack.c.b16 %v1768, %v1756
    %v2753 = vpack.c.b16 %v1769, %v1757
    %v2754 = vpack.c.b16 %v1770, %v1758
    %v2755 = vpack.c.b16 %v1771, %v1759
    %v2756 = vpack.c.b16 %v1784, %v1772
    %v2757 = vpack.c.b16 %v1785, %v1773
    %v2758 = vpack.c.b16 %v1786, %v1774
    %v2759 = vpack.c.b16 %v1787, %v1775
    %v2760 = vpack.c.b16 %v1788, %v1776
    %v2761 = vpack.c.b16 %v1789, %v1777
    %v2762 = vpack.c.b16 %v1790, %v1778
    %v2763 = vpack.c.b16 %v1791, %v1779
    %v2764 = vpack.c.b16 %v1792, %v1780
    %v2765 = vpack.c.b16 %v1793, %v1781
    %v2766 = vpack.c.b16 %v1794, %v1782
    %v2767 = vpack.c.b16 %v1795, %v1783
    %v2768 = vpack.c.b16 %v1808, %v1796
    %v2769 = vpack.c.b16 %v1809, %v1797
    %v2770 = vpack.c.b16 %v1810, %v1798
    %v2771 = vpack.c.b16 %v1811, %v1799
    %v2772 = vpack.c.b16 %v1812, %v1800
    %v2773 = vpack.c.b16 %v1813, %v1801
    %v2774 = vpack.c.b16 %v1814, %v1802
    %v2775 = vpack.c.b16 %v1815, %v1803
    %v2776 = vpack.c.b16 %v1816, %v1804
    %v2777 = vpack.c.b16 %v1817, %v1805
    %v2778 = vpack.c.b16 %v1818, %v1806
    %v2779 = vpack.c.b16 %v1819, %v1807
    %v2780 = vpack.c.b16 %v1832, %v1820
    %v2781 = vpack.c.b16 %v1833, %v1821
    %v2782 = vpack.c.b16 %v1834, %v1822
    %v2783 = vpack.c.b16 %v1835, %v1823
    %v2784 = vpack.c.b16 %v1836, %v1824
    %v2785 = vpack.c.b16 %v1837, %v1825
    %v2786 = vpack.c.b16 %v1838, %v1826
    %v2787 = vpack.c.b16 %v1839, %v1827
    %v2788 = vpack.c.b16 %v1840, %v1828
    %v2789 = vpack.c.b16 %v1841, %v1829
    %v2790 = vpack.c.b16 %v1842, %v1830
    %v2791 = vpack.c.b16 %v1843, %v1831
    %v2792 = vpack.c.b16 %v1856, %v1844
    %v2793 = vpack.c.b16 %v1857, %v1845
    %v2794 = vpack.c.b16 %v1858, %v1846
    %v2795 = vpack.c.b16 %v1859, %v1847
    %v2796 = vpack.c.b16 %v1860, %v1848
    %v2797 = vpack.c.b16 %v1861, %v1849
    %v2798 = vpack.c.b16 %v1862, %v1850
    %v2799 = vpack.c.b16 %v1863, %v1851
    %v2800 = vpack.c.b16 %v1864, %v1852
    %v2801 = vpack.c.b16 %v1865, %v1853
    %v2802 = vpack.c.b16 %v1866, %v1854
    %v2803 = vpack.c.b16 %v1867, %v1855
    %v2804 = vpack.c.b16 %v1880, %v1868
    %v2805 = vpack.c.b16 %v1881, %v1869
    %v2806 = vpack.c.b16 %v1882, %v1870
    %v2807 = vpack.c.b16 %v1883, %v1871
    %v2808 = vpack.c.b16 %v1884, %v1872
    %v2809 = vpack.c.b16 %v1885, %v1873
    %v2810 = vpack.c.b16 %v1886, %v1874
    %v2811 = vpack.c.b16 %v1887, %v1875
    %v2812 = vpack.c.b16 %v1888, %v1876
    %v2813 = vpack.c.b16 %v1889, %v1877
    %v2814 = vpack.c.b16 %v1890, %v1878
    %v2815 = vpack.c.b16 %v1891, %v1879
    %v2816 = vpack.c.b16 %v1904, %v1892
    %v2817 = vpack.c.b16 %v1905, %v1893
    %v2818 = vpack.c.b16 %v1906, %v1894
    %v2819 = vpack.c.b16 %v1907, %v1895
    %v2820 = vpack.c.b16 %v1908, %v1896
    %v2821 = vpack.c.b16 %v1909, %v1897
    %v2822 = vpack.c.b16 %v1910, %v1898
    %v2823 = vpack.c.b16 %v1911, %v1899
    %v2824 = vpack.c.b16 %v1912, %v1900
    %v2825 = vpack.c.b16 %v1913, %v1901
    %v2826 = vpack.c.b16 %v1914, %v1902
    %v2827 = vpack.c.b16 %v1915, %v1903
    %v2828 = vpack.c.b16 %v1928, %v1916
    %v2829 = vpack.c.b16 %v1929, %v1917
    %v2830 = vpack.c.b16 %v1930, %v1918
    %v2831 = vpack.c.b16 %v1931, %v1919
    %v2832 = vpack.c.b16 %v1932, %v1920
    %v2833 = vpack.c.b16 %v1933, %v1921
    %v2834 = vpack.c.b16 %v1934, %v1922
    %v2835 = vpack.c.b16 %v1935, %v1923
    %v2836 = vpack.c.b16 %v1936, %v1924
    %v2837 = vpack.c.b16 %v1937, %v1925
    %v2838 = vpack.c.b16 %v1938, %v1926
    %v2839 = vpack.c.b16 %v1939, %v1927
    %v2840 = vpack.c.b16 %v1952, %v1940
    %v2841 = vpack.c.b16 %v1953, %v1941
    %v2842 = vpack.c.b16 %v1954, %v1942
    %v2843 = vpack.c.b16 %v1955, %v1943
    %v2844 = vpack.c.b16 %v1956, %v1944
    %v2845 = vpack.c.b16 %v1957, %v1945
    %v2846 = vpack.c.b16 %v1958, %v1946
    %v2847 = vpack.c.b16 %v1959, %v1947
    %v2848 = vpack.c.b16 %v1960, %v1948
    %v2849 = vpack.c.b16 %v1961, %v1949
    %v2850 = vpack.c.b16 %v1962, %v1950
    %v2851 = vpack.c.b16 %v1963, %v1951
    %v2852 = vpack.c.b16 %v1976, %v1964
    %v2853 = vpack.c.b16 %v1977, %v1965
    %v2854 = vpack.c.b16 %v1978, %v1966
    %v2855 = vpack.c.b16 %v1979, %v1967
    %v2856 = vpack.c.b16 %v1980, %v1968
    %v2857 = vpack.c.b16 %v1981, %v1969
    %v2858 = vpack.c.b16 %v1982, %v1970
    %v2859 = vpack.c.b16 %v1983, %v1971
    %v2860 = vpack.c.b16 %v1984, %v1972
    %v2861 = vpack.c.b16 %v1985, %v1973
    %v2862 = vpack.c.b16 %v1986, %v1974
    %v2863 = vpack.c.b16 %v1987, %v1975
    %v2864 = vpack.c.b16 %v2000, %v1988
    %v2865 = vpack.c.b16 %v2001, %v1989
    %v2866 = vpack.c.b16 %v2002, %v1990
    %v2867 = vpack.c.b16 %v2003, %v1991
    %v2868 = vpack.c.b16 %v2004, %v1992
    %v2869 = vpack.c.b16 %v2005, %v1993
    %v2870 = vpack.c.b16 %v2006, %v1994
    %v2871 = vpack.c.b16 %v2007, %v1995
    %v2872 = vpack.c.b16 %v2008, %v1996
    %v2873 = vpack.c.b16 %v2009, %v1997
    %v2874 = vpack.c.b16 %v2010, %v1998
    %v2875 = vpack.c.b16 %v2011, %v1999
    %v2876 = vpack.c.b16 %v2024, %v2012
    %v2877 = vpack.c.b16 %v2025, %v2013
    %v2878 = vpack.c.b16 %v2026, %v2014
    %v2879 = vpack.c.b16 %v2027, %v2015
    %v2880 = vpack.c.b16 %v2028, %v2016
    %v2881 = vpack.c.b16 %v2029, %v2017
    %v2882 = vpack.c.b16 %v2030, %v2018
    %v2883 = vpack.c.b16 %v2031, %v2019
    %v2884 = vpack.c.b16 %v2032, %v2020
    %v2885 = vpack.c.b16 %v2033, %v2021
    %v2886 = vpack.c.b16 %v2034, %v2022
    %v2887 = vpack.c.b16 %v2035, %v2023
    %v2888 = vpack.c.b16 %v2048, %v2036
    %v2889 = vpack.c.b16 %v2049, %v2037
    %v2890 = vpack.c.b16 %v2050, %v2038
    %v2891 = vpack.c.b16 %v2051, %v2039
    %v2892 = vpack.c.b16 %v2052, %v2040
    %v2893 = vpack.c.b16 %v2053, %v2041
    %v2894 = vpack.c.b16 %v2054, %v2042
    %v2895 = vpack.c.b16 %v2055, %v2043
    %v2896 = vpack.c.b16 %v2056, %v2044
    %v2897 = vpack.c.b16 %v2057, %v2045
    %v2898 = vpack.c.b16 %v2058, %v2046
    %v2899 = vpack.c.b16 %v2059, %v2047
    %v2900 = vpack.c.b16 %v2072, %v2060
    %v2901 = vpack.c.b16 %v2073, %v2061
    %v2902 = vpack.c.b16 %v2074, %v2062
    %v2903 = vpack.c.b16 %v2075, %v2063
    %v2904 = vpack.c.b16 %v2076, %v2064
    %v2905 = vpack.c.b16 %v2077, %v2065
    %v2906 = vpack.c.b16 %v2078, %v2066
    %v2907 = vpack.c.b16 %v2079, %v2067
    %v2908 = vpack.c.b16 %v2080, %v2068
    %v2909 = vpack.c.b16 %v2081, %v2069
    %v2910 = vpack.c.b16 %v2082, %v2070
    %v2911 = vpack.c.b16 %v2083, %v2071
    %v2912 = vpack.c.b16 %v2096, %v2084
    %v2913 = vpack.c.b16 %v2097, %v2085
    %v2914 = vpack.c.b16 %v2098, %v2086
    %v2915 = vpack.c.b16 %v2099, %v2087
    %v2916 = vpack.c.b16 %v2100, %v2088
    %v2917 = vpack.c.b16 %v2101, %v2089
    %v2918 = vpack.c.b16 %v2102, %v2090
    %v2919 = vpack.c.b16 %v2103, %v2091
    %v2920 = vpack.c.b16 %v2104, %v2092
    %v2921 = vpack.c.b16 %v2105, %v2093
    %v2922 = vpack.c.b16 %v2106, %v2094
    %v2923 = vpack.c.b16 %v2107, %v2095
    %v2924 = vpack.c.b16 %v2120, %v2108
    %v2925 = vpack.c.b16 %v2121, %v2109
    %v2926 = vpack.c.b16 %v2122, %v2110
    %v2927 = vpack.c.b16 %v2123, %v2111
    %v2928 = vpack.c.b16 %v2124, %v2112
    %v2929 = vpack.c.b16 %v2125, %v2113
    %v2930 = vpack.c.b16 %v2126, %v2114
    %v2931 = vpack.c.b16 %v2127, %v2115
    %v2932 = vpack.c.b16 %v2128, %v2116
    %v2933 = vpack.c.b16 %v2129, %v2117
    %v2934 = vpack.c.b16 %v2130, %v2118
    %v2935 = vpack.c.b16 %v2131, %v2119
    %v2936 = vpack.c.b16 %v2144, %v2132
    %v2937 = vpack.c.b16 %v2145, %v2133
    %v2938 = vpack.c.b16 %v2146, %v2134
    %v2939 = vpack.c.b16 %v2147, %v2135
    %v2940 = vpack.c.b16 %v2148, %v2136
    %v2941 = vpack.c.b16 %v2149, %v2137
    %v2942 = vpack.c.b16 %v2150, %v2138
    %v2943 = vpack.c.b16 %v2151, %v2139
    %v2944 = vpack.c.b16 %v2152, %v2140
    %v2945 = vpack.c.b16 %v2153, %v2141
    %v2946 = vpack.c.b16 %v2154, %v2142
    %v2947 = vpack.c.b16 %v2155, %v2143
    %v2948 = vpack.c.b16 %v2168, %v2156
    %v2949 = vpack.c.b16 %v2169, %v2157
    %v2950 = vpack.c.b16 %v2170, %v2158
    %v2951 = vpack.c.b16 %v2171, %v2159
    %v2952 = vpack.c.b16 %v2172, %v2160
    %v2953 = vpack.c.b16 %v2173, %v2161
    %v2954 = vpack.c.b16 %v2174, %v2162
    %v2955 = vpack.c.b16 %v2175, %v2163
    %v2956 = vpack.c.b16 %v2176, %v2164
    %v2957 = vpack.c.b16 %v2177, %v2165
    %v2958 = vpack.c.b16 %v2178, %v2166
    %v2959 = vpack.c.b16 %v2179, %v2167
    %v2960 = vpack.c.b16 %v2192, %v2180
    %v2961 = vpack.c.b16 %v2193, %v2181
    %v2962 = vpack.c.b16 %v2194, %v2182
    %v2963 = vpack.c.b16 %v2195, %v2183
    %v2964 = vpack.c.b16 %v2196, %v2184
    %v2965 = vpack.c.b16 %v2197, %v2185
    %v2966 = vpack.c.b16 %v2198, %v2186
    %v2967 = vpack.c.b16 %v2199, %v2187
    %v2968 = vpack.c.b16 %v2200, %v2188
    %v2969 = vpack.c.b16 %v2201, %v2189
    %v2970 = vpack.c.b16 %v2202, %v2190
    %v2971 = vpack.c.b16 %v2203, %v2191
    %v2972 = vpack.c.b16 %v2216, %v2204
    %v2973 = vpack.c.b16 %v2217, %v2205
    %v2974 = vpack.c.b16 %v2218, %v2206
    %v2975 = vpack.c.b16 %v2219, %v2207
    %v2976 = vpack.c.b16 %v2220, %v2208
    %v2977 = vpack.c.b16 %v2221, %v2209
    %v2978 = vpack.c.b16 %v2222, %v2210
    %v2979 = vpack.c.b16 %v2223, %v2211
    %v2980 = vpack.c.b16 %v2224, %v2212
    %v2981 = vpack.c.b16 %v2225, %v2213
    %v2982 = vpack.c.b16 %v2226, %v2214
    %v2983 = vpack.c.b16 %v2227, %v2215
    %v2984 = vpack.c.b16 %v2240, %v2228
    %v2985 = vpack.c.b16 %v2241, %v2229
    %v2986 = vpack.c.b16 %v2242, %v2230
    %v2987 = vpack.c.b16 %v2243, %v2231
    %v2988 = vpack.c.b16 %v2244, %v2232
    %v2989 = vpack.c.b16 %v2245, %v2233
    %v2990 = vpack.c.b16 %v2246, %v2234
    %v2991 = vpack.c.b16 %v2247, %v2235
    %v2992 = vpack.c.b16 %v2248, %v2236
    %v2993 = vpack.c.b16 %v2249, %v2237
    %v2994 = vpack.c.b16 %v2250, %v2238
    %v2995 = vpack.c.b16 %v2251, %v2239
    %v2996 = vpack.c.b16 %v2264, %v2252
    %v2997 = vpack.c.b16 %v2265, %v2253
    %v2998 = vpack.c.b16 %v2266, %v2254
    %v2999 = vpack.c.b16 %v2267, %v2255
    %v3000 = vpack.c.b16 %v2268, %v2256
    %v3001 = vpack.c.b16 %v2269, %v2257
    %v3002 = vpack.c.b16 %v2270, %v2258
    %v3003 = vpack.c.b16 %v2271, %v2259
    %v3004 = vpack.c.b16 %v2272, %v2260
    %v3005 = vpack.c.b16 %v2273, %v2261
    %v3006 = vpack.c.b16 %v2274, %v2262
    %v3007 = vpack.c.b16 %v2275, %v2263
    %v3008 = vpack.c.b16 %v2288, %v2276
    %v3009 = vpack.c.b16 %v2289, %v2277
    %v3010 = vpack.c.b16 %v2290, %v2278
    %v3011 = vpack.c.b16 %v2291, %v2279
    %v3012 = vpack.c.b16 %v2292, %v2280
    %v3013 = vpack.c.b16 %v2293, %v2281
    %v3014 = vpack.c.b16 %v2294, %v2282
    %v3015 = vpack.c.b16 %v2295, %v2283
    %v3016 = vpack.c.b16 %v2296, %v2284
    %v3017 = vpack.c.b16 %v2297, %v2285
    %v3018 = vpack.c.b16 %v2298, %v2286
    %v3019 = vpack.c.b16 %v2299, %v2287
    %v3020 = vpack.c.b16 %v2312, %v2300
    %v3021 = vpack.c.b16 %v2313, %v2301
    %v3022 = vpack.c.b16 %v2314, %v2302
    %v3023 = vpack.c.b16 %v2315, %v2303
    %v3024 = vpack.c.b16 %v2316, %v2304
    %v3025 = vpack.c.b16 %v2317, %v2305
    %v3026 = vpack.c.b16 %v2318, %v2306
    %v3027 = vpack.c.b16 %v2319, %v2307
    %v3028 = vpack.c.b16 %v2320, %v2308
    %v3029 = vpack.c.b16 %v2321, %v2309
    %v3030 = vpack.c.b16 %v2322, %v2310
    %v3031 = vpack.c.b16 %v2323, %v2311
    %v3032 = vpack.c.b16 %v2336, %v2324
    %v3033 = vpack.c.b16 %v2337, %v2325
    %v3034 = vpack.c.b16 %v2338, %v2326
    %v3035 = vpack.c.b16 %v2339, %v2327
    %v3036 = vpack.c.b16 %v2340, %v2328
    %v3037 = vpack.c.b16 %v2341, %v2329
    %v3038 = vpack.c.b16 %v2342, %v2330
    %v3039 = vpack.c.b16 %v2343, %v2331
    %v3040 = vpack.c.b16 %v2344, %v2332
    %v3041 = vpack.c.b16 %v2345, %v2333
    %v3042 = vpack.c.b16 %v2346, %v2334
    %v3043 = vpack.c.b16 %v2347, %v2335
    %v3044 = vpack.c.b16 %v2360, %v2348
    %v3045 = vpack.c.b16 %v2361, %v2349
    %v3046 = vpack.c.b16 %v2362, %v2350
    %v3047 = vpack.c.b16 %v2363, %v2351
    %v3048 = vpack.c.b16 %v2364, %v2352
    %v3049 = vpack.c.b16 %v2365, %v2353
    %v3050 = vpack.c.b16 %v2366, %v2354
    %v3051 = vpack.c.b16 %v2367, %v2355
    %v3052 = vpack.c.b16 %v2368, %v2356
    %v3053 = vpack.c.b16 %v2369, %v2357
    %v3054 = vpack.c.b16 %v2370, %v2358
    %v3055 = vpack.c.b16 %v2371, %v2359
    %v3056 = vpack.c.b16 %v2384, %v2372
    %v3057 = vpack.c.b16 %v2385, %v2373
    %v3058 = vpack.c.b16 %v2386, %v2374
    %v3059 = vpack.c.b16 %v2387, %v2375
    %v3060 = vpack.c.b16 %v2388, %v2376
    %v3061 = vpack.c.b16 %v2389, %v2377
    %v3062 = vpack.c.b16 %v2390, %v2378
    %v3063 = vpack.c.b16 %v2391, %v2379
    %v3064 = vpack.c.b16 %v2392, %v2380
    %v3065 = vpack.c.b16 %v2393, %v2381
    %v3066 = vpack.c.b16 %v2394, %v2382
    %v3067 = vpack.c.b16 %v2395, %v2383
    %v3068 = vpack.c.b16 %v2408, %v2396
    %v3069 = vpack.c.b16 %v2409, %v2397
    %v3070 = vpack.c.b16 %v2410, %v2398
    %v3071 = vpack.c.b16 %v2411, %v2399
    %v3072 = vpack.c.b16 %v2412, %v2400
    %v3073 = vpack.c.b16 %v2413, %v2401
    %v3074 = vpack.c.b16 %v2414, %v2402
    %v3075 = vpack.c.b16 %v2415, %v2403
    %v3076 = vpack.c.b16 %v2416, %v2404
    %v3077 = vpack.c.b16 %v2417, %v2405
    %v3078 = vpack.c.b16 %v2418, %v2406
    %v3079 = vpack.c.b16 %v2419, %v2407
    %v3080 = vpack.c.b16 %v2432, %v2420
    %v3081 = vpack.c.b16 %v2433, %v2421
    %v3082 = vpack.c.b16 %v2434, %v2422
    %v3083 = vpack.c.b16 %v2435, %v2423
    %v3084 = vpack.c.b16 %v2436, %v2424
    %v3085 = vpack.c.b16 %v2437, %v2425
    %v3086 = vpack.c.b16 %v2438, %v2426
    %v3087 = vpack.c.b16 %v2439, %v2427
    %v3088 = vpack.c.b16 %v2440, %v2428
    %v3089 = vpack.c.b16 %v2441, %v2429
    %v3090 = vpack.c.b16 %v2442, %v2430
    %v3091 = vpack.c.b16 %v2443, %v2431
    %v3092 = vpack.c.b16 %v2456, %v2444
    %v3093 = vpack.c.b16 %v2457, %v2445
    %v3094 = vpack.c.b16 %v2458, %v2446
    %v3095 = vpack.c.b16 %v2459, %v2447
    %v3096 = vpack.c.b16 %v2460, %v2448
    %v3097 = vpack.c.b16 %v2461, %v2449
    %v3098 = vpack.c.b16 %v2462, %v2450
    %v3099 = vpack.c.b16 %v2463, %v2451
    %v3100 = vpack.c.b16 %v2464, %v2452
    %v3101 = vpack.c.b16 %v2465, %v2453
    %v3102 = vpack.c.b16 %v2466, %v2454
    %v3103 = vpack.c.b16 %v2467, %v2455
    %v3104 = vpack.c.b16 %v2480, %v2468
    %v3105 = vpack.c.b16 %v2481, %v2469
    %v3106 = vpack.c.b16 %v2482, %v2470
    %v3107 = vpack.c.b16 %v2483, %v2471
    %v3108 = vpack.c.b16 %v2484, %v2472
    %v3109 = vpack.c.b16 %v2485, %v2473
    %v3110 = vpack.c.b16 %v2486, %v2474
    %v3111 = vpack.c.b16 %v2487, %v2475
    %v3112 = vpack.c.b16 %v2488, %v2476
    %v3113 = vpack.c.b16 %v2489, %v2477
    %v3114 = vpack.c.b16 %v2490, %v2478
    %v3115 = vpack.c.b16 %v2491, %v2479
    %v3116 = vpack.c.b16 %v2504, %v2492
    %v3117 = vpack.c.b16 %v2505, %v2493
    %v3118 = vpack.c.b16 %v2506, %v2494
    %v3119 = vpack.c.b16 %v2507, %v2495
    %v3120 = vpack.c.b16 %v2508, %v2496
    %v3121 = vpack.c.b16 %v2509, %v2497
    %v3122 = vpack.c.b16 %v2510, %v2498
    %v3123 = vpack.c.b16 %v2511, %v2499
    %v3124 = vpack.c.b16 %v2512, %v2500
    %v3125 = vpack.c.b16 %v2513, %v2501
    %v3126 = vpack.c.b16 %v2514, %v2502
    %v3127 = vpack.c.b16 %v2515, %v2503
    %v3128 = vpack.c.b16 %v2528, %v2516
    %v3129 = vpack.c.b16 %v2529, %v2517
    %v3130 = vpack.c.b16 %v2530, %v2518
    %v3131 = vpack.c.b16 %v2531, %v2519
    %v3132 = vpack.c.b16 %v2532, %v2520
    %v3133 = vpack.c.b16 %v2533, %v2521
    %v3134 = vpack.c.b16 %v2534, %v2522
    %v3135 = vpack.c.b16 %v2535, %v2523
    %v3136 = vpack.c.b16 %v2536, %v2524
    %v3137 = vpack.c.b16 %v2537, %v2525
    %v3138 = vpack.c.b16 %v2538, %v2526
    %v3139 = vpack.c.b16 %v2539, %v2527
    %v3140 = vpack.c.b16 %v2552, %v2540
    %v3141 = vpack.c.b16 %v2553, %v2541
    %v3142 = vpack.c.b16 %v2554, %v2542
    %v3143 = vpack.c.b16 %v2555, %v2543
    %v3144 = vpack.c.b16 %v2556, %v2544
    %v3145 = vpack.c.b16 %v2557, %v2545
    %v3146 = vpack.c.b16 %v2558, %v2546
    %v3147 = vpack.c.b16 %v2559, %v2547
    %v3148 = vpack.c.b16 %v2560, %v2548
    %v3149 = vpack.c.b16 %v2561, %v2549
    %v3150 = vpack.c.b16 %v2562, %v2550
    %v3151 = vpack.c.b16 %v2563, %v2551
    %vm3740 = vcmask 130048
    %v3742 = vsel %vm3740, %v147, 0
    %3744 = vmatprep.subr.bf16.mxu0 %v2649
    %3745 = vmatpush1.bf16.msra.mxu0 %v2648
    %3746 = vmatprep.subr.bf16.mxu0 %v2637
    %3747 = vmatpush1.bf16.msra.mxu0 %v2636
    %3748 = vmatprep.subr.bf16.mxu0 %v2625
    %3749 = vmatpush1.bf16.msra.mxu0 %v2624
    %3750 = vmatprep.subr.bf16.mxu0 %v2613
    %3751 = vmatpush1.bf16.msra.mxu0 %v2612
    %3752 = vmatprep.subr.bf16.mxu0 %v2601
    %3753 = vmatpush1.bf16.msra.mxu0 %v2600
    %3754 = vmatprep.subr.bf16.mxu0 %v2589
    %3755 = vmatpush1.bf16.msra.mxu0 %v2588
    %3756 = vmatprep.subr.bf16.mxu0 %v2577
    %3757 = vmatpush1.bf16.msra.mxu0 %v2576
    %3758 = vmatprep.subr.bf16.mxu0 %v2565
    %3759 = vmatpush1.bf16.msra.mxu0 %v2564
    %3760 = vmatprep.subr.bf16.mxu0 %v2745
    %3761 = vmatpush2.bf16.msra.mxu0 %v2744
    %3762 = vmatprep.subr.bf16.mxu0 %v2733
    %3763 = vmatpush2.bf16.msra.mxu0 %v2732
    %3764 = vmatprep.subr.bf16.mxu0 %v2721
    %3765 = vmatpush2.bf16.msra.mxu0 %v2720
    %3766 = vmatprep.subr.bf16.mxu0 %v2709
    %3767 = vmatpush2.bf16.msra.mxu0 %v2708
    %3768 = vmatprep.subr.bf16.mxu0 %v2697
    %3769 = vmatpush2.bf16.msra.mxu0 %v2696
    %3770 = vmatprep.subr.bf16.mxu0 %v2685
    %3771 = vmatpush2.bf16.msra.mxu0 %v2684
    %3772 = vmatprep.subr.bf16.mxu0 %v2673
    %3773 = vmatpush2.bf16.msra.mxu0 %v2672
    %3774 = vmatprep.subr.bf16.mxu0 %v2661
    %3775 = vmatpush2.bf16.msra.mxu0 %v2660
    %3776 = vmatprep.mubr.bf16.mxu0 %v142
    %3777 = vmatmul.mubr.bf16.gmra.mxu0 %v141
    %v3778 = vpop.f32.mrf.mxu0
    %v3779 = vadd.f32 %v743, %v3778
    %v3780 = vpop.f32.mrf.mxu0
    %v3781 = vadd.f32 %v747, %v3780
    %v3782 = vpop.f32.mrf.mxu0
    %v3783 = vpop.f32.mrf.mxu0
    %3784 = vdwg.mxu0
    %3785 = vmatprep.subr.bf16.mxu0 %v2841
    %3786 = vmatpush1.bf16.msra.mxu0 %v2840
    %3787 = vmatprep.subr.bf16.mxu0 %v2829
    %3788 = vmatpush1.bf16.msra.mxu0 %v2828
    %3789 = vmatprep.subr.bf16.mxu0 %v2817
    %3790 = vmatpush1.bf16.msra.mxu0 %v2816
    %3791 = vmatprep.subr.bf16.mxu0 %v2805
    %3792 = vmatpush1.bf16.msra.mxu0 %v2804
    %3793 = vmatprep.subr.bf16.mxu0 %v2793
    %3794 = vmatpush1.bf16.msra.mxu0 %v2792
    %3795 = vmatprep.subr.bf16.mxu0 %v2781
    %3796 = vmatpush1.bf16.msra.mxu0 %v2780
    %3797 = vmatprep.subr.bf16.mxu0 %v2769
    %3798 = vmatpush1.bf16.msra.mxu0 %v2768
    %3799 = vmatprep.subr.bf16.mxu0 %v2757
    %3800 = vmatpush1.bf16.msra.mxu0 %v2756
    %3801 = vmatprep.subr.bf16.mxu0 %v2937
    %3802 = vmatpush2.bf16.msra.mxu0 %v2936
    %3803 = vmatprep.subr.bf16.mxu0 %v2925
    %3804 = vmatpush2.bf16.msra.mxu0 %v2924
    %3805 = vmatprep.subr.bf16.mxu0 %v2913
    %3806 = vmatpush2.bf16.msra.mxu0 %v2912
    %3807 = vmatprep.subr.bf16.mxu0 %v2901
    %3808 = vmatpush2.bf16.msra.mxu0 %v2900
    %3809 = vmatprep.subr.bf16.mxu0 %v2889
    %3810 = vmatpush2.bf16.msra.mxu0 %v2888
    %3811 = vmatprep.subr.bf16.mxu0 %v2877
    %3812 = vmatpush2.bf16.msra.mxu0 %v2876
    %3813 = vmatprep.subr.bf16.mxu0 %v2865
    %3814 = vmatpush2.bf16.msra.mxu0 %v2864
    %3815 = vmatprep.subr.bf16.mxu0 %v2853
    %3816 = vmatpush2.bf16.msra.mxu0 %v2852
    %3817 = vmatprep.mubr.bf16.mxu0 %v144
    %3818 = vmatmul.mubr.bf16.gmra.mxu0 %v143
    %v3819 = vpop.f32.mrf.mxu0
    %v3820 = vadd.f32 %v3779, %v3819
    %v3821 = vpop.f32.mrf.mxu0
    %v3822 = vadd.f32 %v3781, %v3821
    %v3823 = vpop.f32.mrf.mxu0
    %v3824 = vpop.f32.mrf.mxu0
    %3825 = vdwg.mxu0
    %3826 = vmatprep.subr.bf16.mxu0 %v3033
    %3827 = vmatpush1.bf16.msra.mxu0 %v3032
    %3828 = vmatprep.subr.bf16.mxu0 %v3021
    %3829 = vmatpush1.bf16.msra.mxu0 %v3020
    %3830 = vmatprep.subr.bf16.mxu0 %v3009
    %3831 = vmatpush1.bf16.msra.mxu0 %v3008
    %3832 = vmatprep.subr.bf16.mxu0 %v2997
    %3833 = vmatpush1.bf16.msra.mxu0 %v2996
    %3834 = vmatprep.subr.bf16.mxu0 %v2985
    %3835 = vmatpush1.bf16.msra.mxu0 %v2984
    %3836 = vmatprep.subr.bf16.mxu0 %v2973
    %3837 = vmatpush1.bf16.msra.mxu0 %v2972
    %3838 = vmatprep.subr.bf16.mxu0 %v2961
    %3839 = vmatpush1.bf16.msra.mxu0 %v2960
    %3840 = vmatprep.subr.bf16.mxu0 %v2949
    %3841 = vmatpush1.bf16.msra.mxu0 %v2948
    %3842 = vmatprep.subr.bf16.mxu0 %v3129
    %3843 = vmatpush2.bf16.msra.mxu0 %v3128
    %3844 = vmatprep.subr.bf16.mxu0 %v3117
    %3845 = vmatpush2.bf16.msra.mxu0 %v3116
    %3846 = vmatprep.subr.bf16.mxu0 %v3105
    %3847 = vmatpush2.bf16.msra.mxu0 %v3104
    %3848 = vmatprep.subr.bf16.mxu0 %v3093
    %3849 = vmatpush2.bf16.msra.mxu0 %v3092
    %3850 = vmatprep.subr.bf16.mxu0 %v3081
    %3851 = vmatpush2.bf16.msra.mxu0 %v3080
    %3852 = vmatprep.subr.bf16.mxu0 %v3069
    %3853 = vmatpush2.bf16.msra.mxu0 %v3068
    %3854 = vmatprep.subr.bf16.mxu0 %v3057
    %3855 = vmatpush2.bf16.msra.mxu0 %v3056
    %3856 = vmatprep.subr.bf16.mxu0 %v3045
    %3857 = vmatpush2.bf16.msra.mxu0 %v3044
    %3858 = vmatprep.mubr.bf16.mxu0 %v146
    %3859 = vmatmul.mubr.bf16.gmra.mxu0 %v145
    %v3860 = vpop.f32.mrf.mxu0
    %v3861 = vadd.f32 %v3820, %v3860
    %v3862 = vpop.f32.mrf.mxu0
    %v3863 = vadd.f32 %v3822, %v3862
    %v3864 = vpop.f32.mrf.mxu0
    %v3865 = vpop.f32.mrf.mxu0
    %3866 = vdwg.mxu0
    %3867 = vmatprep.subr.bf16.mxu0 0
    %3868 = vmatpush1.bf16.msra.mxu0 0
    %3869 = vmatprep.subr.bf16.mxu0 0
    %3870 = vmatpush1.bf16.msra.mxu0 0
    %3871 = vmatprep.subr.bf16.mxu0 0
    %3872 = vmatpush1.bf16.msra.mxu0 0
    %3873 = vmatprep.subr.bf16.mxu0 0
    %3874 = vmatpush1.bf16.msra.mxu0 0
    %3875 = vmatprep.subr.bf16.mxu0 0
    %3876 = vmatpush1.bf16.msra.mxu0 0
    %3877 = vmatprep.subr.bf16.mxu0 0
    %3878 = vmatpush1.bf16.msra.mxu0 0
    %3879 = vmatprep.subr.bf16.mxu0 0
    %3880 = vmatpush1.bf16.msra.mxu0 0
    %3881 = vmatprep.subr.bf16.mxu0 %v3141
    %3882 = vmatpush1.bf16.msra.mxu0 %v3140
    %3883 = vmatprep.subr.bf16.mxu0 0
    %3884 = vmatpush2.bf16.msra.mxu0 0
    %3885 = vmatprep.subr.bf16.mxu0 0
    %3886 = vmatpush2.bf16.msra.mxu0 0
    %3887 = vmatprep.subr.bf16.mxu0 0
    %3888 = vmatpush2.bf16.msra.mxu0 0
    %3889 = vmatprep.subr.bf16.mxu0 0
    %3890 = vmatpush2.bf16.msra.mxu0 0
    %3891 = vmatprep.subr.bf16.mxu0 0
    %3892 = vmatpush2.bf16.msra.mxu0 0
    %3893 = vmatprep.subr.bf16.mxu0 0
    %3894 = vmatpush2.bf16.msra.mxu0 0
    %3895 = vmatprep.subr.bf16.mxu0 0
    %3896 = vmatpush2.bf16.msra.mxu0 0
    %3897 = vmatprep.subr.bf16.mxu0 0
    %3898 = vmatpush2.bf16.msra.mxu0 0
    %3899 = vmatprep.mubr.bf16.mxu0 0
    %3900 = vmatmul.mubr.bf16.gmra.mxu0 %v3742
    %v3901 = vpop.f32.mrf.mxu0
    %v3902 = vadd.f32 %v3861, %v3901
    %v3903 = vpop.f32.mrf.mxu0
    %v3904 = vadd.f32 %v3863, %v3903
    %v3905 = vpop.f32.mrf.mxu0
    %v3906 = vpop.f32.mrf.mxu0
    %3907 = vdwg.mxu0
    %3908 = vmatprep.subr.bf16.mxu0 %v2651
    %3909 = vmatpush1.bf16.msra.mxu0 %v2650
    %3910 = vmatprep.subr.bf16.mxu0 %v2639
    %3911 = vmatpush1.bf16.msra.mxu0 %v2638
    %3912 = vmatprep.subr.bf16.mxu0 %v2627
    %3913 = vmatpush1.bf16.msra.mxu0 %v2626
    %3914 = vmatprep.subr.bf16.mxu0 %v2615
    %3915 = vmatpush1.bf16.msra.mxu0 %v2614
    %3916 = vmatprep.subr.bf16.mxu0 %v2603
    %3917 = vmatpush1.bf16.msra.mxu0 %v2602
    %3918 = vmatprep.subr.bf16.mxu0 %v2591
    %3919 = vmatpush1.bf16.msra.mxu0 %v2590
    %3920 = vmatprep.subr.bf16.mxu0 %v2579
    %3921 = vmatpush1.bf16.msra.mxu0 %v2578
    %3922 = vmatprep.subr.bf16.mxu0 %v2567
    %3923 = vmatpush1.bf16.msra.mxu0 %v2566
    %3924 = vmatprep.subr.bf16.mxu0 %v2747
    %3925 = vmatpush2.bf16.msra.mxu0 %v2746
    %3926 = vmatprep.subr.bf16.mxu0 %v2735
    %3927 = vmatpush2.bf16.msra.mxu0 %v2734
    %3928 = vmatprep.subr.bf16.mxu0 %v2723
    %3929 = vmatpush2.bf16.msra.mxu0 %v2722
    %3930 = vmatprep.subr.bf16.mxu0 %v2711
    %3931 = vmatpush2.bf16.msra.mxu0 %v2710
    %3932 = vmatprep.subr.bf16.mxu0 %v2699
    %3933 = vmatpush2.bf16.msra.mxu0 %v2698
    %3934 = vmatprep.subr.bf16.mxu0 %v2687
    %3935 = vmatpush2.bf16.msra.mxu0 %v2686
    %3936 = vmatprep.subr.bf16.mxu0 %v2675
    %3937 = vmatpush2.bf16.msra.mxu0 %v2674
    %3938 = vmatprep.subr.bf16.mxu0 %v2663
    %3939 = vmatpush2.bf16.msra.mxu0 %v2662
    %3940 = vmatprep.mubr.bf16.mxu0 %v142
    %3941 = vmatmul.mubr.bf16.gmra.mxu0 %v141
    %v3942 = vpop.f32.mrf.mxu0
    %v3943 = vadd.f32 %v751, %v3942
    %v3944 = vpop.f32.mrf.mxu0
    %v3945 = vadd.f32 %v755, %v3944
    %v3946 = vpop.f32.mrf.mxu0
    %v3947 = vpop.f32.mrf.mxu0
    %3948 = vdwg.mxu0
    %3949 = vmatprep.subr.bf16.mxu0 %v2843
    %3950 = vmatpush1.bf16.msra.mxu0 %v2842
    %3951 = vmatprep.subr.bf16.mxu0 %v2831
    %3952 = vmatpush1.bf16.msra.mxu0 %v2830
    %3953 = vmatprep.subr.bf16.mxu0 %v2819
    %3954 = vmatpush1.bf16.msra.mxu0 %v2818
    %3955 = vmatprep.subr.bf16.mxu0 %v2807
    %3956 = vmatpush1.bf16.msra.mxu0 %v2806
    %3957 = vmatprep.subr.bf16.mxu0 %v2795
    %3958 = vmatpush1.bf16.msra.mxu0 %v2794
    %3959 = vmatprep.subr.bf16.mxu0 %v2783
    %3960 = vmatpush1.bf16.msra.mxu0 %v2782
    %3961 = vmatprep.subr.bf16.mxu0 %v2771
    %3962 = vmatpush1.bf16.msra.mxu0 %v2770
    %3963 = vmatprep.subr.bf16.mxu0 %v2759
    %3964 = vmatpush1.bf16.msra.mxu0 %v2758
    %3965 = vmatprep.subr.bf16.mxu0 %v2939
    %3966 = vmatpush2.bf16.msra.mxu0 %v2938
    %3967 = vmatprep.subr.bf16.mxu0 %v2927
    %3968 = vmatpush2.bf16.msra.mxu0 %v2926
    %3969 = vmatprep.subr.bf16.mxu0 %v2915
    %3970 = vmatpush2.bf16.msra.mxu0 %v2914
    %3971 = vmatprep.subr.bf16.mxu0 %v2903
    %3972 = vmatpush2.bf16.msra.mxu0 %v2902
    %3973 = vmatprep.subr.bf16.mxu0 %v2891
    %3974 = vmatpush2.bf16.msra.mxu0 %v2890
    %3975 = vmatprep.subr.bf16.mxu0 %v2879
    %3976 = vmatpush2.bf16.msra.mxu0 %v2878
    %3977 = vmatprep.subr.bf16.mxu0 %v2867
    %3978 = vmatpush2.bf16.msra.mxu0 %v2866
    %3979 = vmatprep.subr.bf16.mxu0 %v2855
    %3980 = vmatpush2.bf16.msra.mxu0 %v2854
    %3981 = vmatprep.mubr.bf16.mxu0 %v144
    %3982 = vmatmul.mubr.bf16.gmra.mxu0 %v143
    %v3983 = vpop.f32.mrf.mxu0
    %v3984 = vadd.f32 %v3943, %v3983
    %v3985 = vpop.f32.mrf.mxu0
    %v3986 = vadd.f32 %v3945, %v3985
    %v3987 = vpop.f32.mrf.mxu0
    %v3988 = vpop.f32.mrf.mxu0
    %3989 = vdwg.mxu0
    %3990 = vmatprep.subr.bf16.mxu0 %v3035
    %3991 = vmatpush1.bf16.msra.mxu0 %v3034
    %3992 = vmatprep.subr.bf16.mxu0 %v3023
    %3993 = vmatpush1.bf16.msra.mxu0 %v3022
    %3994 = vmatprep.subr.bf16.mxu0 %v3011
    %3995 = vmatpush1.bf16.msra.mxu0 %v3010
    %3996 = vmatprep.subr.bf16.mxu0 %v2999
    %3997 = vmatpush1.bf16.msra.mxu0 %v2998
    %3998 = vmatprep.subr.bf16.mxu0 %v2987
    %3999 = vmatpush1.bf16.msra.mxu0 %v2986
    %4000 = vmatprep.subr.bf16.mxu0 %v2975
    %4001 = vmatpush1.bf16.msra.mxu0 %v2974
    %4002 = vmatprep.subr.bf16.mxu0 %v2963
    %4003 = vmatpush1.bf16.msra.mxu0 %v2962
    %4004 = vmatprep.subr.bf16.mxu0 %v2951
    %4005 = vmatpush1.bf16.msra.mxu0 %v2950
    %4006 = vmatprep.subr.bf16.mxu0 %v3131
    %4007 = vmatpush2.bf16.msra.mxu0 %v3130
    %4008 = vmatprep.subr.bf16.mxu0 %v3119
    %4009 = vmatpush2.bf16.msra.mxu0 %v3118
    %4010 = vmatprep.subr.bf16.mxu0 %v3107
    %4011 = vmatpush2.bf16.msra.mxu0 %v3106
    %4012 = vmatprep.subr.bf16.mxu0 %v3095
    %4013 = vmatpush2.bf16.msra.mxu0 %v3094
    %4014 = vmatprep.subr.bf16.mxu0 %v3083
    %4015 = vmatpush2.bf16.msra.mxu0 %v3082
    %4016 = vmatprep.subr.bf16.mxu0 %v3071
    %4017 = vmatpush2.bf16.msra.mxu0 %v3070
    %4018 = vmatprep.subr.bf16.mxu0 %v3059
    %4019 = vmatpush2.bf16.msra.mxu0 %v3058
    %4020 = vmatprep.subr.bf16.mxu0 %v3047
    %4021 = vmatpush2.bf16.msra.mxu0 %v3046
    %4022 = vmatprep.mubr.bf16.mxu0 %v146
    %4023 = vmatmul.mubr.bf16.gmra.mxu0 %v145
    %v4024 = vpop.f32.mrf.mxu0
    %v4025 = vadd.f32 %v3984, %v4024
    %v4026 = vpop.f32.mrf.mxu0
    %v4027 = vadd.f32 %v3986, %v4026
    %v4028 = vpop.f32.mrf.mxu0
    %v4029 = vpop.f32.mrf.mxu0
    %4030 = vdwg.mxu0
    %4031 = vmatprep.subr.bf16.mxu0 0
    %4032 = vmatpush1.bf16.msra.mxu0 0
    %4033 = vmatprep.subr.bf16.mxu0 0
    %4034 = vmatpush1.bf16.msra.mxu0 0
    %4035 = vmatprep.subr.bf16.mxu0 0
    %4036 = vmatpush1.bf16.msra.mxu0 0
    %4037 = vmatprep.subr.bf16.mxu0 0
    %4038 = vmatpush1.bf16.msra.mxu0 0
    %4039 = vmatprep.subr.bf16.mxu0 0
    %4040 = vmatpush1.bf16.msra.mxu0 0
    %4041 = vmatprep.subr.bf16.mxu0 0
    %4042 = vmatpush1.bf16.msra.mxu0 0
    %4043 = vmatprep.subr.bf16.mxu0 0
    %4044 = vmatpush1.bf16.msra.mxu0 0
    %4045 = vmatprep.subr.bf16.mxu0 %v3143
    %4046 = vmatpush1.bf16.msra.mxu0 %v3142
    %4047 = vmatprep.subr.bf16.mxu0 0
    %4048 = vmatpush2.bf16.msra.mxu0 0
    %4049 = vmatprep.subr.bf16.mxu0 0
    %4050 = vmatpush2.bf16.msra.mxu0 0
    %4051 = vmatprep.subr.bf16.mxu0 0
    %4052 = vmatpush2.bf16.msra.mxu0 0
    %4053 = vmatprep.subr.bf16.mxu0 0
    %4054 = vmatpush2.bf16.msra.mxu0 0
    %4055 = vmatprep.subr.bf16.mxu0 0
    %4056 = vmatpush2.bf16.msra.mxu0 0
    %4057 = vmatprep.subr.bf16.mxu0 0
    %4058 = vmatpush2.bf16.msra.mxu0 0
    %4059 = vmatprep.subr.bf16.mxu0 0
    %4060 = vmatpush2.bf16.msra.mxu0 0
    %4061 = vmatprep.subr.bf16.mxu0 0
    %4062 = vmatpush2.bf16.msra.mxu0 0
    %4063 = vmatprep.mubr.bf16.mxu0 0
    %4064 = vmatmul.mubr.bf16.gmra.mxu0 %v3742
    %v4065 = vpop.f32.mrf.mxu0
    %v4066 = vadd.f32 %v4025, %v4065
    %v4067 = vpop.f32.mrf.mxu0
    %v4068 = vadd.f32 %v4027, %v4067
    %v4069 = vpop.f32.mrf.mxu0
    %v4070 = vpop.f32.mrf.mxu0
    %4071 = vdwg.mxu0
    %4072 = vmatprep.subr.bf16.mxu0 %v2653
    %4073 = vmatpush1.bf16.msra.mxu0 %v2652
    %4074 = vmatprep.subr.bf16.mxu0 %v2641
    %4075 = vmatpush1.bf16.msra.mxu0 %v2640
    %4076 = vmatprep.subr.bf16.mxu0 %v2629
    %4077 = vmatpush1.bf16.msra.mxu0 %v2628
    %4078 = vmatprep.subr.bf16.mxu0 %v2617
    %4079 = vmatpush1.bf16.msra.mxu0 %v2616
    %4080 = vmatprep.subr.bf16.mxu0 %v2605
    %4081 = vmatpush1.bf16.msra.mxu0 %v2604
    %4082 = vmatprep.subr.bf16.mxu0 %v2593
    %4083 = vmatpush1.bf16.msra.mxu0 %v2592
    %4084 = vmatprep.subr.bf16.mxu0 %v2581
    %4085 = vmatpush1.bf16.msra.mxu0 %v2580
    %4086 = vmatprep.subr.bf16.mxu0 %v2569
    %4087 = vmatpush1.bf16.msra.mxu0 %v2568
    %4088 = vmatprep.subr.bf16.mxu0 %v2749
    %4089 = vmatpush2.bf16.msra.mxu0 %v2748
    %4090 = vmatprep.subr.bf16.mxu0 %v2737
    %4091 = vmatpush2.bf16.msra.mxu0 %v2736
    %4092 = vmatprep.subr.bf16.mxu0 %v2725
    %4093 = vmatpush2.bf16.msra.mxu0 %v2724
    %4094 = vmatprep.subr.bf16.mxu0 %v2713
    %4095 = vmatpush2.bf16.msra.mxu0 %v2712
    %4096 = vmatprep.subr.bf16.mxu0 %v2701
    %4097 = vmatpush2.bf16.msra.mxu0 %v2700
    %4098 = vmatprep.subr.bf16.mxu0 %v2689
    %4099 = vmatpush2.bf16.msra.mxu0 %v2688
    %4100 = vmatprep.subr.bf16.mxu0 %v2677
    %4101 = vmatpush2.bf16.msra.mxu0 %v2676
    %4102 = vmatprep.subr.bf16.mxu0 %v2665
    %4103 = vmatpush2.bf16.msra.mxu0 %v2664
    %4104 = vmatprep.mubr.bf16.mxu0 %v142
    %4105 = vmatmul.mubr.bf16.gmra.mxu0 %v141
    %v4106 = vpop.f32.mrf.mxu0
    %v4107 = vadd.f32 %v759, %v4106
    %v4108 = vpop.f32.mrf.mxu0
    %v4109 = vadd.f32 %v763, %v4108
    %v4110 = vpop.f32.mrf.mxu0
    %v4111 = vpop.f32.mrf.mxu0
    %4112 = vdwg.mxu0
    %4113 = vmatprep.subr.bf16.mxu0 %v2845
    %4114 = vmatpush1.bf16.msra.mxu0 %v2844
    %4115 = vmatprep.subr.bf16.mxu0 %v2833
    %4116 = vmatpush1.bf16.msra.mxu0 %v2832
    %4117 = vmatprep.subr.bf16.mxu0 %v2821
    %4118 = vmatpush1.bf16.msra.mxu0 %v2820
    %4119 = vmatprep.subr.bf16.mxu0 %v2809
    %4120 = vmatpush1.bf16.msra.mxu0 %v2808
    %4121 = vmatprep.subr.bf16.mxu0 %v2797
    %4122 = vmatpush1.bf16.msra.mxu0 %v2796
    %4123 = vmatprep.subr.bf16.mxu0 %v2785
    %4124 = vmatpush1.bf16.msra.mxu0 %v2784
    %4125 = vmatprep.subr.bf16.mxu0 %v2773
    %4126 = vmatpush1.bf16.msra.mxu0 %v2772
    %4127 = vmatprep.subr.bf16.mxu0 %v2761
    %4128 = vmatpush1.bf16.msra.mxu0 %v2760
    %4129 = vmatprep.subr.bf16.mxu0 %v2941
    %4130 = vmatpush2.bf16.msra.mxu0 %v2940
    %4131 = vmatprep.subr.bf16.mxu0 %v2929
    %4132 = vmatpush2.bf16.msra.mxu0 %v2928
    %4133 = vmatprep.subr.bf16.mxu0 %v2917
    %4134 = vmatpush2.bf16.msra.mxu0 %v2916
    %4135 = vmatprep.subr.bf16.mxu0 %v2905
    %4136 = vmatpush2.bf16.msra.mxu0 %v2904
    %4137 = vmatprep.subr.bf16.mxu0 %v2893
    %4138 = vmatpush2.bf16.msra.mxu0 %v2892
    %4139 = vmatprep.subr.bf16.mxu0 %v2881
    %4140 = vmatpush2.bf16.msra.mxu0 %v2880
    %4141 = vmatprep.subr.bf16.mxu0 %v2869
    %4142 = vmatpush2.bf16.msra.mxu0 %v2868
    %4143 = vmatprep.subr.bf16.mxu0 %v2857
    %4144 = vmatpush2.bf16.msra.mxu0 %v2856
    %4145 = vmatprep.mubr.bf16.mxu0 %v144
    %4146 = vmatmul.mubr.bf16.gmra.mxu0 %v143
    %v4147 = vpop.f32.mrf.mxu0
    %v4148 = vadd.f32 %v4107, %v4147
    %v4149 = vpop.f32.mrf.mxu0
    %v4150 = vadd.f32 %v4109, %v4149
    %v4151 = vpop.f32.mrf.mxu0
    %v4152 = vpop.f32.mrf.mxu0
    %4153 = vdwg.mxu0
    %4154 = vmatprep.subr.bf16.mxu0 %v3037
    %4155 = vmatpush1.bf16.msra.mxu0 %v3036
    %4156 = vmatprep.subr.bf16.mxu0 %v3025
    %4157 = vmatpush1.bf16.msra.mxu0 %v3024
    %4158 = vmatprep.subr.bf16.mxu0 %v3013
    %4159 = vmatpush1.bf16.msra.mxu0 %v3012
    %4160 = vmatprep.subr.bf16.mxu0 %v3001
    %4161 = vmatpush1.bf16.msra.mxu0 %v3000
    %4162 = vmatprep.subr.bf16.mxu0 %v2989
    %4163 = vmatpush1.bf16.msra.mxu0 %v2988
    %4164 = vmatprep.subr.bf16.mxu0 %v2977
    %4165 = vmatpush1.bf16.msra.mxu0 %v2976
    %4166 = vmatprep.subr.bf16.mxu0 %v2965
    %4167 = vmatpush1.bf16.msra.mxu0 %v2964
    %4168 = vmatprep.subr.bf16.mxu0 %v2953
    %4169 = vmatpush1.bf16.msra.mxu0 %v2952
    %4170 = vmatprep.subr.bf16.mxu0 %v3133
    %4171 = vmatpush2.bf16.msra.mxu0 %v3132
    %4172 = vmatprep.subr.bf16.mxu0 %v3121
    %4173 = vmatpush2.bf16.msra.mxu0 %v3120
    %4174 = vmatprep.subr.bf16.mxu0 %v3109
    %4175 = vmatpush2.bf16.msra.mxu0 %v3108
    %4176 = vmatprep.subr.bf16.mxu0 %v3097
    %4177 = vmatpush2.bf16.msra.mxu0 %v3096
    %4178 = vmatprep.subr.bf16.mxu0 %v3085
    %4179 = vmatpush2.bf16.msra.mxu0 %v3084
    %4180 = vmatprep.subr.bf16.mxu0 %v3073
    %4181 = vmatpush2.bf16.msra.mxu0 %v3072
    %4182 = vmatprep.subr.bf16.mxu0 %v3061
    %4183 = vmatpush2.bf16.msra.mxu0 %v3060
    %4184 = vmatprep.subr.bf16.mxu0 %v3049
    %4185 = vmatpush2.bf16.msra.mxu0 %v3048
    %4186 = vmatprep.mubr.bf16.mxu0 %v146
    %4187 = vmatmul.mubr.bf16.gmra.mxu0 %v145
    %v4188 = vpop.f32.mrf.mxu0
    %v4189 = vadd.f32 %v4148, %v4188
    %v4190 = vpop.f32.mrf.mxu0
    %v4191 = vadd.f32 %v4150, %v4190
    %v4192 = vpop.f32.mrf.mxu0
    %v4193 = vpop.f32.mrf.mxu0
    %4194 = vdwg.mxu0
    %4195 = vmatprep.subr.bf16.mxu0 0
    %4196 = vmatpush1.bf16.msra.mxu0 0
    %4197 = vmatprep.subr.bf16.mxu0 0
    %4198 = vmatpush1.bf16.msra.mxu0 0
    %4199 = vmatprep.subr.bf16.mxu0 0
    %4200 = vmatpush1.bf16.msra.mxu0 0
    %4201 = vmatprep.subr.bf16.mxu0 0
    %4202 = vmatpush1.bf16.msra.mxu0 0
    %4203 = vmatprep.subr.bf16.mxu0 0
    %4204 = vmatpush1.bf16.msra.mxu0 0
    %4205 = vmatprep.subr.bf16.mxu0 0
    %4206 = vmatpush1.bf16.msra.mxu0 0
    %4207 = vmatprep.subr.bf16.mxu0 0
    %4208 = vmatpush1.bf16.msra.mxu0 0
    %4209 = vmatprep.subr.bf16.mxu0 %v3145
    %4210 = vmatpush1.bf16.msra.mxu0 %v3144
    %4211 = vmatprep.subr.bf16.mxu0 0
    %4212 = vmatpush2.bf16.msra.mxu0 0
    %4213 = vmatprep.subr.bf16.mxu0 0
    %4214 = vmatpush2.bf16.msra.mxu0 0
    %4215 = vmatprep.subr.bf16.mxu0 0
    %4216 = vmatpush2.bf16.msra.mxu0 0
    %4217 = vmatprep.subr.bf16.mxu0 0
    %4218 = vmatpush2.bf16.msra.mxu0 0
    %4219 = vmatprep.subr.bf16.mxu0 0
    %4220 = vmatpush2.bf16.msra.mxu0 0
    %4221 = vmatprep.subr.bf16.mxu0 0
    %4222 = vmatpush2.bf16.msra.mxu0 0
    %4223 = vmatprep.subr.bf16.mxu0 0
    %4224 = vmatpush2.bf16.msra.mxu0 0
    %4225 = vmatprep.subr.bf16.mxu0 0
    %4226 = vmatpush2.bf16.msra.mxu0 0
    %4227 = vmatprep.mubr.bf16.mxu0 0
    %4228 = vmatmul.mubr.bf16.gmra.mxu0 %v3742
    %v4229 = vpop.f32.mrf.mxu0
    %v4230 = vadd.f32 %v4189, %v4229
    %v4231 = vpop.f32.mrf.mxu0
    %v4232 = vadd.f32 %v4191, %v4231
    %v4233 = vpop.f32.mrf.mxu0
    %v4234 = vpop.f32.mrf.mxu0
    %4235 = vdwg.mxu0
    %4236 = vmatprep.subr.bf16.mxu0 %v2655
    %4237 = vmatpush1.bf16.msra.mxu0 %v2654
    %4238 = vmatprep.subr.bf16.mxu0 %v2643
    %4239 = vmatpush1.bf16.msra.mxu0 %v2642
    %4240 = vmatprep.subr.bf16.mxu0 %v2631
    %4241 = vmatpush1.bf16.msra.mxu0 %v2630
    %4242 = vmatprep.subr.bf16.mxu0 %v2619
    %4243 = vmatpush1.bf16.msra.mxu0 %v2618
    %4244 = vmatprep.subr.bf16.mxu0 %v2607
    %4245 = vmatpush1.bf16.msra.mxu0 %v2606
    %4246 = vmatprep.subr.bf16.mxu0 %v2595
    %4247 = vmatpush1.bf16.msra.mxu0 %v2594
    %4248 = vmatprep.subr.bf16.mxu0 %v2583
    %4249 = vmatpush1.bf16.msra.mxu0 %v2582
    %4250 = vmatprep.subr.bf16.mxu0 %v2571
    %4251 = vmatpush1.bf16.msra.mxu0 %v2570
    %4252 = vmatprep.subr.bf16.mxu0 %v2751
    %4253 = vmatpush2.bf16.msra.mxu0 %v2750
    %4254 = vmatprep.subr.bf16.mxu0 %v2739
    %4255 = vmatpush2.bf16.msra.mxu0 %v2738
    %4256 = vmatprep.subr.bf16.mxu0 %v2727
    %4257 = vmatpush2.bf16.msra.mxu0 %v2726
    %4258 = vmatprep.subr.bf16.mxu0 %v2715
    %4259 = vmatpush2.bf16.msra.mxu0 %v2714
    %4260 = vmatprep.subr.bf16.mxu0 %v2703
    %4261 = vmatpush2.bf16.msra.mxu0 %v2702
    %4262 = vmatprep.subr.bf16.mxu0 %v2691
    %4263 = vmatpush2.bf16.msra.mxu0 %v2690
    %4264 = vmatprep.subr.bf16.mxu0 %v2679
    %4265 = vmatpush2.bf16.msra.mxu0 %v2678
    %4266 = vmatprep.subr.bf16.mxu0 %v2667
    %4267 = vmatpush2.bf16.msra.mxu0 %v2666
    %4268 = vmatprep.mubr.bf16.mxu0 %v142
    %4269 = vmatmul.mubr.bf16.gmra.mxu0 %v141
    %v4270 = vpop.f32.mrf.mxu0
    %v4271 = vadd.f32 %v767, %v4270
    %v4272 = vpop.f32.mrf.mxu0
    %v4273 = vadd.f32 %v771, %v4272
    %v4274 = vpop.f32.mrf.mxu0
    %v4275 = vpop.f32.mrf.mxu0
    %4276 = vdwg.mxu0
    %4277 = vmatprep.subr.bf16.mxu0 %v2847
    %4278 = vmatpush1.bf16.msra.mxu0 %v2846
    %4279 = vmatprep.subr.bf16.mxu0 %v2835
    %4280 = vmatpush1.bf16.msra.mxu0 %v2834
    %4281 = vmatprep.subr.bf16.mxu0 %v2823
    %4282 = vmatpush1.bf16.msra.mxu0 %v2822
    %4283 = vmatprep.subr.bf16.mxu0 %v2811
    %4284 = vmatpush1.bf16.msra.mxu0 %v2810
    %4285 = vmatprep.subr.bf16.mxu0 %v2799
    %4286 = vmatpush1.bf16.msra.mxu0 %v2798
    %4287 = vmatprep.subr.bf16.mxu0 %v2787
    %4288 = vmatpush1.bf16.msra.mxu0 %v2786
    %4289 = vmatprep.subr.bf16.mxu0 %v2775
    %4290 = vmatpush1.bf16.msra.mxu0 %v2774
    %4291 = vmatprep.subr.bf16.mxu0 %v2763
    %4292 = vmatpush1.bf16.msra.mxu0 %v2762
    %4293 = vmatprep.subr.bf16.mxu0 %v2943
    %4294 = vmatpush2.bf16.msra.mxu0 %v2942
    %4295 = vmatprep.subr.bf16.mxu0 %v2931
    %4296 = vmatpush2.bf16.msra.mxu0 %v2930
    %4297 = vmatprep.subr.bf16.mxu0 %v2919
    %4298 = vmatpush2.bf16.msra.mxu0 %v2918
    %4299 = vmatprep.subr.bf16.mxu0 %v2907
    %4300 = vmatpush2.bf16.msra.mxu0 %v2906
    %4301 = vmatprep.subr.bf16.mxu0 %v2895
    %4302 = vmatpush2.bf16.msra.mxu0 %v2894
    %4303 = vmatprep.subr.bf16.mxu0 %v2883
    %4304 = vmatpush2.bf16.msra.mxu0 %v2882
    %4305 = vmatprep.subr.bf16.mxu0 %v2871
    %4306 = vmatpush2.bf16.msra.mxu0 %v2870
    %4307 = vmatprep.subr.bf16.mxu0 %v2859
    %4308 = vmatpush2.bf16.msra.mxu0 %v2858
    %4309 = vmatprep.mubr.bf16.mxu0 %v144
    %4310 = vmatmul.mubr.bf16.gmra.mxu0 %v143
    %v4311 = vpop.f32.mrf.mxu0
    %v4312 = vadd.f32 %v4271, %v4311
    %v4313 = vpop.f32.mrf.mxu0
    %v4314 = vadd.f32 %v4273, %v4313
    %v4315 = vpop.f32.mrf.mxu0
    %v4316 = vpop.f32.mrf.mxu0
    %4317 = vdwg.mxu0
    %4318 = vmatprep.subr.bf16.mxu0 %v3039
    %4319 = vmatpush1.bf16.msra.mxu0 %v3038
    %4320 = vmatprep.subr.bf16.mxu0 %v3027
    %4321 = vmatpush1.bf16.msra.mxu0 %v3026
    %4322 = vmatprep.subr.bf16.mxu0 %v3015
    %4323 = vmatpush1.bf16.msra.mxu0 %v3014
    %4324 = vmatprep.subr.bf16.mxu0 %v3003
    %4325 = vmatpush1.bf16.msra.mxu0 %v3002
    %4326 = vmatprep.subr.bf16.mxu0 %v2991
    %4327 = vmatpush1.bf16.msra.mxu0 %v2990
    %4328 = vmatprep.subr.bf16.mxu0 %v2979
    %4329 = vmatpush1.bf16.msra.mxu0 %v2978
    %4330 = vmatprep.subr.bf16.mxu0 %v2967
    %4331 = vmatpush1.bf16.msra.mxu0 %v2966
    %4332 = vmatprep.subr.bf16.mxu0 %v2955
    %4333 = vmatpush1.bf16.msra.mxu0 %v2954
    %4334 = vmatprep.subr.bf16.mxu0 %v3135
    %4335 = vmatpush2.bf16.msra.mxu0 %v3134
    %4336 = vmatprep.subr.bf16.mxu0 %v3123
    %4337 = vmatpush2.bf16.msra.mxu0 %v3122
    %4338 = vmatprep.subr.bf16.mxu0 %v3111
    %4339 = vmatpush2.bf16.msra.mxu0 %v3110
    %4340 = vmatprep.subr.bf16.mxu0 %v3099
    %4341 = vmatpush2.bf16.msra.mxu0 %v3098
    %4342 = vmatprep.subr.bf16.mxu0 %v3087
    %4343 = vmatpush2.bf16.msra.mxu0 %v3086
    %4344 = vmatprep.subr.bf16.mxu0 %v3075
    %4345 = vmatpush2.bf16.msra.mxu0 %v3074
    %4346 = vmatprep.subr.bf16.mxu0 %v3063
    %4347 = vmatpush2.bf16.msra.mxu0 %v3062
    %4348 = vmatprep.subr.bf16.mxu0 %v3051
    %4349 = vmatpush2.bf16.msra.mxu0 %v3050
    %4350 = vmatprep.mubr.bf16.mxu0 %v146
    %4351 = vmatmul.mubr.bf16.gmra.mxu0 %v145
    %v4352 = vpop.f32.mrf.mxu0
    %v4353 = vadd.f32 %v4312, %v4352
    %v4354 = vpop.f32.mrf.mxu0
    %v4355 = vadd.f32 %v4314, %v4354
    %v4356 = vpop.f32.mrf.mxu0
    %v4357 = vpop.f32.mrf.mxu0
    %4358 = vdwg.mxu0
    %4359 = vmatprep.subr.bf16.mxu0 0
    %4360 = vmatpush1.bf16.msra.mxu0 0
    %4361 = vmatprep.subr.bf16.mxu0 0
    %4362 = vmatpush1.bf16.msra.mxu0 0
    %4363 = vmatprep.subr.bf16.mxu0 0
    %4364 = vmatpush1.bf16.msra.mxu0 0
    %4365 = vmatprep.subr.bf16.mxu0 0
    %4366 = vmatpush1.bf16.msra.mxu0 0
    %4367 = vmatprep.subr.bf16.mxu0 0
    %4368 = vmatpush1.bf16.msra.mxu0 0
    %4369 = vmatprep.subr.bf16.mxu0 0
    %4370 = vmatpush1.bf16.msra.mxu0 0
    %4371 = vmatprep.subr.bf16.mxu0 0
    %4372 = vmatpush1.bf16.msra.mxu0 0
    %4373 = vmatprep.subr.bf16.mxu0 %v3147
    %4374 = vmatpush1.bf16.msra.mxu0 %v3146
    %4375 = vmatprep.subr.bf16.mxu0 0
    %4376 = vmatpush2.bf16.msra.mxu0 0
    %4377 = vmatprep.subr.bf16.mxu0 0
    %4378 = vmatpush2.bf16.msra.mxu0 0
    %4379 = vmatprep.subr.bf16.mxu0 0
    %4380 = vmatpush2.bf16.msra.mxu0 0
    %4381 = vmatprep.subr.bf16.mxu0 0
    %4382 = vmatpush2.bf16.msra.mxu0 0
    %4383 = vmatprep.subr.bf16.mxu0 0
    %4384 = vmatpush2.bf16.msra.mxu0 0
    %4385 = vmatprep.subr.bf16.mxu0 0
    %4386 = vmatpush2.bf16.msra.mxu0 0
    %4387 = vmatprep.subr.bf16.mxu0 0
    %4388 = vmatpush2.bf16.msra.mxu0 0
    %4389 = vmatprep.subr.bf16.mxu0 0
    %4390 = vmatpush2.bf16.msra.mxu0 0
    %4391 = vmatprep.mubr.bf16.mxu0 0
    %4392 = vmatmul.mubr.bf16.gmra.mxu0 %v3742
    %v4393 = vpop.f32.mrf.mxu0
    %v4394 = vadd.f32 %v4353, %v4393
    %v4395 = vpop.f32.mrf.mxu0
    %v4396 = vadd.f32 %v4355, %v4395
    %v4397 = vpop.f32.mrf.mxu0
    %v4398 = vpop.f32.mrf.mxu0
    %4399 = vdwg.mxu0
    %4400 = vmatprep.subr.bf16.mxu0 %v2657
    %4401 = vmatpush1.bf16.msra.mxu0 %v2656
    %4402 = vmatprep.subr.bf16.mxu0 %v2645
    %4403 = vmatpush1.bf16.msra.mxu0 %v2644
    %4404 = vmatprep.subr.bf16.mxu0 %v2633
    %4405 = vmatpush1.bf16.msra.mxu0 %v2632
    %4406 = vmatprep.subr.bf16.mxu0 %v2621
    %4407 = vmatpush1.bf16.msra.mxu0 %v2620
    %4408 = vmatprep.subr.bf16.mxu0 %v2609
    %4409 = vmatpush1.bf16.msra.mxu0 %v2608
    %4410 = vmatprep.subr.bf16.mxu0 %v2597
    %4411 = vmatpush1.bf16.msra.mxu0 %v2596
    %4412 = vmatprep.subr.bf16.mxu0 %v2585
    %4413 = vmatpush1.bf16.msra.mxu0 %v2584
    %4414 = vmatprep.subr.bf16.mxu0 %v2573
    %4415 = vmatpush1.bf16.msra.mxu0 %v2572
    %4416 = vmatprep.subr.bf16.mxu0 %v2753
    %4417 = vmatpush2.bf16.msra.mxu0 %v2752
    %4418 = vmatprep.subr.bf16.mxu0 %v2741
    %4419 = vmatpush2.bf16.msra.mxu0 %v2740
    %4420 = vmatprep.subr.bf16.mxu0 %v2729
    %4421 = vmatpush2.bf16.msra.mxu0 %v2728
    %4422 = vmatprep.subr.bf16.mxu0 %v2717
    %4423 = vmatpush2.bf16.msra.mxu0 %v2716
    %4424 = vmatprep.subr.bf16.mxu0 %v2705
    %4425 = vmatpush2.bf16.msra.mxu0 %v2704
    %4426 = vmatprep.subr.bf16.mxu0 %v2693
    %4427 = vmatpush2.bf16.msra.mxu0 %v2692
    %4428 = vmatprep.subr.bf16.mxu0 %v2681
    %4429 = vmatpush2.bf16.msra.mxu0 %v2680
    %4430 = vmatprep.subr.bf16.mxu0 %v2669
    %4431 = vmatpush2.bf16.msra.mxu0 %v2668
    %4432 = vmatprep.mubr.bf16.mxu0 %v142
    %4433 = vmatmul.mubr.bf16.gmra.mxu0 %v141
    %v4434 = vpop.f32.mrf.mxu0
    %v4435 = vadd.f32 %v775, %v4434
    %v4436 = vpop.f32.mrf.mxu0
    %v4437 = vadd.f32 %v779, %v4436
    %v4438 = vpop.f32.mrf.mxu0
    %v4439 = vpop.f32.mrf.mxu0
    %4440 = vdwg.mxu0
    %4441 = vmatprep.subr.bf16.mxu0 %v2849
    %4442 = vmatpush1.bf16.msra.mxu0 %v2848
    %4443 = vmatprep.subr.bf16.mxu0 %v2837
    %4444 = vmatpush1.bf16.msra.mxu0 %v2836
    %4445 = vmatprep.subr.bf16.mxu0 %v2825
    %4446 = vmatpush1.bf16.msra.mxu0 %v2824
    %4447 = vmatprep.subr.bf16.mxu0 %v2813
    %4448 = vmatpush1.bf16.msra.mxu0 %v2812
    %4449 = vmatprep.subr.bf16.mxu0 %v2801
    %4450 = vmatpush1.bf16.msra.mxu0 %v2800
    %4451 = vmatprep.subr.bf16.mxu0 %v2789
    %4452 = vmatpush1.bf16.msra.mxu0 %v2788
    %4453 = vmatprep.subr.bf16.mxu0 %v2777
    %4454 = vmatpush1.bf16.msra.mxu0 %v2776
    %4455 = vmatprep.subr.bf16.mxu0 %v2765
    %4456 = vmatpush1.bf16.msra.mxu0 %v2764
    %4457 = vmatprep.subr.bf16.mxu0 %v2945
    %4458 = vmatpush2.bf16.msra.mxu0 %v2944
    %4459 = vmatprep.subr.bf16.mxu0 %v2933
    %4460 = vmatpush2.bf16.msra.mxu0 %v2932
    %4461 = vmatprep.subr.bf16.mxu0 %v2921
    %4462 = vmatpush2.bf16.msra.mxu0 %v2920
    %4463 = vmatprep.subr.bf16.mxu0 %v2909
    %4464 = vmatpush2.bf16.msra.mxu0 %v2908
    %4465 = vmatprep.subr.bf16.mxu0 %v2897
    %4466 = vmatpush2.bf16.msra.mxu0 %v2896
    %4467 = vmatprep.subr.bf16.mxu0 %v2885
    %4468 = vmatpush2.bf16.msra.mxu0 %v2884
    %4469 = vmatprep.subr.bf16.mxu0 %v2873
    %4470 = vmatpush2.bf16.msra.mxu0 %v2872
    %4471 = vmatprep.subr.bf16.mxu0 %v2861
    %4472 = vmatpush2.bf16.msra.mxu0 %v2860
    %4473 = vmatprep.mubr.bf16.mxu0 %v144
    %4474 = vmatmul.mubr.bf16.gmra.mxu0 %v143
    %v4475 = vpop.f32.mrf.mxu0
    %v4476 = vadd.f32 %v4435, %v4475
    %v4477 = vpop.f32.mrf.mxu0
    %v4478 = vadd.f32 %v4437, %v4477
    %v4479 = vpop.f32.mrf.mxu0
    %v4480 = vpop.f32.mrf.mxu0
    %4481 = vdwg.mxu0
    %4482 = vmatprep.subr.bf16.mxu0 %v3041
    %4483 = vmatpush1.bf16.msra.mxu0 %v3040
    %4484 = vmatprep.subr.bf16.mxu0 %v3029
    %4485 = vmatpush1.bf16.msra.mxu0 %v3028
    %4486 = vmatprep.subr.bf16.mxu0 %v3017
    %4487 = vmatpush1.bf16.msra.mxu0 %v3016
    %4488 = vmatprep.subr.bf16.mxu0 %v3005
    %4489 = vmatpush1.bf16.msra.mxu0 %v3004
    %4490 = vmatprep.subr.bf16.mxu0 %v2993
    %4491 = vmatpush1.bf16.msra.mxu0 %v2992
    %4492 = vmatprep.subr.bf16.mxu0 %v2981
    %4493 = vmatpush1.bf16.msra.mxu0 %v2980
    %4494 = vmatprep.subr.bf16.mxu0 %v2969
    %4495 = vmatpush1.bf16.msra.mxu0 %v2968
    %4496 = vmatprep.subr.bf16.mxu0 %v2957
    %4497 = vmatpush1.bf16.msra.mxu0 %v2956
    %4498 = vmatprep.subr.bf16.mxu0 %v3137
    %4499 = vmatpush2.bf16.msra.mxu0 %v3136
    %4500 = vmatprep.subr.bf16.mxu0 %v3125
    %4501 = vmatpush2.bf16.msra.mxu0 %v3124
    %4502 = vmatprep.subr.bf16.mxu0 %v3113
    %4503 = vmatpush2.bf16.msra.mxu0 %v3112
    %4504 = vmatprep.subr.bf16.mxu0 %v3101
    %4505 = vmatpush2.bf16.msra.mxu0 %v3100
    %4506 = vmatprep.subr.bf16.mxu0 %v3089
    %4507 = vmatpush2.bf16.msra.mxu0 %v3088
    %4508 = vmatprep.subr.bf16.mxu0 %v3077
    %4509 = vmatpush2.bf16.msra.mxu0 %v3076
    %4510 = vmatprep.subr.bf16.mxu0 %v3065
    %4511 = vmatpush2.bf16.msra.mxu0 %v3064
    %4512 = vmatprep.subr.bf16.mxu0 %v3053
    %4513 = vmatpush2.bf16.msra.mxu0 %v3052
    %4514 = vmatprep.mubr.bf16.mxu0 %v146
    %4515 = vmatmul.mubr.bf16.gmra.mxu0 %v145
    %v4516 = vpop.f32.mrf.mxu0
    %v4517 = vadd.f32 %v4476, %v4516
    %v4518 = vpop.f32.mrf.mxu0
    %v4519 = vadd.f32 %v4478, %v4518
    %v4520 = vpop.f32.mrf.mxu0
    %v4521 = vpop.f32.mrf.mxu0
    %4522 = vdwg.mxu0
    %4523 = vmatprep.subr.bf16.mxu0 0
    %4524 = vmatpush1.bf16.msra.mxu0 0
    %4525 = vmatprep.subr.bf16.mxu0 0
    %4526 = vmatpush1.bf16.msra.mxu0 0
    %4527 = vmatprep.subr.bf16.mxu0 0
    %4528 = vmatpush1.bf16.msra.mxu0 0
    %4529 = vmatprep.subr.bf16.mxu0 0
    %4530 = vmatpush1.bf16.msra.mxu0 0
    %4531 = vmatprep.subr.bf16.mxu0 0
    %4532 = vmatpush1.bf16.msra.mxu0 0
    %4533 = vmatprep.subr.bf16.mxu0 0
    %4534 = vmatpush1.bf16.msra.mxu0 0
    %4535 = vmatprep.subr.bf16.mxu0 0
    %4536 = vmatpush1.bf16.msra.mxu0 0
    %4537 = vmatprep.subr.bf16.mxu0 %v3149
    %4538 = vmatpush1.bf16.msra.mxu0 %v3148
    %4539 = vmatprep.subr.bf16.mxu0 0
    %4540 = vmatpush2.bf16.msra.mxu0 0
    %4541 = vmatprep.subr.bf16.mxu0 0
    %4542 = vmatpush2.bf16.msra.mxu0 0
    %4543 = vmatprep.subr.bf16.mxu0 0
    %4544 = vmatpush2.bf16.msra.mxu0 0
    %4545 = vmatprep.subr.bf16.mxu0 0
    %4546 = vmatpush2.bf16.msra.mxu0 0
    %4547 = vmatprep.subr.bf16.mxu0 0
    %4548 = vmatpush2.bf16.msra.mxu0 0
    %4549 = vmatprep.subr.bf16.mxu0 0
    %4550 = vmatpush2.bf16.msra.mxu0 0
    %4551 = vmatprep.subr.bf16.mxu0 0
    %4552 = vmatpush2.bf16.msra.mxu0 0
    %4553 = vmatprep.subr.bf16.mxu0 0
    %4554 = vmatpush2.bf16.msra.mxu0 0
    %4555 = vmatprep.mubr.bf16.mxu0 0
    %4556 = vmatmul.mubr.bf16.gmra.mxu0 %v3742
    %v4557 = vpop.f32.mrf.mxu0
    %v4558 = vadd.f32 %v4517, %v4557
    %v4559 = vpop.f32.mrf.mxu0
    %v4560 = vadd.f32 %v4519, %v4559
    %v4561 = vpop.f32.mrf.mxu0
    %v4562 = vpop.f32.mrf.mxu0
    %4563 = vdwg.mxu0
    %4564 = vmatprep.subr.bf16.mxu0 %v2659
    %4565 = vmatpush1.bf16.msra.mxu0 %v2658
    %4566 = vmatprep.subr.bf16.mxu0 %v2647
    %4567 = vmatpush1.bf16.msra.mxu0 %v2646
    %4568 = vmatprep.subr.bf16.mxu0 %v2635
    %4569 = vmatpush1.bf16.msra.mxu0 %v2634
    %4570 = vmatprep.subr.bf16.mxu0 %v2623
    %4571 = vmatpush1.bf16.msra.mxu0 %v2622
    %4572 = vmatprep.subr.bf16.mxu0 %v2611
    %4573 = vmatpush1.bf16.msra.mxu0 %v2610
    %4574 = vmatprep.subr.bf16.mxu0 %v2599
    %4575 = vmatpush1.bf16.msra.mxu0 %v2598
    %4576 = vmatprep.subr.bf16.mxu0 %v2587
    %4577 = vmatpush1.bf16.msra.mxu0 %v2586
    %4578 = vmatprep.subr.bf16.mxu0 %v2575
    %4579 = vmatpush1.bf16.msra.mxu0 %v2574
    %4580 = vmatprep.subr.bf16.mxu0 %v2755
    %4581 = vmatpush2.bf16.msra.mxu0 %v2754
    %4582 = vmatprep.subr.bf16.mxu0 %v2743
    %4583 = vmatpush2.bf16.msra.mxu0 %v2742
    %4584 = vmatprep.subr.bf16.mxu0 %v2731
    %4585 = vmatpush2.bf16.msra.mxu0 %v2730
    %4586 = vmatprep.subr.bf16.mxu0 %v2719
    %4587 = vmatpush2.bf16.msra.mxu0 %v2718
    %4588 = vmatprep.subr.bf16.mxu0 %v2707
    %4589 = vmatpush2.bf16.msra.mxu0 %v2706
    %4590 = vmatprep.subr.bf16.mxu0 %v2695
    %4591 = vmatpush2.bf16.msra.mxu0 %v2694
    %4592 = vmatprep.subr.bf16.mxu0 %v2683
    %4593 = vmatpush2.bf16.msra.mxu0 %v2682
    %4594 = vmatprep.subr.bf16.mxu0 %v2671
    %4595 = vmatpush2.bf16.msra.mxu0 %v2670
    %4596 = vmatprep.mubr.bf16.mxu0 %v142
    %4597 = vmatmul.mubr.bf16.gmra.mxu0 %v141
    %v4598 = vpop.f32.mrf.mxu0
    %v4599 = vadd.f32 %v783, %v4598
    %v4600 = vpop.f32.mrf.mxu0
    %v4601 = vadd.f32 %v787, %v4600
    %v4602 = vpop.f32.mrf.mxu0
    %v4603 = vpop.f32.mrf.mxu0
    %4604 = vdwg.mxu0
    %4605 = vmatprep.subr.bf16.mxu0 %v2851
    %4606 = vmatpush1.bf16.msra.mxu0 %v2850
    %4607 = vmatprep.subr.bf16.mxu0 %v2839
    %4608 = vmatpush1.bf16.msra.mxu0 %v2838
    %4609 = vmatprep.subr.bf16.mxu0 %v2827
    %4610 = vmatpush1.bf16.msra.mxu0 %v2826
    %4611 = vmatprep.subr.bf16.mxu0 %v2815
    %4612 = vmatpush1.bf16.msra.mxu0 %v2814
    %4613 = vmatprep.subr.bf16.mxu0 %v2803
    %4614 = vmatpush1.bf16.msra.mxu0 %v2802
    %4615 = vmatprep.subr.bf16.mxu0 %v2791
    %4616 = vmatpush1.bf16.msra.mxu0 %v2790
    %4617 = vmatprep.subr.bf16.mxu0 %v2779
    %4618 = vmatpush1.bf16.msra.mxu0 %v2778
    %4619 = vmatprep.subr.bf16.mxu0 %v2767
    %4620 = vmatpush1.bf16.msra.mxu0 %v2766
    %4621 = vmatprep.subr.bf16.mxu0 %v2947
    %4622 = vmatpush2.bf16.msra.mxu0 %v2946
    %4623 = vmatprep.subr.bf16.mxu0 %v2935
    %4624 = vmatpush2.bf16.msra.mxu0 %v2934
    %4625 = vmatprep.subr.bf16.mxu0 %v2923
    %4626 = vmatpush2.bf16.msra.mxu0 %v2922
    %4627 = vmatprep.subr.bf16.mxu0 %v2911
    %4628 = vmatpush2.bf16.msra.mxu0 %v2910
    %4629 = vmatprep.subr.bf16.mxu0 %v2899
    %4630 = vmatpush2.bf16.msra.mxu0 %v2898
    %4631 = vmatprep.subr.bf16.mxu0 %v2887
    %4632 = vmatpush2.bf16.msra.mxu0 %v2886
    %4633 = vmatprep.subr.bf16.mxu0 %v2875
    %4634 = vmatpush2.bf16.msra.mxu0 %v2874
    %4635 = vmatprep.subr.bf16.mxu0 %v2863
    %4636 = vmatpush2.bf16.msra.mxu0 %v2862
    %4637 = vmatprep.mubr.bf16.mxu0 %v144
    %4638 = vmatmul.mubr.bf16.gmra.mxu0 %v143
    %v4639 = vpop.f32.mrf.mxu0
    %v4640 = vadd.f32 %v4599, %v4639
    %v4641 = vpop.f32.mrf.mxu0
    %v4642 = vadd.f32 %v4601, %v4641
    %v4643 = vpop.f32.mrf.mxu0
    %v4644 = vpop.f32.mrf.mxu0
    %4645 = vdwg.mxu0
    %4646 = vmatprep.subr.bf16.mxu0 %v3043
    %4647 = vmatpush1.bf16.msra.mxu0 %v3042
    %4648 = vmatprep.subr.bf16.mxu0 %v3031
    %4649 = vmatpush1.bf16.msra.mxu0 %v3030
    %4650 = vmatprep.subr.bf16.mxu0 %v3019
    %4651 = vmatpush1.bf16.msra.mxu0 %v3018
    %4652 = vmatprep.subr.bf16.mxu0 %v3007
    %4653 = vmatpush1.bf16.msra.mxu0 %v3006
    %4654 = vmatprep.subr.bf16.mxu0 %v2995
    %4655 = vmatpush1.bf16.msra.mxu0 %v2994
    %4656 = vmatprep.subr.bf16.mxu0 %v2983
    %4657 = vmatpush1.bf16.msra.mxu0 %v2982
    %4658 = vmatprep.subr.bf16.mxu0 %v2971
    %4659 = vmatpush1.bf16.msra.mxu0 %v2970
    %4660 = vmatprep.subr.bf16.mxu0 %v2959
    %4661 = vmatpush1.bf16.msra.mxu0 %v2958
    %4662 = vmatprep.subr.bf16.mxu0 %v3139
    %4663 = vmatpush2.bf16.msra.mxu0 %v3138
    %4664 = vmatprep.subr.bf16.mxu0 %v3127
    %4665 = vmatpush2.bf16.msra.mxu0 %v3126
    %4666 = vmatprep.subr.bf16.mxu0 %v3115
    %4667 = vmatpush2.bf16.msra.mxu0 %v3114
    %4668 = vmatprep.subr.bf16.mxu0 %v3103
    %4669 = vmatpush2.bf16.msra.mxu0 %v3102
    %4670 = vmatprep.subr.bf16.mxu0 %v3091
    %4671 = vmatpush2.bf16.msra.mxu0 %v3090
    %4672 = vmatprep.subr.bf16.mxu0 %v3079
    %4673 = vmatpush2.bf16.msra.mxu0 %v3078
    %4674 = vmatprep.subr.bf16.mxu0 %v3067
    %4675 = vmatpush2.bf16.msra.mxu0 %v3066
    %4676 = vmatprep.subr.bf16.mxu0 %v3055
    %4677 = vmatpush2.bf16.msra.mxu0 %v3054
    %4678 = vmatprep.mubr.bf16.mxu0 %v146
    %4679 = vmatmul.mubr.bf16.gmra.mxu0 %v145
    %v4680 = vpop.f32.mrf.mxu0
    %v4681 = vadd.f32 %v4640, %v4680
    %v4682 = vpop.f32.mrf.mxu0
    %v4683 = vadd.f32 %v4642, %v4682
    %v4684 = vpop.f32.mrf.mxu0
    %v4685 = vpop.f32.mrf.mxu0
    %4686 = vdwg.mxu0
    %4687 = vmatprep.subr.bf16.mxu0 0
    %4688 = vmatpush1.bf16.msra.mxu0 0
    %4689 = vmatprep.subr.bf16.mxu0 0
    %4690 = vmatpush1.bf16.msra.mxu0 0
    %4691 = vmatprep.subr.bf16.mxu0 0
    %4692 = vmatpush1.bf16.msra.mxu0 0
    %4693 = vmatprep.subr.bf16.mxu0 0
    %4694 = vmatpush1.bf16.msra.mxu0 0
    %4695 = vmatprep.subr.bf16.mxu0 0
    %4696 = vmatpush1.bf16.msra.mxu0 0
    %4697 = vmatprep.subr.bf16.mxu0 0
    %4698 = vmatpush1.bf16.msra.mxu0 0
    %4699 = vmatprep.subr.bf16.mxu0 0
    %4700 = vmatpush1.bf16.msra.mxu0 0
    %4701 = vmatprep.subr.bf16.mxu0 %v3151
    %4702 = vmatpush1.bf16.msra.mxu0 %v3150
    %4703 = vmatprep.subr.bf16.mxu0 0
    %4704 = vmatpush2.bf16.msra.mxu0 0
    %4705 = vmatprep.subr.bf16.mxu0 0
    %4706 = vmatpush2.bf16.msra.mxu0 0
    %4707 = vmatprep.subr.bf16.mxu0 0
    %4708 = vmatpush2.bf16.msra.mxu0 0
    %4709 = vmatprep.subr.bf16.mxu0 0
    %4710 = vmatpush2.bf16.msra.mxu0 0
    %4711 = vmatprep.subr.bf16.mxu0 0
    %4712 = vmatpush2.bf16.msra.mxu0 0
    %4713 = vmatprep.subr.bf16.mxu0 0
    %4714 = vmatpush2.bf16.msra.mxu0 0
    %4715 = vmatprep.subr.bf16.mxu0 0
    %4716 = vmatpush2.bf16.msra.mxu0 0
    %4717 = vmatprep.subr.bf16.mxu0 0
    %4718 = vmatpush2.bf16.msra.mxu0 0
    %4719 = vmatprep.mubr.bf16.mxu0 0
    %4720 = vmatmul.mubr.bf16.gmra.mxu0 %v3742
    %v4721 = vpop.f32.mrf.mxu0
    %v4722 = vadd.f32 %v4681, %v4721
    %v4723 = vpop.f32.mrf.mxu0
    %v4724 = vadd.f32 %v4683, %v4723
    %v4725 = vpop.f32.mrf.mxu0
    %v4726 = vpop.f32.mrf.mxu0
    %4727 = vdwg.mxu0
    %v4728 = vmax.f32 %v3902, 0.0
    %v4729 = vmax.f32 %v3904, 0.0
    %v4730 = vmax.f32 %v4066, 0.0
    %v4731 = vmax.f32 %v4068, 0.0
    %v4732 = vmax.f32 %v4230, 0.0
    %v4733 = vmax.f32 %v4232, 0.0
    %v4734 = vmax.f32 %v4394, 0.0
    %v4735 = vmax.f32 %v4396, 0.0
    %v4736 = vmax.f32 %v4558, 0.0
    %v4737 = vmax.f32 %v4560, 0.0
    %v4738 = vmax.f32 %v4722, 0.0
    %v4739 = vmax.f32 %v4724, 0.0
    %v4740 = vpack.c.bf16 %v4728, %v4728
    %v4741 = vpack.c.bf16 %v4729, %v4729
    %v4742 = vpack.c.bf16 %v4730, %v4730
    %v4743 = vpack.c.bf16 %v4731, %v4731
    %v4744 = vpack.c.bf16 %v4732, %v4732
    %v4745 = vpack.c.bf16 %v4733, %v4733
    %v4746 = vpack.c.bf16 %v4734, %v4734
    %v4747 = vpack.c.bf16 %v4735, %v4735
    %v4748 = vpack.c.bf16 %v4736, %v4736
    %v4749 = vpack.c.bf16 %v4737, %v4737
    %v4750 = vpack.c.bf16 %v4738, %v4738
    %v4751 = vpack.c.bf16 %v4739, %v4739
    %v4752 = vld [vmem:[#allocation6] sm:$0xff]
    %v4753 = vld [vmem:[#allocation6 + $0x8] sm:$0xf]
    %v4754 = vld [vmem:[#allocation6 + $0xc] sm:$0xff]
    %v4755 = vld [vmem:[#allocation6 + $0x14] sm:$0xf]
    %v4756 = vld [vmem:[#allocation6 + $0x18] sm:$0xff]
    %v4757 = vld [vmem:[#allocation6 + $0x20] sm:$0xf]
    %v4758 = vld [vmem:[#allocation6 + $0x24] sm:$0xff]
    %v4759 = vld [vmem:[#allocation6 + $0x2c] sm:$0xf]
    %v4760 = vld [vmem:[#allocation6 + $0x30] sm:$0xff]
    %v4761 = vld [vmem:[#allocation6 + $0x38] sm:$0xf]
    %v4762 = vld [vmem:[#allocation6 + $0x3c] sm:$0xff]
    %v4763 = vld [vmem:[#allocation6 + $0x44] sm:$0xf]
    %v4764 = vld [vmem:[#allocation6 + $0x48] sm:$0xff]
    %v4765 = vld [vmem:[#allocation6 + $0x50] sm:$0xf]
    %v4766 = vld [vmem:[#allocation6 + $0x54] sm:$0xff]
    %v4767 = vld [vmem:[#allocation6 + $0x5c] sm:$0xf]
    %v4768 = vld [vmem:[#allocation6 + $0x60] sm:$0xff]
    %v4769 = vld [vmem:[#allocation6 + $0x68] sm:$0xf]
    %v4770 = vld [vmem:[#allocation6 + $0x6c] sm:$0xff]
    %v4771 = vld [vmem:[#allocation6 + $0x74] sm:$0xf]
    %v4772 = vld [vmem:[#allocation6 + $0x78] sm:$0xff]
    %v4773 = vld [vmem:[#allocation6 + $0x80] sm:$0xf]
    %v4774 = vld [vmem:[#allocation6 + $0x84] sm:$0xff]
    %v4775 = vld [vmem:[#allocation6 + $0x8c] sm:$0xf]
    %v4776 = vld [vmem:[#allocation6 + $0x90] sm:$0xff]
    %v4777 = vld [vmem:[#allocation6 + $0x98] sm:$0xf]
    %v4778 = vld [vmem:[#allocation6 + $0x9c] sm:$0xff]
    %v4779 = vld [vmem:[#allocation6 + $0xa4] sm:$0xf]
    %v4780 = vld [vmem:[#allocation6 + $0xa8] sm:$0xff]
    %v4781 = vld [vmem:[#allocation6 + $0xb0] sm:$0xf]
    %v4782 = vld [vmem:[#allocation6 + $0xb4] sm:$0xff]
    %v4783 = vld [vmem:[#allocation6 + $0xbc] sm:$0xf]
    %v4784 = vld [vmem:[#allocation6 + $0xc0] sm:$0xff]
    %v4785 = vld [vmem:[#allocation6 + $0xc8] sm:$0xf]
    %v4786 = vld [vmem:[#allocation6 + $0xcc] sm:$0xff]
    %v4787 = vld [vmem:[#allocation6 + $0xd4] sm:$0xf]
    %v4788 = vld [vmem:[#allocation6 + $0xd8] sm:$0xff]
    %v4789 = vld [vmem:[#allocation6 + $0xe0] sm:$0xf]
    %v4790 = vld [vmem:[#allocation6 + $0xe4] sm:$0xff]
    %v4791 = vld [vmem:[#allocation6 + $0xec] sm:$0xf]
    %v4792 = vld [vmem:[#allocation6 + $0xf0] sm:$0xff]
    %v4793 = vld [vmem:[#allocation6 + $0xf8] sm:$0xf]
    %v4794 = vld [vmem:[#allocation6 + $0xfc] sm:$0xff]
    %v4795 = vld [vmem:[#allocation6 + $0x104] sm:$0xf]
    %v4796 = vld [vmem:[#allocation6 + $0x108] sm:$0xff]
    %v4797 = vld [vmem:[#allocation6 + $0x110] sm:$0xf]
    %v4798 = vld [vmem:[#allocation6 + $0x114] sm:$0xff]
    %v4799 = vld [vmem:[#allocation6 + $0x11c] sm:$0xf]
    %v4800 = vld [vmem:[#allocation6 + $0x120] sm:$0xff]
    %v4801 = vld [vmem:[#allocation6 + $0x128] sm:$0xf]
    %v4802 = vld [vmem:[#allocation6 + $0x12c] sm:$0xff]
    %v4803 = vld [vmem:[#allocation6 + $0x134] sm:$0xf]
    %v4804 = vld [vmem:[#allocation6 + $0x138] sm:$0xff]
    %v4805 = vld [vmem:[#allocation6 + $0x140] sm:$0xf]
    %v4806 = vld [vmem:[#allocation6 + $0x144] sm:$0xff]
    %v4807 = vld [vmem:[#allocation6 + $0x14c] sm:$0xf]
    %v4808 = vld [vmem:[#allocation6 + $0x150] sm:$0xff]
    %v4809 = vld [vmem:[#allocation6 + $0x158] sm:$0xf]
    %v4810 = vld [vmem:[#allocation6 + $0x15c] sm:$0xff]
    %v4811 = vld [vmem:[#allocation6 + $0x164] sm:$0xf]
    %v4812 = vld [vmem:[#allocation6 + $0x168] sm:$0xff]
    %v4813 = vld [vmem:[#allocation6 + $0x170] sm:$0xf]
    %v4814 = vld [vmem:[#allocation6 + $0x174] sm:$0xff]
    %v4815 = vld [vmem:[#allocation6 + $0x17c] sm:$0xf]
    %v4816 = vld [vmem:[#allocation6 + $0x180] sm:$0xff]
    %v4817 = vld [vmem:[#allocation6 + $0x188] sm:$0xf]
    %v4818 = vld [vmem:[#allocation6 + $0x18c] sm:$0xff]
    %v4819 = vld [vmem:[#allocation6 + $0x194] sm:$0xf]
    %v4820 = vld [vmem:[#allocation6 + $0x198] sm:$0xff]
    %v4821 = vld [vmem:[#allocation6 + $0x1a0] sm:$0xf]
    %v4822 = vld [vmem:[#allocation6 + $0x1a4] sm:$0xff]
    %v4823 = vld [vmem:[#allocation6 + $0x1ac] sm:$0xf]
    %v4824 = vld [vmem:[#allocation6 + $0x1b0] sm:$0xff]
    %v4825 = vld [vmem:[#allocation6 + $0x1b8] sm:$0xf]
    %v4826 = vld [vmem:[#allocation6 + $0x1bc] sm:$0xff]
    %v4827 = vld [vmem:[#allocation6 + $0x1c4] sm:$0xf]
    %v4828 = vld [vmem:[#allocation6 + $0x1c8] sm:$0xff]
    %v4829 = vld [vmem:[#allocation6 + $0x1d0] sm:$0xf]
    %v4830 = vld [vmem:[#allocation6 + $0x1d4] sm:$0xff]
    %v4831 = vld [vmem:[#allocation6 + $0x1dc] sm:$0xf]
    %v4832 = vld [vmem:[#allocation6 + $0x1e0] sm:$0xff]
    %v4833 = vld [vmem:[#allocation6 + $0x1e8] sm:$0xf]
    %v4834 = vld [vmem:[#allocation6 + $0x1ec] sm:$0xff]
    %v4835 = vld [vmem:[#allocation6 + $0x1f4] sm:$0xf]
    %v4836 = vld [vmem:[#allocation6 + $0x1f8] sm:$0xff]
    %v4837 = vld [vmem:[#allocation6 + $0x200] sm:$0xf]
    %v4838 = vld [vmem:[#allocation6 + $0x204] sm:$0xff]
    %v4839 = vld [vmem:[#allocation6 + $0x20c] sm:$0xf]
    %v4840 = vld [vmem:[#allocation6 + $0x210] sm:$0xff]
    %v4841 = vld [vmem:[#allocation6 + $0x218] sm:$0xf]
    %v4842 = vld [vmem:[#allocation6 + $0x21c] sm:$0xff]
    %v4843 = vld [vmem:[#allocation6 + $0x224] sm:$0xf]
    %v4844 = vld [vmem:[#allocation6 + $0x228] sm:$0xff]
    %v4845 = vld [vmem:[#allocation6 + $0x230] sm:$0xf]
    %v4846 = vld [vmem:[#allocation6 + $0x234] sm:$0xff]
    %v4847 = vld [vmem:[#allocation6 + $0x23c] sm:$0xf]
    %v4848 = vld [vmem:[#allocation6 + $0x240] sm:$0xff]
    %v4849 = vld [vmem:[#allocation6 + $0x248] sm:$0xf]
    %v4850 = vld [vmem:[#allocation6 + $0x24c] sm:$0xff]
    %v4851 = vld [vmem:[#allocation6 + $0x254] sm:$0xf]
    %v4852 = vld [vmem:[#allocation6 + $0x258] sm:$0xff]
    %v4853 = vld [vmem:[#allocation6 + $0x260] sm:$0xf]
    %v4854 = vld [vmem:[#allocation6 + $0x264] sm:$0xff]
    %v4855 = vld [vmem:[#allocation6 + $0x26c] sm:$0xf]
    %v4856 = vld [vmem:[#allocation6 + $0x270] sm:$0xff]
    %v4857 = vld [vmem:[#allocation6 + $0x278] sm:$0xf]
    %v4858 = vld [vmem:[#allocation6 + $0x27c] sm:$0xff]
    %v4859 = vld [vmem:[#allocation6 + $0x284] sm:$0xf]
    %v4860 = vld [vmem:[#allocation6 + $0x288] sm:$0xff]
    %v4861 = vld [vmem:[#allocation6 + $0x290] sm:$0xf]
    %v4862 = vld [vmem:[#allocation6 + $0x294] sm:$0xff]
    %v4863 = vld [vmem:[#allocation6 + $0x29c] sm:$0xf]
    %v4864 = vld [vmem:[#allocation6 + $0x2a0] sm:$0xff]
    %v4865 = vld [vmem:[#allocation6 + $0x2a8] sm:$0xf]
    %v4866 = vld [vmem:[#allocation6 + $0x2ac] sm:$0xff]
    %v4867 = vld [vmem:[#allocation6 + $0x2b4] sm:$0xf]
    %v4868 = vld [vmem:[#allocation6 + $0x2b8] sm:$0xff]
    %v4869 = vld [vmem:[#allocation6 + $0x2c0] sm:$0xf]
    %v4870 = vld [vmem:[#allocation6 + $0x2c4] sm:$0xff]
    %v4871 = vld [vmem:[#allocation6 + $0x2cc] sm:$0xf]
    %v4872 = vld [vmem:[#allocation6 + $0x2d0] sm:$0xff]
    %v4873 = vld [vmem:[#allocation6 + $0x2d8] sm:$0xf]
    %v4874 = vld [vmem:[#allocation6 + $0x2dc] sm:$0xff]
    %v4875 = vld [vmem:[#allocation6 + $0x2e4] sm:$0xf]
    %v4876 = vld [vmem:[#allocation6 + $0x2e8] sm:$0xff]
    %v4877 = vld [vmem:[#allocation6 + $0x2f0] sm:$0xf]
    %v4878 = vld [vmem:[#allocation6 + $0x2f4] sm:$0xff]
    %v4879 = vld [vmem:[#allocation6 + $0x2fc] sm:$0xf]
    %v4880 = vld [vmem:[#allocation6 + $0x300] sm:$0xff]
    %v4881 = vld [vmem:[#allocation6 + $0x308] sm:$0xf]
    %v4882 = vld [vmem:[#allocation6 + $0x30c] sm:$0xff]
    %v4883 = vld [vmem:[#allocation6 + $0x314] sm:$0xf]
    %v4884 = vld [vmem:[#allocation6 + $0x318] sm:$0xff]
    %v4885 = vld [vmem:[#allocation6 + $0x320] sm:$0xf]
    %v4886 = vld [vmem:[#allocation6 + $0x324] sm:$0xff]
    %v4887 = vld [vmem:[#allocation6 + $0x32c] sm:$0xf]
    %v4888 = vld [vmem:[#allocation6 + $0x330] sm:$0xff]
    %v4889 = vld [vmem:[#allocation6 + $0x338] sm:$0xf]
    %v4890 = vld [vmem:[#allocation6 + $0x33c] sm:$0xff]
    %v4891 = vld [vmem:[#allocation6 + $0x344] sm:$0xf]
    %v4892 = vld [vmem:[#allocation6 + $0x348] sm:$0xff]
    %v4893 = vld [vmem:[#allocation6 + $0x350] sm:$0xf]
    %v4894 = vld [vmem:[#allocation6 + $0x354] sm:$0xff]
    %v4895 = vld [vmem:[#allocation6 + $0x35c] sm:$0xf]
    %v4896 = vld [vmem:[#allocation6 + $0x360] sm:$0xff]
    %v4897 = vld [vmem:[#allocation6 + $0x368] sm:$0xf]
    %v4898 = vld [vmem:[#allocation6 + $0x36c] sm:$0xff]
    %v4899 = vld [vmem:[#allocation6 + $0x374] sm:$0xf]
    %v4900 = vld [vmem:[#allocation6 + $0x378] sm:$0xff]
    %v4901 = vld [vmem:[#allocation6 + $0x380] sm:$0xf]
    %v4902 = vld [vmem:[#allocation6 + $0x384] sm:$0xff]
    %v4903 = vld [vmem:[#allocation6 + $0x38c] sm:$0xf]
    %v4904 = vld [vmem:[#allocation6 + $0x390] sm:$0xff]
    %v4905 = vld [vmem:[#allocation6 + $0x398] sm:$0xf]
    %v4906 = vld [vmem:[#allocation6 + $0x39c] sm:$0xff]
    %v4907 = vld [vmem:[#allocation6 + $0x3a4] sm:$0xf]
    %v4908 = vld [vmem:[#allocation6 + $0x3a8] sm:$0xff]
    %v4909 = vld [vmem:[#allocation6 + $0x3b0] sm:$0xf]
    %v4910 = vld [vmem:[#allocation6 + $0x3b4] sm:$0xff]
    %v4911 = vld [vmem:[#allocation6 + $0x3bc] sm:$0xf]
    %v4912 = vld [vmem:[#allocation6 + $0x3c0] sm:$0xff]
    %v4913 = vld [vmem:[#allocation6 + $0x3c8] sm:$0xf]
    %v4914 = vld [vmem:[#allocation6 + $0x3cc] sm:$0xff]
    %v4915 = vld [vmem:[#allocation6 + $0x3d4] sm:$0xf]
    %v4916 = vld [vmem:[#allocation6 + $0x3d8] sm:$0xff]
    %v4917 = vld [vmem:[#allocation6 + $0x3e0] sm:$0xf]
    %v4918 = vld [vmem:[#allocation6 + $0x3e4] sm:$0xff]
    %v4919 = vld [vmem:[#allocation6 + $0x3ec] sm:$0xf]
    %v4920 = vld [vmem:[#allocation6 + $0x3f0] sm:$0xff]
    %v4921 = vld [vmem:[#allocation6 + $0x3f8] sm:$0xf]
    %v4922 = vld [vmem:[#allocation6 + $0x3fc] sm:$0xff]
    %v4923 = vld [vmem:[#allocation6 + $0x404] sm:$0xf]
    %v4924 = vld [vmem:[#allocation6 + $0x408] sm:$0xff]
    %v4925 = vld [vmem:[#allocation6 + $0x410] sm:$0xf]
    %v4926 = vld [vmem:[#allocation6 + $0x414] sm:$0xff]
    %v4927 = vld [vmem:[#allocation6 + $0x41c] sm:$0xf]
    %v4928 = vld [vmem:[#allocation6 + $0x420] sm:$0xff]
    %v4929 = vld [vmem:[#allocation6 + $0x428] sm:$0xf]
    %v4930 = vld [vmem:[#allocation6 + $0x42c] sm:$0xff]
    %v4931 = vld [vmem:[#allocation6 + $0x434] sm:$0xf]
    %v4932 = vld [vmem:[#allocation6 + $0x438] sm:$0xff]
    %v4933 = vld [vmem:[#allocation6 + $0x440] sm:$0xf]
    %v4934 = vld [vmem:[#allocation6 + $0x444] sm:$0xff]
    %v4935 = vld [vmem:[#allocation6 + $0x44c] sm:$0xf]
    %v4936 = vld [vmem:[#allocation6 + $0x450] sm:$0xff]
    %v4937 = vld [vmem:[#allocation6 + $0x458] sm:$0xf]
    %v4938 = vld [vmem:[#allocation6 + $0x45c] sm:$0xff]
    %v4939 = vld [vmem:[#allocation6 + $0x464] sm:$0xf]
    %v4940 = vld [vmem:[#allocation6 + $0x468] sm:$0xff]
    %v4941 = vld [vmem:[#allocation6 + $0x470] sm:$0xf]
    %v4942 = vld [vmem:[#allocation6 + $0x474] sm:$0xff]
    %v4943 = vld [vmem:[#allocation6 + $0x47c] sm:$0xf]
    %v4944 = vld [vmem:[#allocation6 + $0x480] sm:$0xff]
    %v4945 = vld [vmem:[#allocation6 + $0x488] sm:$0xf]
    %v4946 = vld [vmem:[#allocation6 + $0x48c] sm:$0xff]
    %v4947 = vld [vmem:[#allocation6 + $0x494] sm:$0xf]
    %v4948 = vld [vmem:[#allocation6 + $0x498] sm:$0xff]
    %v4949 = vld [vmem:[#allocation6 + $0x4a0] sm:$0xf]
    %v4950 = vld [vmem:[#allocation6 + $0x4a4] sm:$0xff]
    %v4951 = vld [vmem:[#allocation6 + $0x4ac] sm:$0xf]
    %v4952 = vld [vmem:[#allocation6 + $0x4b0] sm:$0xff]
    %v4953 = vld [vmem:[#allocation6 + $0x4b8] sm:$0xf]
    %v4954 = vld [vmem:[#allocation6 + $0x4bc] sm:$0xff]
    %v4955 = vld [vmem:[#allocation6 + $0x4c4] sm:$0xf]
    %v4956 = vld [vmem:[#allocation6 + $0x4c8] sm:$0xff]
    %v4957 = vld [vmem:[#allocation6 + $0x4d0] sm:$0xf]
    %v4958 = vld [vmem:[#allocation6 + $0x4d4] sm:$0xff]
    %v4959 = vld [vmem:[#allocation6 + $0x4dc] sm:$0xf]
    %v4960 = vld [vmem:[#allocation6 + $0x4e0] sm:$0xff]
    %v4961 = vld [vmem:[#allocation6 + $0x4e8] sm:$0xf]
    %v4962 = vld [vmem:[#allocation6 + $0x4ec] sm:$0xff]
    %v4963 = vld [vmem:[#allocation6 + $0x4f4] sm:$0xf]
    %v4964 = vld [vmem:[#allocation6 + $0x4f8] sm:$0xff]
    %v4965 = vld [vmem:[#allocation6 + $0x500] sm:$0xf]
    %v4966 = vld [vmem:[#allocation6 + $0x504] sm:$0xff]
    %v4967 = vld [vmem:[#allocation6 + $0x50c] sm:$0xf]
    %v4968 = vld [vmem:[#allocation6 + $0x510] sm:$0xff]
    %v4969 = vld [vmem:[#allocation6 + $0x518] sm:$0xf]
    %v4970 = vld [vmem:[#allocation6 + $0x51c] sm:$0xff]
    %v4971 = vld [vmem:[#allocation6 + $0x524] sm:$0xf]
    %v4972 = vld [vmem:[#allocation6 + $0x528] sm:$0xff]
    %v4973 = vld [vmem:[#allocation6 + $0x530] sm:$0xf]
    %v4974 = vld [vmem:[#allocation6 + $0x534] sm:$0xff]
    %v4975 = vld [vmem:[#allocation6 + $0x53c] sm:$0xf]
    %v4976 = vld [vmem:[#allocation6 + $0x540] sm:$0xff]
    %v4977 = vld [vmem:[#allocation6 + $0x548] sm:$0xf]
    %v4978 = vld [vmem:[#allocation6 + $0x54c] sm:$0xff]
    %v4979 = vld [vmem:[#allocation6 + $0x554] sm:$0xf]
    %v4980 = vld [vmem:[#allocation6 + $0x558] sm:$0xff]
    %v4981 = vld [vmem:[#allocation6 + $0x560] sm:$0xf]
    %v4982 = vld [vmem:[#allocation6 + $0x564] sm:$0xff]
    %v4983 = vld [vmem:[#allocation6 + $0x56c] sm:$0xf]
    %v4984 = vld [vmem:[#allocation6 + $0x570] sm:$0xff]
    %v4985 = vld [vmem:[#allocation6 + $0x578] sm:$0xf]
    %v4986 = vld [vmem:[#allocation6 + $0x57c] sm:$0xff]
    %v4987 = vld [vmem:[#allocation6 + $0x584] sm:$0xf]
    %v4988 = vld [vmem:[#allocation6 + $0x588] sm:$0xff]
    %v4989 = vld [vmem:[#allocation6 + $0x590] sm:$0xf]
    %v4990 = vld [vmem:[#allocation6 + $0x594] sm:$0xff]
    %v4991 = vld [vmem:[#allocation6 + $0x59c] sm:$0xf]
    %v4992 = vld [vmem:[#allocation6 + $0x5a0] sm:$0xff]
    %v4993 = vld [vmem:[#allocation6 + $0x5a8] sm:$0xf]
    %v4994 = vld [vmem:[#allocation6 + $0x5ac] sm:$0xff]
    %v4995 = vld [vmem:[#allocation6 + $0x5b4] sm:$0xf]
    %v4996 = vld [vmem:[#allocation6 + $0x5b8] sm:$0xff]
    %v4997 = vld [vmem:[#allocation6 + $0x5c0] sm:$0xf]
    %v4998 = vld [vmem:[#allocation6 + $0x5c4] sm:$0xff]
    %v4999 = vld [vmem:[#allocation6 + $0x5cc] sm:$0xf]
    %v5000 = vld [vmem:[#allocation6 + $0x5d0] sm:$0xff]
    %v5001 = vld [vmem:[#allocation6 + $0x5d8] sm:$0xf]
    %v5002 = vld [vmem:[#allocation6 + $0x5dc] sm:$0xff]
    %v5003 = vld [vmem:[#allocation6 + $0x5e4] sm:$0xf]
    %v5004 = vld [vmem:[#allocation6 + $0x5e8] sm:$0xff]
    %v5005 = vld [vmem:[#allocation6 + $0x5f0] sm:$0xf]
    %v5006 = vld [vmem:[#allocation6 + $0x5f4] sm:$0xff]
    %v5007 = vld [vmem:[#allocation6 + $0x5fc] sm:$0xf]
    %v5008 = vld [vmem:[#allocation6 + $0x600] sm:$0xff]
    %v5009 = vld [vmem:[#allocation6 + $0x608] sm:$0xf]
    %v5010 = vld [vmem:[#allocation6 + $0x60c] sm:$0xff]
    %v5011 = vld [vmem:[#allocation6 + $0x614] sm:$0xf]
    %v5012 = vld [vmem:[#allocation6 + $0x618] sm:$0xff]
    %v5013 = vld [vmem:[#allocation6 + $0x620] sm:$0xf]
    %v5014 = vld [vmem:[#allocation6 + $0x624] sm:$0xff]
    %v5015 = vld [vmem:[#allocation6 + $0x62c] sm:$0xf]
    %v5016 = vld [vmem:[#allocation6 + $0x630] sm:$0xff]
    %v5017 = vld [vmem:[#allocation6 + $0x638] sm:$0xf]
    %v5018 = vld [vmem:[#allocation6 + $0x63c] sm:$0xff]
    %v5019 = vld [vmem:[#allocation6 + $0x644] sm:$0xf]
    %v5020 = vld [vmem:[#allocation6 + $0x648] sm:$0xff]
    %v5021 = vld [vmem:[#allocation6 + $0x650] sm:$0xf]
    %v5022 = vld [vmem:[#allocation6 + $0x654] sm:$0xff]
    %v5023 = vld [vmem:[#allocation6 + $0x65c] sm:$0xf]
    %v5024 = vld [vmem:[#allocation6 + $0x660] sm:$0xff]
    %v5025 = vld [vmem:[#allocation6 + $0x668] sm:$0xf]
    %v5026 = vld [vmem:[#allocation6 + $0x66c] sm:$0xff]
    %v5027 = vld [vmem:[#allocation6 + $0x674] sm:$0xf]
    %v5028 = vld [vmem:[#allocation6 + $0x678] sm:$0xff]
    %v5029 = vld [vmem:[#allocation6 + $0x680] sm:$0xf]
    %v5030 = vld [vmem:[#allocation6 + $0x684] sm:$0xff]
    %v5031 = vld [vmem:[#allocation6 + $0x68c] sm:$0xf]
    %v5032 = vld [vmem:[#allocation6 + $0x690] sm:$0xff]
    %v5033 = vld [vmem:[#allocation6 + $0x698] sm:$0xf]
    %v5034 = vld [vmem:[#allocation6 + $0x69c] sm:$0xff]
    %v5035 = vld [vmem:[#allocation6 + $0x6a4] sm:$0xf]
    %v5036 = vld [vmem:[#allocation6 + $0x6a8] sm:$0xff]
    %v5037 = vld [vmem:[#allocation6 + $0x6b0] sm:$0xf]
    %v5038 = vld [vmem:[#allocation6 + $0x6b4] sm:$0xff]
    %v5039 = vld [vmem:[#allocation6 + $0x6bc] sm:$0xf]
    %v5040 = vld [vmem:[#allocation6 + $0x6c0] sm:$0xff]
    %v5041 = vld [vmem:[#allocation6 + $0x6c8] sm:$0xf]
    %v5042 = vld [vmem:[#allocation6 + $0x6cc] sm:$0xff]
    %v5043 = vld [vmem:[#allocation6 + $0x6d4] sm:$0xf]
    %v5044 = vld [vmem:[#allocation6 + $0x6d8] sm:$0xff]
    %v5045 = vld [vmem:[#allocation6 + $0x6e0] sm:$0xf]
    %v5046 = vld [vmem:[#allocation6 + $0x6e4] sm:$0xff]
    %v5047 = vld [vmem:[#allocation6 + $0x6ec] sm:$0xf]
    %v5048 = vld [vmem:[#allocation6 + $0x6f0] sm:$0xff]
    %v5049 = vld [vmem:[#allocation6 + $0x6f8] sm:$0xf]
    %v5050 = vld [vmem:[#allocation6 + $0x6fc] sm:$0xff]
    %v5051 = vld [vmem:[#allocation6 + $0x704] sm:$0xf]
    %v5052 = vld [vmem:[#allocation6 + $0x708] sm:$0xff]
    %v5053 = vld [vmem:[#allocation6 + $0x710] sm:$0xf]
    %v5054 = vld [vmem:[#allocation6 + $0x714] sm:$0xff]
    %v5055 = vld [vmem:[#allocation6 + $0x71c] sm:$0xf]
    %v5056 = vld [vmem:[#allocation6 + $0x720] sm:$0xff]
    %v5057 = vld [vmem:[#allocation6 + $0x728] sm:$0xf]
    %v5058 = vld [vmem:[#allocation6 + $0x72c] sm:$0xff]
    %v5059 = vld [vmem:[#allocation6 + $0x734] sm:$0xf]
    %v5060 = vld [vmem:[#allocation6 + $0x738] sm:$0xff]
    %v5061 = vld [vmem:[#allocation6 + $0x740] sm:$0xf]
    %v5062 = vld [vmem:[#allocation6 + $0x744] sm:$0xff]
    %v5063 = vld [vmem:[#allocation6 + $0x74c] sm:$0xf]
    %v5064 = vld [vmem:[#allocation6 + $0x750] sm:$0xff]
    %v5065 = vld [vmem:[#allocation6 + $0x758] sm:$0xf]
    %v5066 = vld [vmem:[#allocation6 + $0x75c] sm:$0xff]
    %v5067 = vld [vmem:[#allocation6 + $0x764] sm:$0xf]
    %v5068 = vld [vmem:[#allocation6 + $0x768] sm:$0xff]
    %v5069 = vld [vmem:[#allocation6 + $0x770] sm:$0xf]
    %v5070 = vld [vmem:[#allocation6 + $0x774] sm:$0xff]
    %v5071 = vld [vmem:[#allocation6 + $0x77c] sm:$0xf]
    %v5072 = vld [vmem:[#allocation6 + $0x780] sm:$0xff]
    %v5073 = vld [vmem:[#allocation6 + $0x788] sm:$0xf]
    %v5074 = vld [vmem:[#allocation6 + $0x78c] sm:$0xff]
    %v5075 = vld [vmem:[#allocation6 + $0x794] sm:$0xf]
    %v5076 = vld [vmem:[#allocation6 + $0x798] sm:$0xff]
    %v5077 = vld [vmem:[#allocation6 + $0x7a0] sm:$0xf]
    %v5078 = vld [vmem:[#allocation6 + $0x7a4] sm:$0xff]
    %v5079 = vld [vmem:[#allocation6 + $0x7ac] sm:$0xf]
    %v5080 = vld [vmem:[#allocation6 + $0x7b0] sm:$0xff]
    %v5081 = vld [vmem:[#allocation6 + $0x7b8] sm:$0xf]
    %v5082 = vld [vmem:[#allocation6 + $0x7bc] sm:$0xff]
    %v5083 = vld [vmem:[#allocation6 + $0x7c4] sm:$0xf]
    %v5084 = vld [vmem:[#allocation6 + $0x7c8] sm:$0xff]
    %v5085 = vld [vmem:[#allocation6 + $0x7d0] sm:$0xf]
    %v5086 = vld [vmem:[#allocation6 + $0x7d4] sm:$0xff]
    %v5087 = vld [vmem:[#allocation6 + $0x7dc] sm:$0xf]
    %v5088 = vld [vmem:[#allocation6 + $0x7e0] sm:$0xff]
    %v5089 = vld [vmem:[#allocation6 + $0x7e8] sm:$0xf]
    %v5090 = vld [vmem:[#allocation6 + $0x7ec] sm:$0xff]
    %v5091 = vld [vmem:[#allocation6 + $0x7f4] sm:$0xf]
    %v5092 = vld [vmem:[#allocation6 + $0x7f8] sm:$0xff]
    %v5093 = vld [vmem:[#allocation6 + $0x800] sm:$0xf]
    %v5094 = vld [vmem:[#allocation6 + $0x804] sm:$0xff]
    %v5095 = vld [vmem:[#allocation6 + $0x80c] sm:$0xf]
    %v5096 = vld [vmem:[#allocation6 + $0x810] sm:$0xff]
    %v5097 = vld [vmem:[#allocation6 + $0x818] sm:$0xf]
    %v5098 = vld [vmem:[#allocation6 + $0x81c] sm:$0xff]
    %v5099 = vld [vmem:[#allocation6 + $0x824] sm:$0xf]
    %v5100 = vld [vmem:[#allocation6 + $0x828] sm:$0xff]
    %v5101 = vld [vmem:[#allocation6 + $0x830] sm:$0xf]
    %v5102 = vld [vmem:[#allocation6 + $0x834] sm:$0xff]
    %v5103 = vld [vmem:[#allocation6 + $0x83c] sm:$0xf]
    %v5104 = vld [vmem:[#allocation6 + $0x840] sm:$0xff]
    %v5105 = vld [vmem:[#allocation6 + $0x848] sm:$0xf]
    %v5106 = vld [vmem:[#allocation6 + $0x84c] sm:$0xff]
    %v5107 = vld [vmem:[#allocation6 + $0x854] sm:$0xf]
    %v5108 = vld [vmem:[#allocation6 + $0x858] sm:$0xff]
    %v5109 = vld [vmem:[#allocation6 + $0x860] sm:$0xf]
    %v5110 = vld [vmem:[#allocation6 + $0x864] sm:$0xff]
    %v5111 = vld [vmem:[#allocation6 + $0x86c] sm:$0xf]
    %v5112 = vld [vmem:[#allocation6 + $0x870] sm:$0xff]
    %v5113 = vld [vmem:[#allocation6 + $0x878] sm:$0xf]
    %v5114 = vld [vmem:[#allocation6 + $0x87c] sm:$0xff]
    %v5115 = vld [vmem:[#allocation6 + $0x884] sm:$0xf]
    %v5116 = vld [vmem:[#allocation6 + $0x888] sm:$0xff]
    %v5117 = vld [vmem:[#allocation6 + $0x890] sm:$0xf]
    %v5118 = vld [vmem:[#allocation6 + $0x894] sm:$0xff]
    %v5119 = vld [vmem:[#allocation6 + $0x89c] sm:$0xf]
    %v5120 = vld [vmem:[#allocation6 + $0x8a0] sm:$0xff]
    %v5121 = vld [vmem:[#allocation6 + $0x8a8] sm:$0xf]
    %v5122 = vld [vmem:[#allocation6 + $0x8ac] sm:$0xff]
    %v5123 = vld [vmem:[#allocation6 + $0x8b4] sm:$0xf]
    %v5124 = vld [vmem:[#allocation6 + $0x8b8] sm:$0xff]
    %v5125 = vld [vmem:[#allocation6 + $0x8c0] sm:$0xf]
    %v5126 = vld [vmem:[#allocation6 + $0x8c4] sm:$0xff]
    %v5127 = vld [vmem:[#allocation6 + $0x8cc] sm:$0xf]
    %v5128 = vld [vmem:[#allocation6 + $0x8d0] sm:$0xff]
    %v5129 = vld [vmem:[#allocation6 + $0x8d8] sm:$0xf]
    %v5130 = vld [vmem:[#allocation6 + $0x8dc] sm:$0xff]
    %v5131 = vld [vmem:[#allocation6 + $0x8e4] sm:$0xf]
    %v5132 = vld [vmem:[#allocation6 + $0x8e8] sm:$0xff]
    %v5133 = vld [vmem:[#allocation6 + $0x8f0] sm:$0xf]
    %v5134 = vld [vmem:[#allocation6 + $0x8f4] sm:$0xff]
    %v5135 = vld [vmem:[#allocation6 + $0x8fc] sm:$0xf]
    %v5136 = vld [vmem:[#allocation7] sm:$0x7]
    %v5138 = vlaneseq
    %v5139 = vshrl.u32 %v5138, 7
    %v5140 = vsub.s32 0, %v5139
    %v5141 = vrot.slane %v5136, %v5140
    %v5142 = vlaneseq
    %v5143 = vshrl.u32 %v5142, 7
    %v5144 = vsub.s32 1, %v5143
    %v5145 = vrot.slane %v5136, %v5144
    %v5146 = vlaneseq
    %v5147 = vshrl.u32 %v5146, 7
    %v5148 = vsub.s32 2, %v5147
    %v5149 = vrot.slane %v5136, %v5148
    %v5537 = vunpack.c.l.b16 %v4752
    %v5538 = vunpack.c.h.b16 %v4752
    %v5539 = vunpack.c.l.b16 %v4753
    %v5540 = vunpack.c.l.b16 %v4754
    %v5541 = vunpack.c.h.b16 %v4754
    %v5542 = vunpack.c.l.b16 %v4755
    %v5543 = vunpack.c.l.b16 %v4756
    %v5544 = vunpack.c.h.b16 %v4756
    %v5545 = vunpack.c.l.b16 %v4757
    %v5546 = vunpack.c.l.b16 %v4758
    %v5547 = vunpack.c.h.b16 %v4758
    %v5548 = vunpack.c.l.b16 %v4759
    %v5549 = vunpack.c.l.b16 %v4760
    %v5550 = vunpack.c.h.b16 %v4760
    %v5551 = vunpack.c.l.b16 %v4761
    %v5552 = vunpack.c.l.b16 %v4762
    %v5553 = vunpack.c.h.b16 %v4762
    %v5554 = vunpack.c.l.b16 %v4763
    %v5555 = vunpack.c.l.b16 %v4764
    %v5556 = vunpack.c.h.b16 %v4764
    %v5557 = vunpack.c.l.b16 %v4765
    %v5558 = vunpack.c.l.b16 %v4766
    %v5559 = vunpack.c.h.b16 %v4766
    %v5560 = vunpack.c.l.b16 %v4767
    %v5561 = vunpack.c.l.b16 %v4768
    %v5562 = vunpack.c.h.b16 %v4768
    %v5563 = vunpack.c.l.b16 %v4769
    %v5564 = vunpack.c.l.b16 %v4770
    %v5565 = vunpack.c.h.b16 %v4770
    %v5566 = vunpack.c.l.b16 %v4771
    %v5567 = vunpack.c.l.b16 %v4772
    %v5568 = vunpack.c.h.b16 %v4772
    %v5569 = vunpack.c.l.b16 %v4773
    %v5570 = vunpack.c.l.b16 %v4774
    %v5571 = vunpack.c.h.b16 %v4774
    %v5572 = vunpack.c.l.b16 %v4775
    %v5573 = vunpack.c.l.b16 %v4776
    %v5574 = vunpack.c.h.b16 %v4776
    %v5575 = vunpack.c.l.b16 %v4777
    %v5576 = vunpack.c.l.b16 %v4778
    %v5577 = vunpack.c.h.b16 %v4778
    %v5578 = vunpack.c.l.b16 %v4779
    %v5579 = vunpack.c.l.b16 %v4780
    %v5580 = vunpack.c.h.b16 %v4780
    %v5581 = vunpack.c.l.b16 %v4781
    %v5582 = vunpack.c.l.b16 %v4782
    %v5583 = vunpack.c.h.b16 %v4782
    %v5584 = vunpack.c.l.b16 %v4783
    %v5585 = vunpack.c.l.b16 %v4784
    %v5586 = vunpack.c.h.b16 %v4784
    %v5587 = vunpack.c.l.b16 %v4785
    %v5588 = vunpack.c.l.b16 %v4786
    %v5589 = vunpack.c.h.b16 %v4786
    %v5590 = vunpack.c.l.b16 %v4787
    %v5591 = vunpack.c.l.b16 %v4788
    %v5592 = vunpack.c.h.b16 %v4788
    %v5593 = vunpack.c.l.b16 %v4789
    %v5594 = vunpack.c.l.b16 %v4790
    %v5595 = vunpack.c.h.b16 %v4790
    %v5596 = vunpack.c.l.b16 %v4791
    %v5597 = vunpack.c.l.b16 %v4792
    %v5598 = vunpack.c.h.b16 %v4792
    %v5599 = vunpack.c.l.b16 %v4793
    %v5600 = vunpack.c.l.b16 %v4794
    %v5601 = vunpack.c.h.b16 %v4794
    %v5602 = vunpack.c.l.b16 %v4795
    %v5603 = vunpack.c.l.b16 %v4796
    %v5604 = vunpack.c.h.b16 %v4796
    %v5605 = vunpack.c.l.b16 %v4797
    %v5606 = vunpack.c.l.b16 %v4798
    %v5607 = vunpack.c.h.b16 %v4798
    %v5608 = vunpack.c.l.b16 %v4799
    %v5609 = vunpack.c.l.b16 %v4800
    %v5610 = vunpack.c.h.b16 %v4800
    %v5611 = vunpack.c.l.b16 %v4801
    %v5612 = vunpack.c.l.b16 %v4802
    %v5613 = vunpack.c.h.b16 %v4802
    %v5614 = vunpack.c.l.b16 %v4803
    %v5615 = vunpack.c.l.b16 %v4804
    %v5616 = vunpack.c.h.b16 %v4804
    %v5617 = vunpack.c.l.b16 %v4805
    %v5618 = vunpack.c.l.b16 %v4806
    %v5619 = vunpack.c.h.b16 %v4806
    %v5620 = vunpack.c.l.b16 %v4807
    %v5621 = vunpack.c.l.b16 %v4808
    %v5622 = vunpack.c.h.b16 %v4808
    %v5623 = vunpack.c.l.b16 %v4809
    %v5624 = vunpack.c.l.b16 %v4810
    %v5625 = vunpack.c.h.b16 %v4810
    %v5626 = vunpack.c.l.b16 %v4811
    %v5627 = vunpack.c.l.b16 %v4812
    %v5628 = vunpack.c.h.b16 %v4812
    %v5629 = vunpack.c.l.b16 %v4813
    %v5630 = vunpack.c.l.b16 %v4814
    %v5631 = vunpack.c.h.b16 %v4814
    %v5632 = vunpack.c.l.b16 %v4815
    %v5633 = vunpack.c.l.b16 %v4816
    %v5634 = vunpack.c.h.b16 %v4816
    %v5635 = vunpack.c.l.b16 %v4817
    %v5636 = vunpack.c.l.b16 %v4818
    %v5637 = vunpack.c.h.b16 %v4818
    %v5638 = vunpack.c.l.b16 %v4819
    %v5639 = vunpack.c.l.b16 %v4820
    %v5640 = vunpack.c.h.b16 %v4820
    %v5641 = vunpack.c.l.b16 %v4821
    %v5642 = vunpack.c.l.b16 %v4822
    %v5643 = vunpack.c.h.b16 %v4822
    %v5644 = vunpack.c.l.b16 %v4823
    %v5645 = vunpack.c.l.b16 %v4824
    %v5646 = vunpack.c.h.b16 %v4824
    %v5647 = vunpack.c.l.b16 %v4825
    %v5648 = vunpack.c.l.b16 %v4826
    %v5649 = vunpack.c.h.b16 %v4826
    %v5650 = vunpack.c.l.b16 %v4827
    %v5651 = vunpack.c.l.b16 %v4828
    %v5652 = vunpack.c.h.b16 %v4828
    %v5653 = vunpack.c.l.b16 %v4829
    %v5654 = vunpack.c.l.b16 %v4830
    %v5655 = vunpack.c.h.b16 %v4830
    %v5656 = vunpack.c.l.b16 %v4831
    %v5657 = vunpack.c.l.b16 %v4832
    %v5658 = vunpack.c.h.b16 %v4832
    %v5659 = vunpack.c.l.b16 %v4833
    %v5660 = vunpack.c.l.b16 %v4834
    %v5661 = vunpack.c.h.b16 %v4834
    %v5662 = vunpack.c.l.b16 %v4835
    %v5663 = vunpack.c.l.b16 %v4836
    %v5664 = vunpack.c.h.b16 %v4836
    %v5665 = vunpack.c.l.b16 %v4837
    %v5666 = vunpack.c.l.b16 %v4838
    %v5667 = vunpack.c.h.b16 %v4838
    %v5668 = vunpack.c.l.b16 %v4839
    %v5669 = vunpack.c.l.b16 %v4840
    %v5670 = vunpack.c.h.b16 %v4840
    %v5671 = vunpack.c.l.b16 %v4841
    %v5672 = vunpack.c.l.b16 %v4842
    %v5673 = vunpack.c.h.b16 %v4842
    %v5674 = vunpack.c.l.b16 %v4843
    %v5675 = vunpack.c.l.b16 %v4844
    %v5676 = vunpack.c.h.b16 %v4844
    %v5677 = vunpack.c.l.b16 %v4845
    %v5678 = vunpack.c.l.b16 %v4846
    %v5679 = vunpack.c.h.b16 %v4846
    %v5680 = vunpack.c.l.b16 %v4847
    %v5681 = vunpack.c.l.b16 %v4848
    %v5682 = vunpack.c.h.b16 %v4848
    %v5683 = vunpack.c.l.b16 %v4849
    %v5684 = vunpack.c.l.b16 %v4850
    %v5685 = vunpack.c.h.b16 %v4850
    %v5686 = vunpack.c.l.b16 %v4851
    %v5687 = vunpack.c.l.b16 %v4852
    %v5688 = vunpack.c.h.b16 %v4852
    %v5689 = vunpack.c.l.b16 %v4853
    %v5690 = vunpack.c.l.b16 %v4854
    %v5691 = vunpack.c.h.b16 %v4854
    %v5692 = vunpack.c.l.b16 %v4855
    %v5693 = vunpack.c.l.b16 %v4856
    %v5694 = vunpack.c.h.b16 %v4856
    %v5695 = vunpack.c.l.b16 %v4857
    %v5696 = vunpack.c.l.b16 %v4858
    %v5697 = vunpack.c.h.b16 %v4858
    %v5698 = vunpack.c.l.b16 %v4859
    %v5699 = vunpack.c.l.b16 %v4860
    %v5700 = vunpack.c.h.b16 %v4860
    %v5701 = vunpack.c.l.b16 %v4861
    %v5702 = vunpack.c.l.b16 %v4862
    %v5703 = vunpack.c.h.b16 %v4862
    %v5704 = vunpack.c.l.b16 %v4863
    %v5705 = vunpack.c.l.b16 %v4864
    %v5706 = vunpack.c.h.b16 %v4864
    %v5707 = vunpack.c.l.b16 %v4865
    %v5708 = vunpack.c.l.b16 %v4866
    %v5709 = vunpack.c.h.b16 %v4866
    %v5710 = vunpack.c.l.b16 %v4867
    %v5711 = vunpack.c.l.b16 %v4868
    %v5712 = vunpack.c.h.b16 %v4868
    %v5713 = vunpack.c.l.b16 %v4869
    %v5714 = vunpack.c.l.b16 %v4870
    %v5715 = vunpack.c.h.b16 %v4870
    %v5716 = vunpack.c.l.b16 %v4871
    %v5717 = vunpack.c.l.b16 %v4872
    %v5718 = vunpack.c.h.b16 %v4872
    %v5719 = vunpack.c.l.b16 %v4873
    %v5720 = vunpack.c.l.b16 %v4874
    %v5721 = vunpack.c.h.b16 %v4874
    %v5722 = vunpack.c.l.b16 %v4875
    %v5723 = vunpack.c.l.b16 %v4876
    %v5724 = vunpack.c.h.b16 %v4876
    %v5725 = vunpack.c.l.b16 %v4877
    %v5726 = vunpack.c.l.b16 %v4878
    %v5727 = vunpack.c.h.b16 %v4878
    %v5728 = vunpack.c.l.b16 %v4879
    %v5729 = vunpack.c.l.b16 %v4880
    %v5730 = vunpack.c.h.b16 %v4880
    %v5731 = vunpack.c.l.b16 %v4881
    %v5732 = vunpack.c.l.b16 %v4882
    %v5733 = vunpack.c.h.b16 %v4882
    %v5734 = vunpack.c.l.b16 %v4883
    %v5735 = vunpack.c.l.b16 %v4884
    %v5736 = vunpack.c.h.b16 %v4884
    %v5737 = vunpack.c.l.b16 %v4885
    %v5738 = vunpack.c.l.b16 %v4886
    %v5739 = vunpack.c.h.b16 %v4886
    %v5740 = vunpack.c.l.b16 %v4887
    %v5741 = vunpack.c.l.b16 %v4888
    %v5742 = vunpack.c.h.b16 %v4888
    %v5743 = vunpack.c.l.b16 %v4889
    %v5744 = vunpack.c.l.b16 %v4890
    %v5745 = vunpack.c.h.b16 %v4890
    %v5746 = vunpack.c.l.b16 %v4891
    %v5747 = vunpack.c.l.b16 %v4892
    %v5748 = vunpack.c.h.b16 %v4892
    %v5749 = vunpack.c.l.b16 %v4893
    %v5750 = vunpack.c.l.b16 %v4894
    %v5751 = vunpack.c.h.b16 %v4894
    %v5752 = vunpack.c.l.b16 %v4895
    %v5753 = vunpack.c.l.b16 %v4896
    %v5754 = vunpack.c.h.b16 %v4896
    %v5755 = vunpack.c.l.b16 %v4897
    %v5756 = vunpack.c.l.b16 %v4898
    %v5757 = vunpack.c.h.b16 %v4898
    %v5758 = vunpack.c.l.b16 %v4899
    %v5759 = vunpack.c.l.b16 %v4900
    %v5760 = vunpack.c.h.b16 %v4900
    %v5761 = vunpack.c.l.b16 %v4901
    %v5762 = vunpack.c.l.b16 %v4902
    %v5763 = vunpack.c.h.b16 %v4902
    %v5764 = vunpack.c.l.b16 %v4903
    %v5765 = vunpack.c.l.b16 %v4904
    %v5766 = vunpack.c.h.b16 %v4904
    %v5767 = vunpack.c.l.b16 %v4905
    %v5768 = vunpack.c.l.b16 %v4906
    %v5769 = vunpack.c.h.b16 %v4906
    %v5770 = vunpack.c.l.b16 %v4907
    %v5771 = vunpack.c.l.b16 %v4908
    %v5772 = vunpack.c.h.b16 %v4908
    %v5773 = vunpack.c.l.b16 %v4909
    %v5774 = vunpack.c.l.b16 %v4910
    %v5775 = vunpack.c.h.b16 %v4910
    %v5776 = vunpack.c.l.b16 %v4911
    %v5777 = vunpack.c.l.b16 %v4912
    %v5778 = vunpack.c.h.b16 %v4912
    %v5779 = vunpack.c.l.b16 %v4913
    %v5780 = vunpack.c.l.b16 %v4914
    %v5781 = vunpack.c.h.b16 %v4914
    %v5782 = vunpack.c.l.b16 %v4915
    %v5783 = vunpack.c.l.b16 %v4916
    %v5784 = vunpack.c.h.b16 %v4916
    %v5785 = vunpack.c.l.b16 %v4917
    %v5786 = vunpack.c.l.b16 %v4918
    %v5787 = vunpack.c.h.b16 %v4918
    %v5788 = vunpack.c.l.b16 %v4919
    %v5789 = vunpack.c.l.b16 %v4920
    %v5790 = vunpack.c.h.b16 %v4920
    %v5791 = vunpack.c.l.b16 %v4921
    %v5792 = vunpack.c.l.b16 %v4922
    %v5793 = vunpack.c.h.b16 %v4922
    %v5794 = vunpack.c.l.b16 %v4923
    %v5795 = vunpack.c.l.b16 %v4924
    %v5796 = vunpack.c.h.b16 %v4924
    %v5797 = vunpack.c.l.b16 %v4925
    %v5798 = vunpack.c.l.b16 %v4926
    %v5799 = vunpack.c.h.b16 %v4926
    %v5800 = vunpack.c.l.b16 %v4927
    %v5801 = vunpack.c.l.b16 %v4928
    %v5802 = vunpack.c.h.b16 %v4928
    %v5803 = vunpack.c.l.b16 %v4929
    %v5804 = vunpack.c.l.b16 %v4930
    %v5805 = vunpack.c.h.b16 %v4930
    %v5806 = vunpack.c.l.b16 %v4931
    %v5807 = vunpack.c.l.b16 %v4932
    %v5808 = vunpack.c.h.b16 %v4932
    %v5809 = vunpack.c.l.b16 %v4933
    %v5810 = vunpack.c.l.b16 %v4934
    %v5811 = vunpack.c.h.b16 %v4934
    %v5812 = vunpack.c.l.b16 %v4935
    %v5813 = vunpack.c.l.b16 %v4936
    %v5814 = vunpack.c.h.b16 %v4936
    %v5815 = vunpack.c.l.b16 %v4937
    %v5816 = vunpack.c.l.b16 %v4938
    %v5817 = vunpack.c.h.b16 %v4938
    %v5818 = vunpack.c.l.b16 %v4939
    %v5819 = vunpack.c.l.b16 %v4940
    %v5820 = vunpack.c.h.b16 %v4940
    %v5821 = vunpack.c.l.b16 %v4941
    %v5822 = vunpack.c.l.b16 %v4942
    %v5823 = vunpack.c.h.b16 %v4942
    %v5824 = vunpack.c.l.b16 %v4943
    %v5825 = vunpack.c.l.b16 %v4944
    %v5826 = vunpack.c.h.b16 %v4944
    %v5827 = vunpack.c.l.b16 %v4945
    %v5828 = vunpack.c.l.b16 %v4946
    %v5829 = vunpack.c.h.b16 %v4946
    %v5830 = vunpack.c.l.b16 %v4947
    %v5831 = vunpack.c.l.b16 %v4948
    %v5832 = vunpack.c.h.b16 %v4948
    %v5833 = vunpack.c.l.b16 %v4949
    %v5834 = vunpack.c.l.b16 %v4950
    %v5835 = vunpack.c.h.b16 %v4950
    %v5836 = vunpack.c.l.b16 %v4951
    %v5837 = vunpack.c.l.b16 %v4952
    %v5838 = vunpack.c.h.b16 %v4952
    %v5839 = vunpack.c.l.b16 %v4953
    %v5840 = vunpack.c.l.b16 %v4954
    %v5841 = vunpack.c.h.b16 %v4954
    %v5842 = vunpack.c.l.b16 %v4955
    %v5843 = vunpack.c.l.b16 %v4956
    %v5844 = vunpack.c.h.b16 %v4956
    %v5845 = vunpack.c.l.b16 %v4957
    %v5846 = vunpack.c.l.b16 %v4958
    %v5847 = vunpack.c.h.b16 %v4958
    %v5848 = vunpack.c.l.b16 %v4959
    %v5849 = vunpack.c.l.b16 %v4960
    %v5850 = vunpack.c.h.b16 %v4960
    %v5851 = vunpack.c.l.b16 %v4961
    %v5852 = vunpack.c.l.b16 %v4962
    %v5853 = vunpack.c.h.b16 %v4962
    %v5854 = vunpack.c.l.b16 %v4963
    %v5855 = vunpack.c.l.b16 %v4964
    %v5856 = vunpack.c.h.b16 %v4964
    %v5857 = vunpack.c.l.b16 %v4965
    %v5858 = vunpack.c.l.b16 %v4966
    %v5859 = vunpack.c.h.b16 %v4966
    %v5860 = vunpack.c.l.b16 %v4967
    %v5861 = vunpack.c.l.b16 %v4968
    %v5862 = vunpack.c.h.b16 %v4968
    %v5863 = vunpack.c.l.b16 %v4969
    %v5864 = vunpack.c.l.b16 %v4970
    %v5865 = vunpack.c.h.b16 %v4970
    %v5866 = vunpack.c.l.b16 %v4971
    %v5867 = vunpack.c.l.b16 %v4972
    %v5868 = vunpack.c.h.b16 %v4972
    %v5869 = vunpack.c.l.b16 %v4973
    %v5870 = vunpack.c.l.b16 %v4974
    %v5871 = vunpack.c.h.b16 %v4974
    %v5872 = vunpack.c.l.b16 %v4975
    %v5873 = vunpack.c.l.b16 %v4976
    %v5874 = vunpack.c.h.b16 %v4976
    %v5875 = vunpack.c.l.b16 %v4977
    %v5876 = vunpack.c.l.b16 %v4978
    %v5877 = vunpack.c.h.b16 %v4978
    %v5878 = vunpack.c.l.b16 %v4979
    %v5879 = vunpack.c.l.b16 %v4980
    %v5880 = vunpack.c.h.b16 %v4980
    %v5881 = vunpack.c.l.b16 %v4981
    %v5882 = vunpack.c.l.b16 %v4982
    %v5883 = vunpack.c.h.b16 %v4982
    %v5884 = vunpack.c.l.b16 %v4983
    %v5885 = vunpack.c.l.b16 %v4984
    %v5886 = vunpack.c.h.b16 %v4984
    %v5887 = vunpack.c.l.b16 %v4985
    %v5888 = vunpack.c.l.b16 %v4986
    %v5889 = vunpack.c.h.b16 %v4986
    %v5890 = vunpack.c.l.b16 %v4987
    %v5891 = vunpack.c.l.b16 %v4988
    %v5892 = vunpack.c.h.b16 %v4988
    %v5893 = vunpack.c.l.b16 %v4989
    %v5894 = vunpack.c.l.b16 %v4990
    %v5895 = vunpack.c.h.b16 %v4990
    %v5896 = vunpack.c.l.b16 %v4991
    %v5897 = vunpack.c.l.b16 %v4992
    %v5898 = vunpack.c.h.b16 %v4992
    %v5899 = vunpack.c.l.b16 %v4993
    %v5900 = vunpack.c.l.b16 %v4994
    %v5901 = vunpack.c.h.b16 %v4994
    %v5902 = vunpack.c.l.b16 %v4995
    %v5903 = vunpack.c.l.b16 %v4996
    %v5904 = vunpack.c.h.b16 %v4996
    %v5905 = vunpack.c.l.b16 %v4997
    %v5906 = vunpack.c.l.b16 %v4998
    %v5907 = vunpack.c.h.b16 %v4998
    %v5908 = vunpack.c.l.b16 %v4999
    %v5909 = vunpack.c.l.b16 %v5000
    %v5910 = vunpack.c.h.b16 %v5000
    %v5911 = vunpack.c.l.b16 %v5001
    %v5912 = vunpack.c.l.b16 %v5002
    %v5913 = vunpack.c.h.b16 %v5002
    %v5914 = vunpack.c.l.b16 %v5003
    %v5915 = vunpack.c.l.b16 %v5004
    %v5916 = vunpack.c.h.b16 %v5004
    %v5917 = vunpack.c.l.b16 %v5005
    %v5918 = vunpack.c.l.b16 %v5006
    %v5919 = vunpack.c.h.b16 %v5006
    %v5920 = vunpack.c.l.b16 %v5007
    %v5921 = vunpack.c.l.b16 %v5008
    %v5922 = vunpack.c.h.b16 %v5008
    %v5923 = vunpack.c.l.b16 %v5009
    %v5924 = vunpack.c.l.b16 %v5010
    %v5925 = vunpack.c.h.b16 %v5010
    %v5926 = vunpack.c.l.b16 %v5011
    %v5927 = vunpack.c.l.b16 %v5012
    %v5928 = vunpack.c.h.b16 %v5012
    %v5929 = vunpack.c.l.b16 %v5013
    %v5930 = vunpack.c.l.b16 %v5014
    %v5931 = vunpack.c.h.b16 %v5014
    %v5932 = vunpack.c.l.b16 %v5015
    %v5933 = vunpack.c.l.b16 %v5016
    %v5934 = vunpack.c.h.b16 %v5016
    %v5935 = vunpack.c.l.b16 %v5017
    %v5936 = vunpack.c.l.b16 %v5018
    %v5937 = vunpack.c.h.b16 %v5018
    %v5938 = vunpack.c.l.b16 %v5019
    %v5939 = vunpack.c.l.b16 %v5020
    %v5940 = vunpack.c.h.b16 %v5020
    %v5941 = vunpack.c.l.b16 %v5021
    %v5942 = vunpack.c.l.b16 %v5022
    %v5943 = vunpack.c.h.b16 %v5022
    %v5944 = vunpack.c.l.b16 %v5023
    %v5945 = vunpack.c.l.b16 %v5024
    %v5946 = vunpack.c.h.b16 %v5024
    %v5947 = vunpack.c.l.b16 %v5025
    %v5948 = vunpack.c.l.b16 %v5026
    %v5949 = vunpack.c.h.b16 %v5026
    %v5950 = vunpack.c.l.b16 %v5027
    %v5951 = vunpack.c.l.b16 %v5028
    %v5952 = vunpack.c.h.b16 %v5028
    %v5953 = vunpack.c.l.b16 %v5029
    %v5954 = vunpack.c.l.b16 %v5030
    %v5955 = vunpack.c.h.b16 %v5030
    %v5956 = vunpack.c.l.b16 %v5031
    %v5957 = vunpack.c.l.b16 %v5032
    %v5958 = vunpack.c.h.b16 %v5032
    %v5959 = vunpack.c.l.b16 %v5033
    %v5960 = vunpack.c.l.b16 %v5034
    %v5961 = vunpack.c.h.b16 %v5034
    %v5962 = vunpack.c.l.b16 %v5035
    %v5963 = vunpack.c.l.b16 %v5036
    %v5964 = vunpack.c.h.b16 %v5036
    %v5965 = vunpack.c.l.b16 %v5037
    %v5966 = vunpack.c.l.b16 %v5038
    %v5967 = vunpack.c.h.b16 %v5038
    %v5968 = vunpack.c.l.b16 %v5039
    %v5969 = vunpack.c.l.b16 %v5040
    %v5970 = vunpack.c.h.b16 %v5040
    %v5971 = vunpack.c.l.b16 %v5041
    %v5972 = vunpack.c.l.b16 %v5042
    %v5973 = vunpack.c.h.b16 %v5042
    %v5974 = vunpack.c.l.b16 %v5043
    %v5975 = vunpack.c.l.b16 %v5044
    %v5976 = vunpack.c.h.b16 %v5044
    %v5977 = vunpack.c.l.b16 %v5045
    %v5978 = vunpack.c.l.b16 %v5046
    %v5979 = vunpack.c.h.b16 %v5046
    %v5980 = vunpack.c.l.b16 %v5047
    %v5981 = vunpack.c.l.b16 %v5048
    %v5982 = vunpack.c.h.b16 %v5048
    %v5983 = vunpack.c.l.b16 %v5049
    %v5984 = vunpack.c.l.b16 %v5050
    %v5985 = vunpack.c.h.b16 %v5050
    %v5986 = vunpack.c.l.b16 %v5051
    %v5987 = vunpack.c.l.b16 %v5052
    %v5988 = vunpack.c.h.b16 %v5052
    %v5989 = vunpack.c.l.b16 %v5053
    %v5990 = vunpack.c.l.b16 %v5054
    %v5991 = vunpack.c.h.b16 %v5054
    %v5992 = vunpack.c.l.b16 %v5055
    %v5993 = vunpack.c.l.b16 %v5056
    %v5994 = vunpack.c.h.b16 %v5056
    %v5995 = vunpack.c.l.b16 %v5057
    %v5996 = vunpack.c.l.b16 %v5058
    %v5997 = vunpack.c.h.b16 %v5058
    %v5998 = vunpack.c.l.b16 %v5059
    %v5999 = vunpack.c.l.b16 %v5060
    %v6000 = vunpack.c.h.b16 %v5060
    %v6001 = vunpack.c.l.b16 %v5061
    %v6002 = vunpack.c.l.b16 %v5062
    %v6003 = vunpack.c.h.b16 %v5062
    %v6004 = vunpack.c.l.b16 %v5063
    %v6005 = vunpack.c.l.b16 %v5064
    %v6006 = vunpack.c.h.b16 %v5064
    %v6007 = vunpack.c.l.b16 %v5065
    %v6008 = vunpack.c.l.b16 %v5066
    %v6009 = vunpack.c.h.b16 %v5066
    %v6010 = vunpack.c.l.b16 %v5067
    %v6011 = vunpack.c.l.b16 %v5068
    %v6012 = vunpack.c.h.b16 %v5068
    %v6013 = vunpack.c.l.b16 %v5069
    %v6014 = vunpack.c.l.b16 %v5070
    %v6015 = vunpack.c.h.b16 %v5070
    %v6016 = vunpack.c.l.b16 %v5071
    %v6017 = vunpack.c.l.b16 %v5072
    %v6018 = vunpack.c.h.b16 %v5072
    %v6019 = vunpack.c.l.b16 %v5073
    %v6020 = vunpack.c.l.b16 %v5074
    %v6021 = vunpack.c.h.b16 %v5074
    %v6022 = vunpack.c.l.b16 %v5075
    %v6023 = vunpack.c.l.b16 %v5076
    %v6024 = vunpack.c.h.b16 %v5076
    %v6025 = vunpack.c.l.b16 %v5077
    %v6026 = vunpack.c.l.b16 %v5078
    %v6027 = vunpack.c.h.b16 %v5078
    %v6028 = vunpack.c.l.b16 %v5079
    %v6029 = vunpack.c.l.b16 %v5080
    %v6030 = vunpack.c.h.b16 %v5080
    %v6031 = vunpack.c.l.b16 %v5081
    %v6032 = vunpack.c.l.b16 %v5082
    %v6033 = vunpack.c.h.b16 %v5082
    %v6034 = vunpack.c.l.b16 %v5083
    %v6035 = vunpack.c.l.b16 %v5084
    %v6036 = vunpack.c.h.b16 %v5084
    %v6037 = vunpack.c.l.b16 %v5085
    %v6038 = vunpack.c.l.b16 %v5086
    %v6039 = vunpack.c.h.b16 %v5086
    %v6040 = vunpack.c.l.b16 %v5087
    %v6041 = vunpack.c.l.b16 %v5088
    %v6042 = vunpack.c.h.b16 %v5088
    %v6043 = vunpack.c.l.b16 %v5089
    %v6044 = vunpack.c.l.b16 %v5090
    %v6045 = vunpack.c.h.b16 %v5090
    %v6046 = vunpack.c.l.b16 %v5091
    %v6047 = vunpack.c.l.b16 %v5092
    %v6048 = vunpack.c.h.b16 %v5092
    %v6049 = vunpack.c.l.b16 %v5093
    %v6050 = vunpack.c.l.b16 %v5094
    %v6051 = vunpack.c.h.b16 %v5094
    %v6052 = vunpack.c.l.b16 %v5095
    %v6053 = vunpack.c.l.b16 %v5096
    %v6054 = vunpack.c.h.b16 %v5096
    %v6055 = vunpack.c.l.b16 %v5097
    %v6056 = vunpack.c.l.b16 %v5098
    %v6057 = vunpack.c.h.b16 %v5098
    %v6058 = vunpack.c.l.b16 %v5099
    %v6059 = vunpack.c.l.b16 %v5100
    %v6060 = vunpack.c.h.b16 %v5100
    %v6061 = vunpack.c.l.b16 %v5101
    %v6062 = vunpack.c.l.b16 %v5102
    %v6063 = vunpack.c.h.b16 %v5102
    %v6064 = vunpack.c.l.b16 %v5103
    %v6065 = vunpack.c.l.b16 %v5104
    %v6066 = vunpack.c.h.b16 %v5104
    %v6067 = vunpack.c.l.b16 %v5105
    %v6068 = vunpack.c.l.b16 %v5106
    %v6069 = vunpack.c.h.b16 %v5106
    %v6070 = vunpack.c.l.b16 %v5107
    %v6071 = vunpack.c.l.b16 %v5108
    %v6072 = vunpack.c.h.b16 %v5108
    %v6073 = vunpack.c.l.b16 %v5109
    %v6074 = vunpack.c.l.b16 %v5110
    %v6075 = vunpack.c.h.b16 %v5110
    %v6076 = vunpack.c.l.b16 %v5111
    %v6077 = vunpack.c.l.b16 %v5112
    %v6078 = vunpack.c.h.b16 %v5112
    %v6079 = vunpack.c.l.b16 %v5113
    %v6080 = vunpack.c.l.b16 %v5114
    %v6081 = vunpack.c.h.b16 %v5114
    %v6082 = vunpack.c.l.b16 %v5115
    %v6083 = vunpack.c.l.b16 %v5116
    %v6084 = vunpack.c.h.b16 %v5116
    %v6085 = vunpack.c.l.b16 %v5117
    %v6086 = vunpack.c.l.b16 %v5118
    %v6087 = vunpack.c.h.b16 %v5118
    %v6088 = vunpack.c.l.b16 %v5119
    %v6089 = vunpack.c.l.b16 %v5120
    %v6090 = vunpack.c.h.b16 %v5120
    %v6091 = vunpack.c.l.b16 %v5121
    %v6092 = vunpack.c.l.b16 %v5122
    %v6093 = vunpack.c.h.b16 %v5122
    %v6094 = vunpack.c.l.b16 %v5123
    %v6095 = vunpack.c.l.b16 %v5124
    %v6096 = vunpack.c.h.b16 %v5124
    %v6097 = vunpack.c.l.b16 %v5125
    %v6098 = vunpack.c.l.b16 %v5126
    %v6099 = vunpack.c.h.b16 %v5126
    %v6100 = vunpack.c.l.b16 %v5127
    %v6101 = vunpack.c.l.b16 %v5128
    %v6102 = vunpack.c.h.b16 %v5128
    %v6103 = vunpack.c.l.b16 %v5129
    %v6104 = vunpack.c.l.b16 %v5130
    %v6105 = vunpack.c.h.b16 %v5130
    %v6106 = vunpack.c.l.b16 %v5131
    %v6107 = vunpack.c.l.b16 %v5132
    %v6108 = vunpack.c.h.b16 %v5132
    %v6109 = vunpack.c.l.b16 %v5133
    %v6110 = vunpack.c.l.b16 %v5134
    %v6111 = vunpack.c.h.b16 %v5134
    %v6112 = vunpack.c.l.b16 %v5135
    %v6113 = vpack.c.b16 %v5540, %v5537
    %v6114 = vpack.c.b16 %v5541, %v5538
    %v6115 = vpack.c.b16 %v5542, %v5539
    %v6116 = vpack.c.b16 %v5546, %v5543
    %v6117 = vpack.c.b16 %v5547, %v5544
    %v6118 = vpack.c.b16 %v5548, %v5545
    %v6119 = vpack.c.b16 %v5552, %v5549
    %v6120 = vpack.c.b16 %v5553, %v5550
    %v6121 = vpack.c.b16 %v5554, %v5551
    %v6122 = vpack.c.b16 %v5558, %v5555
    %v6123 = vpack.c.b16 %v5559, %v5556
    %v6124 = vpack.c.b16 %v5560, %v5557
    %v6125 = vpack.c.b16 %v5564, %v5561
    %v6126 = vpack.c.b16 %v5565, %v5562
    %v6127 = vpack.c.b16 %v5566, %v5563
    %v6128 = vpack.c.b16 %v5570, %v5567
    %v6129 = vpack.c.b16 %v5571, %v5568
    %v6130 = vpack.c.b16 %v5572, %v5569
    %v6131 = vpack.c.b16 %v5576, %v5573
    %v6132 = vpack.c.b16 %v5577, %v5574
    %v6133 = vpack.c.b16 %v5578, %v5575
    %v6134 = vpack.c.b16 %v5582, %v5579
    %v6135 = vpack.c.b16 %v5583, %v5580
    %v6136 = vpack.c.b16 %v5584, %v5581
    %v6137 = vpack.c.b16 %v5588, %v5585
    %v6138 = vpack.c.b16 %v5589, %v5586
    %v6139 = vpack.c.b16 %v5590, %v5587
    %v6140 = vpack.c.b16 %v5594, %v5591
    %v6141 = vpack.c.b16 %v5595, %v5592
    %v6142 = vpack.c.b16 %v5596, %v5593
    %v6143 = vpack.c.b16 %v5600, %v5597
    %v6144 = vpack.c.b16 %v5601, %v5598
    %v6145 = vpack.c.b16 %v5602, %v5599
    %v6146 = vpack.c.b16 %v5606, %v5603
    %v6147 = vpack.c.b16 %v5607, %v5604
    %v6148 = vpack.c.b16 %v5608, %v5605
    %v6149 = vpack.c.b16 %v5612, %v5609
    %v6150 = vpack.c.b16 %v5613, %v5610
    %v6151 = vpack.c.b16 %v5614, %v5611
    %v6152 = vpack.c.b16 %v5618, %v5615
    %v6153 = vpack.c.b16 %v5619, %v5616
    %v6154 = vpack.c.b16 %v5620, %v5617
    %v6155 = vpack.c.b16 %v5624, %v5621
    %v6156 = vpack.c.b16 %v5625, %v5622
    %v6157 = vpack.c.b16 %v5626, %v5623
    %v6158 = vpack.c.b16 %v5630, %v5627
    %v6159 = vpack.c.b16 %v5631, %v5628
    %v6160 = vpack.c.b16 %v5632, %v5629
    %v6161 = vpack.c.b16 %v5636, %v5633
    %v6162 = vpack.c.b16 %v5637, %v5634
    %v6163 = vpack.c.b16 %v5638, %v5635
    %v6164 = vpack.c.b16 %v5642, %v5639
    %v6165 = vpack.c.b16 %v5643, %v5640
    %v6166 = vpack.c.b16 %v5644, %v5641
    %v6167 = vpack.c.b16 %v5648, %v5645
    %v6168 = vpack.c.b16 %v5649, %v5646
    %v6169 = vpack.c.b16 %v5650, %v5647
    %v6170 = vpack.c.b16 %v5654, %v5651
    %v6171 = vpack.c.b16 %v5655, %v5652
    %v6172 = vpack.c.b16 %v5656, %v5653
    %v6173 = vpack.c.b16 %v5660, %v5657
    %v6174 = vpack.c.b16 %v5661, %v5658
    %v6175 = vpack.c.b16 %v5662, %v5659
    %v6176 = vpack.c.b16 %v5666, %v5663
    %v6177 = vpack.c.b16 %v5667, %v5664
    %v6178 = vpack.c.b16 %v5668, %v5665
    %v6179 = vpack.c.b16 %v5672, %v5669
    %v6180 = vpack.c.b16 %v5673, %v5670
    %v6181 = vpack.c.b16 %v5674, %v5671
    %v6182 = vpack.c.b16 %v5678, %v5675
    %v6183 = vpack.c.b16 %v5679, %v5676
    %v6184 = vpack.c.b16 %v5680, %v5677
    %v6185 = vpack.c.b16 %v5684, %v5681
    %v6186 = vpack.c.b16 %v5685, %v5682
    %v6187 = vpack.c.b16 %v5686, %v5683
    %v6188 = vpack.c.b16 %v5690, %v5687
    %v6189 = vpack.c.b16 %v5691, %v5688
    %v6190 = vpack.c.b16 %v5692, %v5689
    %v6191 = vpack.c.b16 %v5696, %v5693
    %v6192 = vpack.c.b16 %v5697, %v5694
    %v6193 = vpack.c.b16 %v5698, %v5695
    %v6194 = vpack.c.b16 %v5702, %v5699
    %v6195 = vpack.c.b16 %v5703, %v5700
    %v6196 = vpack.c.b16 %v5704, %v5701
    %v6197 = vpack.c.b16 %v5708, %v5705
    %v6198 = vpack.c.b16 %v5709, %v5706
    %v6199 = vpack.c.b16 %v5710, %v5707
    %v6200 = vpack.c.b16 %v5714, %v5711
    %v6201 = vpack.c.b16 %v5715, %v5712
    %v6202 = vpack.c.b16 %v5716, %v5713
    %v6203 = vpack.c.b16 %v5720, %v5717
    %v6204 = vpack.c.b16 %v5721, %v5718
    %v6205 = vpack.c.b16 %v5722, %v5719
    %v6206 = vpack.c.b16 %v5726, %v5723
    %v6207 = vpack.c.b16 %v5727, %v5724
    %v6208 = vpack.c.b16 %v5728, %v5725
    %v6209 = vpack.c.b16 %v5732, %v5729
    %v6210 = vpack.c.b16 %v5733, %v5730
    %v6211 = vpack.c.b16 %v5734, %v5731
    %v6212 = vpack.c.b16 %v5738, %v5735
    %v6213 = vpack.c.b16 %v5739, %v5736
    %v6214 = vpack.c.b16 %v5740, %v5737
    %v6215 = vpack.c.b16 %v5744, %v5741
    %v6216 = vpack.c.b16 %v5745, %v5742
    %v6217 = vpack.c.b16 %v5746, %v5743
    %v6218 = vpack.c.b16 %v5750, %v5747
    %v6219 = vpack.c.b16 %v5751, %v5748
    %v6220 = vpack.c.b16 %v5752, %v5749
    %v6221 = vpack.c.b16 %v5756, %v5753
    %v6222 = vpack.c.b16 %v5757, %v5754
    %v6223 = vpack.c.b16 %v5758, %v5755
    %v6224 = vpack.c.b16 %v5762, %v5759
    %v6225 = vpack.c.b16 %v5763, %v5760
    %v6226 = vpack.c.b16 %v5764, %v5761
    %v6227 = vpack.c.b16 %v5768, %v5765
    %v6228 = vpack.c.b16 %v5769, %v5766
    %v6229 = vpack.c.b16 %v5770, %v5767
    %v6230 = vpack.c.b16 %v5774, %v5771
    %v6231 = vpack.c.b16 %v5775, %v5772
    %v6232 = vpack.c.b16 %v5776, %v5773
    %v6233 = vpack.c.b16 %v5780, %v5777
    %v6234 = vpack.c.b16 %v5781, %v5778
    %v6235 = vpack.c.b16 %v5782, %v5779
    %v6236 = vpack.c.b16 %v5786, %v5783
    %v6237 = vpack.c.b16 %v5787, %v5784
    %v6238 = vpack.c.b16 %v5788, %v5785
    %v6239 = vpack.c.b16 %v5792, %v5789
    %v6240 = vpack.c.b16 %v5793, %v5790
    %v6241 = vpack.c.b16 %v5794, %v5791
    %v6242 = vpack.c.b16 %v5798, %v5795
    %v6243 = vpack.c.b16 %v5799, %v5796
    %v6244 = vpack.c.b16 %v5800, %v5797
    %v6245 = vpack.c.b16 %v5804, %v5801
    %v6246 = vpack.c.b16 %v5805, %v5802
    %v6247 = vpack.c.b16 %v5806, %v5803
    %v6248 = vpack.c.b16 %v5810, %v5807
    %v6249 = vpack.c.b16 %v5811, %v5808
    %v6250 = vpack.c.b16 %v5812, %v5809
    %v6251 = vpack.c.b16 %v5816, %v5813
    %v6252 = vpack.c.b16 %v5817, %v5814
    %v6253 = vpack.c.b16 %v5818, %v5815
    %v6254 = vpack.c.b16 %v5822, %v5819
    %v6255 = vpack.c.b16 %v5823, %v5820
    %v6256 = vpack.c.b16 %v5824, %v5821
    %v6257 = vpack.c.b16 %v5828, %v5825
    %v6258 = vpack.c.b16 %v5829, %v5826
    %v6259 = vpack.c.b16 %v5830, %v5827
    %v6260 = vpack.c.b16 %v5834, %v5831
    %v6261 = vpack.c.b16 %v5835, %v5832
    %v6262 = vpack.c.b16 %v5836, %v5833
    %v6263 = vpack.c.b16 %v5840, %v5837
    %v6264 = vpack.c.b16 %v5841, %v5838
    %v6265 = vpack.c.b16 %v5842, %v5839
    %v6266 = vpack.c.b16 %v5846, %v5843
    %v6267 = vpack.c.b16 %v5847, %v5844
    %v6268 = vpack.c.b16 %v5848, %v5845
    %v6269 = vpack.c.b16 %v5852, %v5849
    %v6270 = vpack.c.b16 %v5853, %v5850
    %v6271 = vpack.c.b16 %v5854, %v5851
    %v6272 = vpack.c.b16 %v5858, %v5855
    %v6273 = vpack.c.b16 %v5859, %v5856
    %v6274 = vpack.c.b16 %v5860, %v5857
    %v6275 = vpack.c.b16 %v5864, %v5861
    %v6276 = vpack.c.b16 %v5865, %v5862
    %v6277 = vpack.c.b16 %v5866, %v5863
    %v6278 = vpack.c.b16 %v5870, %v5867
    %v6279 = vpack.c.b16 %v5871, %v5868
    %v6280 = vpack.c.b16 %v5872, %v5869
    %v6281 = vpack.c.b16 %v5876, %v5873
    %v6282 = vpack.c.b16 %v5877, %v5874
    %v6283 = vpack.c.b16 %v5878, %v5875
    %v6284 = vpack.c.b16 %v5882, %v5879
    %v6285 = vpack.c.b16 %v5883, %v5880
    %v6286 = vpack.c.b16 %v5884, %v5881
    %v6287 = vpack.c.b16 %v5888, %v5885
    %v6288 = vpack.c.b16 %v5889, %v5886
    %v6289 = vpack.c.b16 %v5890, %v5887
    %v6290 = vpack.c.b16 %v5894, %v5891
    %v6291 = vpack.c.b16 %v5895, %v5892
    %v6292 = vpack.c.b16 %v5896, %v5893
    %v6293 = vpack.c.b16 %v5900, %v5897
    %v6294 = vpack.c.b16 %v5901, %v5898
    %v6295 = vpack.c.b16 %v5902, %v5899
    %v6296 = vpack.c.b16 %v5906, %v5903
    %v6297 = vpack.c.b16 %v5907, %v5904
    %v6298 = vpack.c.b16 %v5908, %v5905
    %v6299 = vpack.c.b16 %v5912, %v5909
    %v6300 = vpack.c.b16 %v5913, %v5910
    %v6301 = vpack.c.b16 %v5914, %v5911
    %v6302 = vpack.c.b16 %v5918, %v5915
    %v6303 = vpack.c.b16 %v5919, %v5916
    %v6304 = vpack.c.b16 %v5920, %v5917
    %v6305 = vpack.c.b16 %v5924, %v5921
    %v6306 = vpack.c.b16 %v5925, %v5922
    %v6307 = vpack.c.b16 %v5926, %v5923
    %v6308 = vpack.c.b16 %v5930, %v5927
    %v6309 = vpack.c.b16 %v5931, %v5928
    %v6310 = vpack.c.b16 %v5932, %v5929
    %v6311 = vpack.c.b16 %v5936, %v5933
    %v6312 = vpack.c.b16 %v5937, %v5934
    %v6313 = vpack.c.b16 %v5938, %v5935
    %v6314 = vpack.c.b16 %v5942, %v5939
    %v6315 = vpack.c.b16 %v5943, %v5940
    %v6316 = vpack.c.b16 %v5944, %v5941
    %v6317 = vpack.c.b16 %v5948, %v5945
    %v6318 = vpack.c.b16 %v5949, %v5946
    %v6319 = vpack.c.b16 %v5950, %v5947
    %v6320 = vpack.c.b16 %v5954, %v5951
    %v6321 = vpack.c.b16 %v5955, %v5952
    %v6322 = vpack.c.b16 %v5956, %v5953
    %v6323 = vpack.c.b16 %v5960, %v5957
    %v6324 = vpack.c.b16 %v5961, %v5958
    %v6325 = vpack.c.b16 %v5962, %v5959
    %v6326 = vpack.c.b16 %v5966, %v5963
    %v6327 = vpack.c.b16 %v5967, %v5964
    %v6328 = vpack.c.b16 %v5968, %v5965
    %v6329 = vpack.c.b16 %v5972, %v5969
    %v6330 = vpack.c.b16 %v5973, %v5970
    %v6331 = vpack.c.b16 %v5974, %v5971
    %v6332 = vpack.c.b16 %v5978, %v5975
    %v6333 = vpack.c.b16 %v5979, %v5976
    %v6334 = vpack.c.b16 %v5980, %v5977
    %v6335 = vpack.c.b16 %v5984, %v5981
    %v6336 = vpack.c.b16 %v5985, %v5982
    %v6337 = vpack.c.b16 %v5986, %v5983
    %v6338 = vpack.c.b16 %v5990, %v5987
    %v6339 = vpack.c.b16 %v5991, %v5988
    %v6340 = vpack.c.b16 %v5992, %v5989
    %v6341 = vpack.c.b16 %v5996, %v5993
    %v6342 = vpack.c.b16 %v5997, %v5994
    %v6343 = vpack.c.b16 %v5998, %v5995
    %v6344 = vpack.c.b16 %v6002, %v5999
    %v6345 = vpack.c.b16 %v6003, %v6000
    %v6346 = vpack.c.b16 %v6004, %v6001
    %v6347 = vpack.c.b16 %v6008, %v6005
    %v6348 = vpack.c.b16 %v6009, %v6006
    %v6349 = vpack.c.b16 %v6010, %v6007
    %v6350 = vpack.c.b16 %v6014, %v6011
    %v6351 = vpack.c.b16 %v6015, %v6012
    %v6352 = vpack.c.b16 %v6016, %v6013
    %v6353 = vpack.c.b16 %v6020, %v6017
    %v6354 = vpack.c.b16 %v6021, %v6018
    %v6355 = vpack.c.b16 %v6022, %v6019
    %v6356 = vpack.c.b16 %v6026, %v6023
    %v6357 = vpack.c.b16 %v6027, %v6024
    %v6358 = vpack.c.b16 %v6028, %v6025
    %v6359 = vpack.c.b16 %v6032, %v6029
    %v6360 = vpack.c.b16 %v6033, %v6030
    %v6361 = vpack.c.b16 %v6034, %v6031
    %v6362 = vpack.c.b16 %v6038, %v6035
    %v6363 = vpack.c.b16 %v6039, %v6036
    %v6364 = vpack.c.b16 %v6040, %v6037
    %v6365 = vpack.c.b16 %v6044, %v6041
    %v6366 = vpack.c.b16 %v6045, %v6042
    %v6367 = vpack.c.b16 %v6046, %v6043
    %v6368 = vpack.c.b16 %v6050, %v6047
    %v6369 = vpack.c.b16 %v6051, %v6048
    %v6370 = vpack.c.b16 %v6052, %v6049
    %v6371 = vpack.c.b16 %v6056, %v6053
    %v6372 = vpack.c.b16 %v6057, %v6054
    %v6373 = vpack.c.b16 %v6058, %v6055
    %v6374 = vpack.c.b16 %v6062, %v6059
    %v6375 = vpack.c.b16 %v6063, %v6060
    %v6376 = vpack.c.b16 %v6064, %v6061
    %v6377 = vpack.c.b16 %v6068, %v6065
    %v6378 = vpack.c.b16 %v6069, %v6066
    %v6379 = vpack.c.b16 %v6070, %v6067
    %v6380 = vpack.c.b16 %v6074, %v6071
    %v6381 = vpack.c.b16 %v6075, %v6072
    %v6382 = vpack.c.b16 %v6076, %v6073
    %v6383 = vpack.c.b16 %v6080, %v6077
    %v6384 = vpack.c.b16 %v6081, %v6078
    %v6385 = vpack.c.b16 %v6082, %v6079
    %v6386 = vpack.c.b16 %v6086, %v6083
    %v6387 = vpack.c.b16 %v6087, %v6084
    %v6388 = vpack.c.b16 %v6088, %v6085
    %v6389 = vpack.c.b16 %v6092, %v6089
    %v6390 = vpack.c.b16 %v6093, %v6090
    %v6391 = vpack.c.b16 %v6094, %v6091
    %v6392 = vpack.c.b16 %v6098, %v6095
    %v6393 = vpack.c.b16 %v6099, %v6096
    %v6394 = vpack.c.b16 %v6100, %v6097
    %v6395 = vpack.c.b16 %v6104, %v6101
    %v6396 = vpack.c.b16 %v6105, %v6102
    %v6397 = vpack.c.b16 %v6106, %v6103
    %v6398 = vpack.c.b16 %v6110, %v6107
    %v6399 = vpack.c.b16 %v6111, %v6108
    %v6400 = vpack.c.b16 %v6112, %v6109
    %6689 = vmatprep.subr.bf16.mxu0 %v6135
    %6690 = vmatpush1.bf16.msra.mxu0 %v6134
    %6691 = vmatprep.subr.bf16.mxu0 %v6132
    %6692 = vmatpush1.bf16.msra.mxu0 %v6131
    %6693 = vmatprep.subr.bf16.mxu0 %v6129
    %6694 = vmatpush1.bf16.msra.mxu0 %v6128
    %6695 = vmatprep.subr.bf16.mxu0 %v6126
    %6696 = vmatpush1.bf16.msra.mxu0 %v6125
    %6697 = vmatprep.subr.bf16.mxu0 %v6123
    %6698 = vmatpush1.bf16.msra.mxu0 %v6122
    %6699 = vmatprep.subr.bf16.mxu0 %v6120
    %6700 = vmatpush1.bf16.msra.mxu0 %v6119
    %6701 = vmatprep.subr.bf16.mxu0 %v6117
    %6702 = vmatpush1.bf16.msra.mxu0 %v6116
    %6703 = vmatprep.subr.bf16.mxu0 %v6114
    %6704 = vmatpush1.bf16.msra.mxu0 %v6113
    %6705 = vmatprep.subr.bf16.mxu0 %v6159
    %6706 = vmatpush2.bf16.msra.mxu0 %v6158
    %6707 = vmatprep.subr.bf16.mxu0 %v6156
    %6708 = vmatpush2.bf16.msra.mxu0 %v6155
    %6709 = vmatprep.subr.bf16.mxu0 %v6153
    %6710 = vmatpush2.bf16.msra.mxu0 %v6152
    %6711 = vmatprep.subr.bf16.mxu0 %v6150
    %6712 = vmatpush2.bf16.msra.mxu0 %v6149
    %6713 = vmatprep.subr.bf16.mxu0 %v6147
    %6714 = vmatpush2.bf16.msra.mxu0 %v6146
    %6715 = vmatprep.subr.bf16.mxu0 %v6144
    %6716 = vmatpush2.bf16.msra.mxu0 %v6143
    %6717 = vmatprep.subr.bf16.mxu0 %v6141
    %6718 = vmatpush2.bf16.msra.mxu0 %v6140
    %6719 = vmatprep.subr.bf16.mxu0 %v6138
    %6720 = vmatpush2.bf16.msra.mxu0 %v6137
    %6721 = vmatprep.mubr.bf16.mxu0 %v4741
    %6722 = vmatmul.mubr.bf16.gmra.mxu0 %v4740
    %v6723 = vpop.f32.mrf.mxu0
    %v6724 = vadd.f32 %v5141, %v6723
    %v6725 = vpop.f32.mrf.mxu0
    %v6726 = vadd.f32 %v5145, %v6725
    %v6727 = vpop.f32.mrf.mxu0
    %v6728 = vpop.f32.mrf.mxu0
    %6729 = vdwg.mxu0
    %6730 = vmatprep.subr.bf16.mxu0 %v6183
    %6731 = vmatpush1.bf16.msra.mxu0 %v6182
    %6732 = vmatprep.subr.bf16.mxu0 %v6180
    %6733 = vmatpush1.bf16.msra.mxu0 %v6179
    %6734 = vmatprep.subr.bf16.mxu0 %v6177
    %6735 = vmatpush1.bf16.msra.mxu0 %v6176
    %6736 = vmatprep.subr.bf16.mxu0 %v6174
    %6737 = vmatpush1.bf16.msra.mxu0 %v6173
    %6738 = vmatprep.subr.bf16.mxu0 %v6171
    %6739 = vmatpush1.bf16.msra.mxu0 %v6170
    %6740 = vmatprep.subr.bf16.mxu0 %v6168
    %6741 = vmatpush1.bf16.msra.mxu0 %v6167
    %6742 = vmatprep.subr.bf16.mxu0 %v6165
    %6743 = vmatpush1.bf16.msra.mxu0 %v6164
    %6744 = vmatprep.subr.bf16.mxu0 %v6162
    %6745 = vmatpush1.bf16.msra.mxu0 %v6161
    %6746 = vmatprep.subr.bf16.mxu0 %v6207
    %6747 = vmatpush2.bf16.msra.mxu0 %v6206
    %6748 = vmatprep.subr.bf16.mxu0 %v6204
    %6749 = vmatpush2.bf16.msra.mxu0 %v6203
    %6750 = vmatprep.subr.bf16.mxu0 %v6201
    %6751 = vmatpush2.bf16.msra.mxu0 %v6200
    %6752 = vmatprep.subr.bf16.mxu0 %v6198
    %6753 = vmatpush2.bf16.msra.mxu0 %v6197
    %6754 = vmatprep.subr.bf16.mxu0 %v6195
    %6755 = vmatpush2.bf16.msra.mxu0 %v6194
    %6756 = vmatprep.subr.bf16.mxu0 %v6192
    %6757 = vmatpush2.bf16.msra.mxu0 %v6191
    %6758 = vmatprep.subr.bf16.mxu0 %v6189
    %6759 = vmatpush2.bf16.msra.mxu0 %v6188
    %6760 = vmatprep.subr.bf16.mxu0 %v6186
    %6761 = vmatpush2.bf16.msra.mxu0 %v6185
    %6762 = vmatprep.mubr.bf16.mxu0 %v4743
    %6763 = vmatmul.mubr.bf16.gmra.mxu0 %v4742
    %v6764 = vpop.f32.mrf.mxu0
    %v6765 = vadd.f32 %v6724, %v6764
    %v6766 = vpop.f32.mrf.mxu0
    %v6767 = vadd.f32 %v6726, %v6766
    %v6768 = vpop.f32.mrf.mxu0
    %v6769 = vpop.f32.mrf.mxu0
    %6770 = vdwg.mxu0
    %6771 = vmatprep.subr.bf16.mxu0 %v6231
    %6772 = vmatpush1.bf16.msra.mxu0 %v6230
    %6773 = vmatprep.subr.bf16.mxu0 %v6228
    %6774 = vmatpush1.bf16.msra.mxu0 %v6227
    %6775 = vmatprep.subr.bf16.mxu0 %v6225
    %6776 = vmatpush1.bf16.msra.mxu0 %v6224
    %6777 = vmatprep.subr.bf16.mxu0 %v6222
    %6778 = vmatpush1.bf16.msra.mxu0 %v6221
    %6779 = vmatprep.subr.bf16.mxu0 %v6219
    %6780 = vmatpush1.bf16.msra.mxu0 %v6218
    %6781 = vmatprep.subr.bf16.mxu0 %v6216
    %6782 = vmatpush1.bf16.msra.mxu0 %v6215
    %6783 = vmatprep.subr.bf16.mxu0 %v6213
    %6784 = vmatpush1.bf16.msra.mxu0 %v6212
    %6785 = vmatprep.subr.bf16.mxu0 %v6210
    %6786 = vmatpush1.bf16.msra.mxu0 %v6209
    %6787 = vmatprep.subr.bf16.mxu0 %v6255
    %6788 = vmatpush2.bf16.msra.mxu0 %v6254
    %6789 = vmatprep.subr.bf16.mxu0 %v6252
    %6790 = vmatpush2.bf16.msra.mxu0 %v6251
    %6791 = vmatprep.subr.bf16.mxu0 %v6249
    %6792 = vmatpush2.bf16.msra.mxu0 %v6248
    %6793 = vmatprep.subr.bf16.mxu0 %v6246
    %6794 = vmatpush2.bf16.msra.mxu0 %v6245
    %6795 = vmatprep.subr.bf16.mxu0 %v6243
    %6796 = vmatpush2.bf16.msra.mxu0 %v6242
    %6797 = vmatprep.subr.bf16.mxu0 %v6240
    %6798 = vmatpush2.bf16.msra.mxu0 %v6239
    %6799 = vmatprep.subr.bf16.mxu0 %v6237
    %6800 = vmatpush2.bf16.msra.mxu0 %v6236
    %6801 = vmatprep.subr.bf16.mxu0 %v6234
    %6802 = vmatpush2.bf16.msra.mxu0 %v6233
    %6803 = vmatprep.mubr.bf16.mxu0 %v4745
    %6804 = vmatmul.mubr.bf16.gmra.mxu0 %v4744
    %v6805 = vpop.f32.mrf.mxu0
    %v6806 = vadd.f32 %v6765, %v6805
    %v6807 = vpop.f32.mrf.mxu0
    %v6808 = vadd.f32 %v6767, %v6807
    %v6809 = vpop.f32.mrf.mxu0
    %v6810 = vpop.f32.mrf.mxu0
    %6811 = vdwg.mxu0
    %6812 = vmatprep.subr.bf16.mxu0 %v6279
    %6813 = vmatpush1.bf16.msra.mxu0 %v6278
    %6814 = vmatprep.subr.bf16.mxu0 %v6276
    %6815 = vmatpush1.bf16.msra.mxu0 %v6275
    %6816 = vmatprep.subr.bf16.mxu0 %v6273
    %6817 = vmatpush1.bf16.msra.mxu0 %v6272
    %6818 = vmatprep.subr.bf16.mxu0 %v6270
    %6819 = vmatpush1.bf16.msra.mxu0 %v6269
    %6820 = vmatprep.subr.bf16.mxu0 %v6267
    %6821 = vmatpush1.bf16.msra.mxu0 %v6266
    %6822 = vmatprep.subr.bf16.mxu0 %v6264
    %6823 = vmatpush1.bf16.msra.mxu0 %v6263
    %6824 = vmatprep.subr.bf16.mxu0 %v6261
    %6825 = vmatpush1.bf16.msra.mxu0 %v6260
    %6826 = vmatprep.subr.bf16.mxu0 %v6258
    %6827 = vmatpush1.bf16.msra.mxu0 %v6257
    %6828 = vmatprep.subr.bf16.mxu0 %v6303
    %6829 = vmatpush2.bf16.msra.mxu0 %v6302
    %6830 = vmatprep.subr.bf16.mxu0 %v6300
    %6831 = vmatpush2.bf16.msra.mxu0 %v6299
    %6832 = vmatprep.subr.bf16.mxu0 %v6297
    %6833 = vmatpush2.bf16.msra.mxu0 %v6296
    %6834 = vmatprep.subr.bf16.mxu0 %v6294
    %6835 = vmatpush2.bf16.msra.mxu0 %v6293
    %6836 = vmatprep.subr.bf16.mxu0 %v6291
    %6837 = vmatpush2.bf16.msra.mxu0 %v6290
    %6838 = vmatprep.subr.bf16.mxu0 %v6288
    %6839 = vmatpush2.bf16.msra.mxu0 %v6287
    %6840 = vmatprep.subr.bf16.mxu0 %v6285
    %6841 = vmatpush2.bf16.msra.mxu0 %v6284
    %6842 = vmatprep.subr.bf16.mxu0 %v6282
    %6843 = vmatpush2.bf16.msra.mxu0 %v6281
    %6844 = vmatprep.mubr.bf16.mxu0 %v4747
    %6845 = vmatmul.mubr.bf16.gmra.mxu0 %v4746
    %v6846 = vpop.f32.mrf.mxu0
    %v6847 = vadd.f32 %v6806, %v6846
    %v6848 = vpop.f32.mrf.mxu0
    %v6849 = vadd.f32 %v6808, %v6848
    %v6850 = vpop.f32.mrf.mxu0
    %v6851 = vpop.f32.mrf.mxu0
    %6852 = vdwg.mxu0
    %6853 = vmatprep.subr.bf16.mxu0 %v6327
    %6854 = vmatpush1.bf16.msra.mxu0 %v6326
    %6855 = vmatprep.subr.bf16.mxu0 %v6324
    %6856 = vmatpush1.bf16.msra.mxu0 %v6323
    %6857 = vmatprep.subr.bf16.mxu0 %v6321
    %6858 = vmatpush1.bf16.msra.mxu0 %v6320
    %6859 = vmatprep.subr.bf16.mxu0 %v6318
    %6860 = vmatpush1.bf16.msra.mxu0 %v6317
    %6861 = vmatprep.subr.bf16.mxu0 %v6315
    %6862 = vmatpush1.bf16.msra.mxu0 %v6314
    %6863 = vmatprep.subr.bf16.mxu0 %v6312
    %6864 = vmatpush1.bf16.msra.mxu0 %v6311
    %6865 = vmatprep.subr.bf16.mxu0 %v6309
    %6866 = vmatpush1.bf16.msra.mxu0 %v6308
    %6867 = vmatprep.subr.bf16.mxu0 %v6306
    %6868 = vmatpush1.bf16.msra.mxu0 %v6305
    %6869 = vmatprep.subr.bf16.mxu0 %v6351
    %6870 = vmatpush2.bf16.msra.mxu0 %v6350
    %6871 = vmatprep.subr.bf16.mxu0 %v6348
    %6872 = vmatpush2.bf16.msra.mxu0 %v6347
    %6873 = vmatprep.subr.bf16.mxu0 %v6345
    %6874 = vmatpush2.bf16.msra.mxu0 %v6344
    %6875 = vmatprep.subr.bf16.mxu0 %v6342
    %6876 = vmatpush2.bf16.msra.mxu0 %v6341
    %6877 = vmatprep.subr.bf16.mxu0 %v6339
    %6878 = vmatpush2.bf16.msra.mxu0 %v6338
    %6879 = vmatprep.subr.bf16.mxu0 %v6336
    %6880 = vmatpush2.bf16.msra.mxu0 %v6335
    %6881 = vmatprep.subr.bf16.mxu0 %v6333
    %6882 = vmatpush2.bf16.msra.mxu0 %v6332
    %6883 = vmatprep.subr.bf16.mxu0 %v6330
    %6884 = vmatpush2.bf16.msra.mxu0 %v6329
    %6885 = vmatprep.mubr.bf16.mxu0 %v4749
    %6886 = vmatmul.mubr.bf16.gmra.mxu0 %v4748
    %v6887 = vpop.f32.mrf.mxu0
    %v6888 = vadd.f32 %v6847, %v6887
    %v6889 = vpop.f32.mrf.mxu0
    %v6890 = vadd.f32 %v6849, %v6889
    %v6891 = vpop.f32.mrf.mxu0
    %v6892 = vpop.f32.mrf.mxu0
    %6893 = vdwg.mxu0
    %6894 = vmatprep.subr.bf16.mxu0 %v6375
    %6895 = vmatpush1.bf16.msra.mxu0 %v6374
    %6896 = vmatprep.subr.bf16.mxu0 %v6372
    %6897 = vmatpush1.bf16.msra.mxu0 %v6371
    %6898 = vmatprep.subr.bf16.mxu0 %v6369
    %6899 = vmatpush1.bf16.msra.mxu0 %v6368
    %6900 = vmatprep.subr.bf16.mxu0 %v6366
    %6901 = vmatpush1.bf16.msra.mxu0 %v6365
    %6902 = vmatprep.subr.bf16.mxu0 %v6363
    %6903 = vmatpush1.bf16.msra.mxu0 %v6362
    %6904 = vmatprep.subr.bf16.mxu0 %v6360
    %6905 = vmatpush1.bf16.msra.mxu0 %v6359
    %6906 = vmatprep.subr.bf16.mxu0 %v6357
    %6907 = vmatpush1.bf16.msra.mxu0 %v6356
    %6908 = vmatprep.subr.bf16.mxu0 %v6354
    %6909 = vmatpush1.bf16.msra.mxu0 %v6353
    %6910 = vmatprep.subr.bf16.mxu0 %v6399
    %6911 = vmatpush2.bf16.msra.mxu0 %v6398
    %6912 = vmatprep.subr.bf16.mxu0 %v6396
    %6913 = vmatpush2.bf16.msra.mxu0 %v6395
    %6914 = vmatprep.subr.bf16.mxu0 %v6393
    %6915 = vmatpush2.bf16.msra.mxu0 %v6392
    %6916 = vmatprep.subr.bf16.mxu0 %v6390
    %6917 = vmatpush2.bf16.msra.mxu0 %v6389
    %6918 = vmatprep.subr.bf16.mxu0 %v6387
    %6919 = vmatpush2.bf16.msra.mxu0 %v6386
    %6920 = vmatprep.subr.bf16.mxu0 %v6384
    %6921 = vmatpush2.bf16.msra.mxu0 %v6383
    %6922 = vmatprep.subr.bf16.mxu0 %v6381
    %6923 = vmatpush2.bf16.msra.mxu0 %v6380
    %6924 = vmatprep.subr.bf16.mxu0 %v6378
    %6925 = vmatpush2.bf16.msra.mxu0 %v6377
    %6926 = vmatprep.mubr.bf16.mxu0 %v4751
    %6927 = vmatmul.mubr.bf16.gmra.mxu0 %v4750
    %v6928 = vpop.f32.mrf.mxu0
    %v6929 = vadd.f32 %v6888, %v6928
    %v6930 = vpop.f32.mrf.mxu0
    %v6931 = vadd.f32 %v6890, %v6930
    %v6932 = vpop.f32.mrf.mxu0
    %v6933 = vpop.f32.mrf.mxu0
    %6934 = vdwg.mxu0
    %6935 = vmatprep.subr.bf16.mxu0 0
    %6936 = vmatpush1.bf16.msra.mxu0 %v6136
    %6937 = vmatprep.subr.bf16.mxu0 0
    %6938 = vmatpush1.bf16.msra.mxu0 %v6133
    %6939 = vmatprep.subr.bf16.mxu0 0
    %6940 = vmatpush1.bf16.msra.mxu0 %v6130
    %6941 = vmatprep.subr.bf16.mxu0 0
    %6942 = vmatpush1.bf16.msra.mxu0 %v6127
    %6943 = vmatprep.subr.bf16.mxu0 0
    %6944 = vmatpush1.bf16.msra.mxu0 %v6124
    %6945 = vmatprep.subr.bf16.mxu0 0
    %6946 = vmatpush1.bf16.msra.mxu0 %v6121
    %6947 = vmatprep.subr.bf16.mxu0 0
    %6948 = vmatpush1.bf16.msra.mxu0 %v6118
    %6949 = vmatprep.subr.bf16.mxu0 0
    %6950 = vmatpush1.bf16.msra.mxu0 %v6115
    %6951 = vmatprep.subr.bf16.mxu0 0
    %6952 = vmatpush2.bf16.msra.mxu0 %v6160
    %6953 = vmatprep.subr.bf16.mxu0 0
    %6954 = vmatpush2.bf16.msra.mxu0 %v6157
    %6955 = vmatprep.subr.bf16.mxu0 0
    %6956 = vmatpush2.bf16.msra.mxu0 %v6154
    %6957 = vmatprep.subr.bf16.mxu0 0
    %6958 = vmatpush2.bf16.msra.mxu0 %v6151
    %6959 = vmatprep.subr.bf16.mxu0 0
    %6960 = vmatpush2.bf16.msra.mxu0 %v6148
    %6961 = vmatprep.subr.bf16.mxu0 0
    %6962 = vmatpush2.bf16.msra.mxu0 %v6145
    %6963 = vmatprep.subr.bf16.mxu0 0
    %6964 = vmatpush2.bf16.msra.mxu0 %v6142
    %6965 = vmatprep.subr.bf16.mxu0 0
    %6966 = vmatpush2.bf16.msra.mxu0 %v6139
    %6967 = vmatprep.mubr.bf16.mxu0 %v4741
    %6968 = vmatmul.mubr.bf16.gmra.mxu0 %v4740
    %v6969 = vpop.f32.mrf.mxu0
    %v6970 = vadd.f32 %v5149, %v6969
    %v6971 = vpop.f32.mrf.mxu0
    %v6972 = vpop.f32.mrf.mxu0
    %v6973 = vpop.f32.mrf.mxu0
    %6974 = vdwg.mxu0
    %6975 = vmatprep.subr.bf16.mxu0 0
    %6976 = vmatpush1.bf16.msra.mxu0 %v6184
    %6977 = vmatprep.subr.bf16.mxu0 0
    %6978 = vmatpush1.bf16.msra.mxu0 %v6181
    %6979 = vmatprep.subr.bf16.mxu0 0
    %6980 = vmatpush1.bf16.msra.mxu0 %v6178
    %6981 = vmatprep.subr.bf16.mxu0 0
    %6982 = vmatpush1.bf16.msra.mxu0 %v6175
    %6983 = vmatprep.subr.bf16.mxu0 0
    %6984 = vmatpush1.bf16.msra.mxu0 %v6172
    %6985 = vmatprep.subr.bf16.mxu0 0
    %6986 = vmatpush1.bf16.msra.mxu0 %v6169
    %6987 = vmatprep.subr.bf16.mxu0 0
    %6988 = vmatpush1.bf16.msra.mxu0 %v6166
    %6989 = vmatprep.subr.bf16.mxu0 0
    %6990 = vmatpush1.bf16.msra.mxu0 %v6163
    %6991 = vmatprep.subr.bf16.mxu0 0
    %6992 = vmatpush2.bf16.msra.mxu0 %v6208
    %6993 = vmatprep.subr.bf16.mxu0 0
    %6994 = vmatpush2.bf16.msra.mxu0 %v6205
    %6995 = vmatprep.subr.bf16.mxu0 0
    %6996 = vmatpush2.bf16.msra.mxu0 %v6202
    %6997 = vmatprep.subr.bf16.mxu0 0
    %6998 = vmatpush2.bf16.msra.mxu0 %v6199
    %6999 = vmatprep.subr.bf16.mxu0 0
    %7000 = vmatpush2.bf16.msra.mxu0 %v6196
    %7001 = vmatprep.subr.bf16.mxu0 0
    %7002 = vmatpush2.bf16.msra.mxu0 %v6193
    %7003 = vmatprep.subr.bf16.mxu0 0
    %7004 = vmatpush2.bf16.msra.mxu0 %v6190
    %7005 = vmatprep.subr.bf16.mxu0 0
    %7006 = vmatpush2.bf16.msra.mxu0 %v6187
    %7007 = vmatprep.mubr.bf16.mxu0 %v4743
    %7008 = vmatmul.mubr.bf16.gmra.mxu0 %v4742
    %v7009 = vpop.f32.mrf.mxu0
    %v7010 = vadd.f32 %v6970, %v7009
    %v7011 = vpop.f32.mrf.mxu0
    %v7012 = vpop.f32.mrf.mxu0
    %v7013 = vpop.f32.mrf.mxu0
    %7014 = vdwg.mxu0
    %7015 = vmatprep.subr.bf16.mxu0 0
    %7016 = vmatpush1.bf16.msra.mxu0 %v6232
    %7017 = vmatprep.subr.bf16.mxu0 0
    %7018 = vmatpush1.bf16.msra.mxu0 %v6229
    %7019 = vmatprep.subr.bf16.mxu0 0
    %7020 = vmatpush1.bf16.msra.mxu0 %v6226
    %7021 = vmatprep.subr.bf16.mxu0 0
    %7022 = vmatpush1.bf16.msra.mxu0 %v6223
    %7023 = vmatprep.subr.bf16.mxu0 0
    %7024 = vmatpush1.bf16.msra.mxu0 %v6220
    %7025 = vmatprep.subr.bf16.mxu0 0
    %7026 = vmatpush1.bf16.msra.mxu0 %v6217
    %7027 = vmatprep.subr.bf16.mxu0 0
    %7028 = vmatpush1.bf16.msra.mxu0 %v6214
    %7029 = vmatprep.subr.bf16.mxu0 0
    %7030 = vmatpush1.bf16.msra.mxu0 %v6211
    %7031 = vmatprep.subr.bf16.mxu0 0
    %7032 = vmatpush2.bf16.msra.mxu0 %v6256
    %7033 = vmatprep.subr.bf16.mxu0 0
    %7034 = vmatpush2.bf16.msra.mxu0 %v6253
    %7035 = vmatprep.subr.bf16.mxu0 0
    %7036 = vmatpush2.bf16.msra.mxu0 %v6250
    %7037 = vmatprep.subr.bf16.mxu0 0
    %7038 = vmatpush2.bf16.msra.mxu0 %v6247
    %7039 = vmatprep.subr.bf16.mxu0 0
    %7040 = vmatpush2.bf16.msra.mxu0 %v6244
    %7041 = vmatprep.subr.bf16.mxu0 0
    %7042 = vmatpush2.bf16.msra.mxu0 %v6241
    %7043 = vmatprep.subr.bf16.mxu0 0
    %7044 = vmatpush2.bf16.msra.mxu0 %v6238
    %7045 = vmatprep.subr.bf16.mxu0 0
    %7046 = vmatpush2.bf16.msra.mxu0 %v6235
    %7047 = vmatprep.mubr.bf16.mxu0 %v4745
    %7048 = vmatmul.mubr.bf16.gmra.mxu0 %v4744
    %v7049 = vpop.f32.mrf.mxu0
    %v7050 = vadd.f32 %v7010, %v7049
    %v7051 = vpop.f32.mrf.mxu0
    %v7052 = vpop.f32.mrf.mxu0
    %v7053 = vpop.f32.mrf.mxu0
    %7054 = vdwg.mxu0
    %7055 = vmatprep.subr.bf16.mxu0 0
    %7056 = vmatpush1.bf16.msra.mxu0 %v6280
    %7057 = vmatprep.subr.bf16.mxu0 0
    %7058 = vmatpush1.bf16.msra.mxu0 %v6277
    %7059 = vmatprep.subr.bf16.mxu0 0
    %7060 = vmatpush1.bf16.msra.mxu0 %v6274
    %7061 = vmatprep.subr.bf16.mxu0 0
    %7062 = vmatpush1.bf16.msra.mxu0 %v6271
    %7063 = vmatprep.subr.bf16.mxu0 0
    %7064 = vmatpush1.bf16.msra.mxu0 %v6268
    %7065 = vmatprep.subr.bf16.mxu0 0
    %7066 = vmatpush1.bf16.msra.mxu0 %v6265
    %7067 = vmatprep.subr.bf16.mxu0 0
    %7068 = vmatpush1.bf16.msra.mxu0 %v6262
    %7069 = vmatprep.subr.bf16.mxu0 0
    %7070 = vmatpush1.bf16.msra.mxu0 %v6259
    %7071 = vmatprep.subr.bf16.mxu0 0
    %7072 = vmatpush2.bf16.msra.mxu0 %v6304
    %7073 = vmatprep.subr.bf16.mxu0 0
    %7074 = vmatpush2.bf16.msra.mxu0 %v6301
    %7075 = vmatprep.subr.bf16.mxu0 0
    %7076 = vmatpush2.bf16.msra.mxu0 %v6298
    %7077 = vmatprep.subr.bf16.mxu0 0
    %7078 = vmatpush2.bf16.msra.mxu0 %v6295
    %7079 = vmatprep.subr.bf16.mxu0 0
    %7080 = vmatpush2.bf16.msra.mxu0 %v6292
    %7081 = vmatprep.subr.bf16.mxu0 0
    %7082 = vmatpush2.bf16.msra.mxu0 %v6289
    %7083 = vmatprep.subr.bf16.mxu0 0
    %7084 = vmatpush2.bf16.msra.mxu0 %v6286
    %7085 = vmatprep.subr.bf16.mxu0 0
    %7086 = vmatpush2.bf16.msra.mxu0 %v6283
    %7087 = vmatprep.mubr.bf16.mxu0 %v4747
    %7088 = vmatmul.mubr.bf16.gmra.mxu0 %v4746
    %v7089 = vpop.f32.mrf.mxu0
    %v7090 = vadd.f32 %v7050, %v7089
    %v7091 = vpop.f32.mrf.mxu0
    %v7092 = vpop.f32.mrf.mxu0
    %v7093 = vpop.f32.mrf.mxu0
    %7094 = vdwg.mxu0
    %7095 = vmatprep.subr.bf16.mxu0 0
    %7096 = vmatpush1.bf16.msra.mxu0 %v6328
    %7097 = vmatprep.subr.bf16.mxu0 0
    %7098 = vmatpush1.bf16.msra.mxu0 %v6325
    %7099 = vmatprep.subr.bf16.mxu0 0
    %7100 = vmatpush1.bf16.msra.mxu0 %v6322
    %7101 = vmatprep.subr.bf16.mxu0 0
    %7102 = vmatpush1.bf16.msra.mxu0 %v6319
    %7103 = vmatprep.subr.bf16.mxu0 0
    %7104 = vmatpush1.bf16.msra.mxu0 %v6316
    %7105 = vmatprep.subr.bf16.mxu0 0
    %7106 = vmatpush1.bf16.msra.mxu0 %v6313
    %7107 = vmatprep.subr.bf16.mxu0 0
    %7108 = vmatpush1.bf16.msra.mxu0 %v6310
    %7109 = vmatprep.subr.bf16.mxu0 0
    %7110 = vmatpush1.bf16.msra.mxu0 %v6307
    %7111 = vmatprep.subr.bf16.mxu0 0
    %7112 = vmatpush2.bf16.msra.mxu0 %v6352
    %7113 = vmatprep.subr.bf16.mxu0 0
    %7114 = vmatpush2.bf16.msra.mxu0 %v6349
    %7115 = vmatprep.subr.bf16.mxu0 0
    %7116 = vmatpush2.bf16.msra.mxu0 %v6346
    %7117 = vmatprep.subr.bf16.mxu0 0
    %7118 = vmatpush2.bf16.msra.mxu0 %v6343
    %7119 = vmatprep.subr.bf16.mxu0 0
    %7120 = vmatpush2.bf16.msra.mxu0 %v6340
    %7121 = vmatprep.subr.bf16.mxu0 0
    %7122 = vmatpush2.bf16.msra.mxu0 %v6337
    %7123 = vmatprep.subr.bf16.mxu0 0
    %7124 = vmatpush2.bf16.msra.mxu0 %v6334
    %7125 = vmatprep.subr.bf16.mxu0 0
    %7126 = vmatpush2.bf16.msra.mxu0 %v6331
    %7127 = vmatprep.mubr.bf16.mxu0 %v4749
    %7128 = vmatmul.mubr.bf16.gmra.mxu0 %v4748
    %v7129 = vpop.f32.mrf.mxu0
    %v7130 = vadd.f32 %v7090, %v7129
    %v7131 = vpop.f32.mrf.mxu0
    %v7132 = vpop.f32.mrf.mxu0
    %v7133 = vpop.f32.mrf.mxu0
    %7134 = vdwg.mxu0
    %7135 = vmatprep.subr.bf16.mxu0 0
    %7136 = vmatpush1.bf16.msra.mxu0 %v6376
    %7137 = vmatprep.subr.bf16.mxu0 0
    %7138 = vmatpush1.bf16.msra.mxu0 %v6373
    %7139 = vmatprep.subr.bf16.mxu0 0
    %7140 = vmatpush1.bf16.msra.mxu0 %v6370
    %7141 = vmatprep.subr.bf16.mxu0 0
    %7142 = vmatpush1.bf16.msra.mxu0 %v6367
    %7143 = vmatprep.subr.bf16.mxu0 0
    %7144 = vmatpush1.bf16.msra.mxu0 %v6364
    %7145 = vmatprep.subr.bf16.mxu0 0
    %7146 = vmatpush1.bf16.msra.mxu0 %v6361
    %7147 = vmatprep.subr.bf16.mxu0 0
    %7148 = vmatpush1.bf16.msra.mxu0 %v6358
    %7149 = vmatprep.subr.bf16.mxu0 0
    %7150 = vmatpush1.bf16.msra.mxu0 %v6355
    %7151 = vmatprep.subr.bf16.mxu0 0
    %7152 = vmatpush2.bf16.msra.mxu0 %v6400
    %7153 = vmatprep.subr.bf16.mxu0 0
    %7154 = vmatpush2.bf16.msra.mxu0 %v6397
    %7155 = vmatprep.subr.bf16.mxu0 0
    %7156 = vmatpush2.bf16.msra.mxu0 %v6394
    %7157 = vmatprep.subr.bf16.mxu0 0
    %7158 = vmatpush2.bf16.msra.mxu0 %v6391
    %7159 = vmatprep.subr.bf16.mxu0 0
    %7160 = vmatpush2.bf16.msra.mxu0 %v6388
    %7161 = vmatprep.subr.bf16.mxu0 0
    %7162 = vmatpush2.bf16.msra.mxu0 %v6385
    %7163 = vmatprep.subr.bf16.mxu0 0
    %7164 = vmatpush2.bf16.msra.mxu0 %v6382
    %7165 = vmatprep.subr.bf16.mxu0 0
    %7166 = vmatpush2.bf16.msra.mxu0 %v6379
    %7167 = vmatprep.mubr.bf16.mxu0 %v4751
    %7168 = vmatmul.mubr.bf16.gmra.mxu0 %v4750
    %v7169 = vpop.f32.mrf.mxu0
    %v7170 = vadd.f32 %v7130, %v7169
    %v7171 = vpop.f32.mrf.mxu0
    %v7172 = vpop.f32.mrf.mxu0
    %v7173 = vpop.f32.mrf.mxu0
    %7174 = vdwg.mxu0
    %v7175 = vmax.f32 %v6929, 0.0
    %v7176 = vmax.f32 %v6931, 0.0
    %v7177 = vmax.f32 %v7170, 0.0
    %v7178 = vpack.c.bf16 %v7175, %v7175
    %v7179 = vpack.c.bf16 %v7176, %v7176
    %v7180 = vpack.c.bf16 %v7177, %v7177
    %v7181 = vld [vmem:[#allocation9] sm:$0xf]
    %v7182 = vld [vmem:[#allocation9 + $0x4] sm:$0xf]
    %v7183 = vld [vmem:[#allocation9 + $0x8] sm:$0xf]
    %v7184 = vld [vmem:[#allocation9 + $0xc] sm:$0xf]
    %v7185 = vld [vmem:[#allocation9 + $0x10] sm:$0xf]
    %v7186 = vld [vmem:[#allocation9 + $0x14] sm:$0xf]
    %v7187 = vld [vmem:[#allocation9 + $0x18] sm:$0xf]
    %v7188 = vld [vmem:[#allocation9 + $0x1c] sm:$0xf]
    %v7189 = vld [vmem:[#allocation9 + $0x20] sm:$0xf]
    %v7190 = vld [vmem:[#allocation9 + $0x24] sm:$0xf]
    %v7191 = vld [vmem:[#allocation9 + $0x28] sm:$0xf]
    %v7192 = vld [vmem:[#allocation9 + $0x2c] sm:$0xf]
    %v7193 = vld [vmem:[#allocation9 + $0x30] sm:$0xf]
    %v7194 = vld [vmem:[#allocation9 + $0x34] sm:$0xf]
    %v7195 = vld [vmem:[#allocation9 + $0x38] sm:$0xf]
    %v7196 = vld [vmem:[#allocation9 + $0x3c] sm:$0xf]
    %v7197 = vld [vmem:[#allocation9 + $0x40] sm:$0xf]
    %v7198 = vld [vmem:[#allocation9 + $0x44] sm:$0xf]
    %v7199 = vld [vmem:[#allocation9 + $0x48] sm:$0xf]
    %v7200 = vld [vmem:[#allocation9 + $0x4c] sm:$0xf]
    %v7201 = vld [vmem:[#allocation9 + $0x50] sm:$0xf]
    %v7202 = vld [vmem:[#allocation9 + $0x54] sm:$0xf]
    %v7203 = vld [vmem:[#allocation9 + $0x58] sm:$0xf]
    %v7204 = vld [vmem:[#allocation9 + $0x5c] sm:$0xf]
    %v7205 = vld [vmem:[#allocation9 + $0x60] sm:$0xf]
    %v7206 = vld [vmem:[#allocation9 + $0x64] sm:$0xf]
    %v7207 = vld [vmem:[#allocation9 + $0x68] sm:$0xf]
    %v7208 = vld [vmem:[#allocation9 + $0x6c] sm:$0xf]
    %v7209 = vld [vmem:[#allocation9 + $0x70] sm:$0xf]
    %v7210 = vld [vmem:[#allocation9 + $0x74] sm:$0xf]
    %v7211 = vld [vmem:[#allocation9 + $0x78] sm:$0xf]
    %v7212 = vld [vmem:[#allocation9 + $0x7c] sm:$0xf]
    %v7213 = vld [vmem:[#allocation9 + $0x80] sm:$0xf]
    %v7214 = vld [vmem:[#allocation9 + $0x84] sm:$0xf]
    %v7215 = vld [vmem:[#allocation9 + $0x88] sm:$0xf]
    %v7216 = vld [vmem:[#allocation9 + $0x8c] sm:$0xf]
    %v7217 = vld [vmem:[#allocation9 + $0x90] sm:$0xf]
    %v7218 = vld [vmem:[#allocation9 + $0x94] sm:$0xf]
    %v7219 = vld [vmem:[#allocation9 + $0x98] sm:$0xf]
    %v7220 = vld [vmem:[#allocation9 + $0x9c] sm:$0xf]
    %v7221 = vld [vmem:[#allocation9 + $0xa0] sm:$0xf]
    %v7222 = vld [vmem:[#allocation9 + $0xa4] sm:$0xf]
    %v7223 = vld [vmem:[#allocation9 + $0xa8] sm:$0xf]
    %v7224 = vld [vmem:[#allocation9 + $0xac] sm:$0xf]
    %v7225 = vld [vmem:[#allocation9 + $0xb0] sm:$0xf]
    %v7226 = vld [vmem:[#allocation9 + $0xb4] sm:$0xf]
    %v7227 = vld [vmem:[#allocation9 + $0xb8] sm:$0xf]
    %v7228 = vld [vmem:[#allocation9 + $0xbc] sm:$0xf]
    %v7229 = vld [vmem:[#allocation10] sm:$0x1]
    %v7231 = vlaneseq
    %v7232 = vshrl.u32 %v7231, 7
    %v7233 = vsub.s32 0, %v7232
    %v7234 = vrot.slane %v7229, %v7233
    %v7284 = vunpack.c.l.b16 %v7181
    %v7285 = vunpack.c.l.b16 %v7182
    %v7286 = vunpack.c.l.b16 %v7183
    %v7287 = vunpack.c.l.b16 %v7184
    %v7288 = vunpack.c.l.b16 %v7185
    %v7289 = vunpack.c.l.b16 %v7186
    %v7290 = vunpack.c.l.b16 %v7187
    %v7291 = vunpack.c.l.b16 %v7188
    %v7292 = vunpack.c.l.b16 %v7189
    %v7293 = vunpack.c.l.b16 %v7190
    %v7294 = vunpack.c.l.b16 %v7191
    %v7295 = vunpack.c.l.b16 %v7192
    %v7296 = vunpack.c.l.b16 %v7193
    %v7297 = vunpack.c.l.b16 %v7194
    %v7298 = vunpack.c.l.b16 %v7195
    %v7299 = vunpack.c.l.b16 %v7196
    %v7300 = vunpack.c.l.b16 %v7197
    %v7301 = vunpack.c.l.b16 %v7198
    %v7302 = vunpack.c.l.b16 %v7199
    %v7303 = vunpack.c.l.b16 %v7200
    %v7304 = vunpack.c.l.b16 %v7201
    %v7305 = vunpack.c.l.b16 %v7202
    %v7306 = vunpack.c.l.b16 %v7203
    %v7307 = vunpack.c.l.b16 %v7204
    %v7308 = vunpack.c.l.b16 %v7205
    %v7309 = vunpack.c.l.b16 %v7206
    %v7310 = vunpack.c.l.b16 %v7207
    %v7311 = vunpack.c.l.b16 %v7208
    %v7312 = vunpack.c.l.b16 %v7209
    %v7313 = vunpack.c.l.b16 %v7210
    %v7314 = vunpack.c.l.b16 %v7211
    %v7315 = vunpack.c.l.b16 %v7212
    %v7316 = vunpack.c.l.b16 %v7213
    %v7317 = vunpack.c.l.b16 %v7214
    %v7318 = vunpack.c.l.b16 %v7215
    %v7319 = vunpack.c.l.b16 %v7216
    %v7320 = vunpack.c.l.b16 %v7217
    %v7321 = vunpack.c.l.b16 %v7218
    %v7322 = vunpack.c.l.b16 %v7219
    %v7323 = vunpack.c.l.b16 %v7220
    %v7324 = vunpack.c.l.b16 %v7221
    %v7325 = vunpack.c.l.b16 %v7222
    %v7326 = vunpack.c.l.b16 %v7223
    %v7327 = vunpack.c.l.b16 %v7224
    %v7328 = vunpack.c.l.b16 %v7225
    %v7329 = vunpack.c.l.b16 %v7226
    %v7330 = vunpack.c.l.b16 %v7227
    %v7331 = vunpack.c.l.b16 %v7228
    %v7332 = vpack.c.b16 %v7285, %v7284
    %v7333 = vpack.c.b16 %v7287, %v7286
    %v7334 = vpack.c.b16 %v7289, %v7288
    %v7335 = vpack.c.b16 %v7291, %v7290
    %v7336 = vpack.c.b16 %v7293, %v7292
    %v7337 = vpack.c.b16 %v7295, %v7294
    %v7338 = vpack.c.b16 %v7297, %v7296
    %v7339 = vpack.c.b16 %v7299, %v7298
    %v7340 = vpack.c.b16 %v7301, %v7300
    %v7341 = vpack.c.b16 %v7303, %v7302
    %v7342 = vpack.c.b16 %v7305, %v7304
    %v7343 = vpack.c.b16 %v7307, %v7306
    %v7344 = vpack.c.b16 %v7309, %v7308
    %v7345 = vpack.c.b16 %v7311, %v7310
    %v7346 = vpack.c.b16 %v7313, %v7312
    %v7347 = vpack.c.b16 %v7315, %v7314
    %v7348 = vpack.c.b16 %v7317, %v7316
    %v7349 = vpack.c.b16 %v7319, %v7318
    %v7350 = vpack.c.b16 %v7321, %v7320
    %v7351 = vpack.c.b16 %v7323, %v7322
    %v7352 = vpack.c.b16 %v7325, %v7324
    %v7353 = vpack.c.b16 %v7327, %v7326
    %v7354 = vpack.c.b16 %v7329, %v7328
    %v7355 = vpack.c.b16 %v7331, %v7330
    %7380 = vmatprep.subr.bf16.mxu0 0
    %7381 = vmatpush1.bf16.msra.mxu0 %v7339
    %7382 = vmatprep.subr.bf16.mxu0 0
    %7383 = vmatpush1.bf16.msra.mxu0 %v7338
    %7384 = vmatprep.subr.bf16.mxu0 0
    %7385 = vmatpush1.bf16.msra.mxu0 %v7337
    %7386 = vmatprep.subr.bf16.mxu0 0
    %7387 = vmatpush1.bf16.msra.mxu0 %v7336
    %7388 = vmatprep.subr.bf16.mxu0 0
    %7389 = vmatpush1.bf16.msra.mxu0 %v7335
    %7390 = vmatprep.subr.bf16.mxu0 0
    %7391 = vmatpush1.bf16.msra.mxu0 %v7334
    %7392 = vmatprep.subr.bf16.mxu0 0
    %7393 = vmatpush1.bf16.msra.mxu0 %v7333
    %7394 = vmatprep.subr.bf16.mxu0 0
    %7395 = vmatpush1.bf16.msra.mxu0 %v7332
    %7396 = vmatprep.subr.bf16.mxu0 0
    %7397 = vmatpush2.bf16.msra.mxu0 %v7347
    %7398 = vmatprep.subr.bf16.mxu0 0
    %7399 = vmatpush2.bf16.msra.mxu0 %v7346
    %7400 = vmatprep.subr.bf16.mxu0 0
    %7401 = vmatpush2.bf16.msra.mxu0 %v7345
    %7402 = vmatprep.subr.bf16.mxu0 0
    %7403 = vmatpush2.bf16.msra.mxu0 %v7344
    %7404 = vmatprep.subr.bf16.mxu0 0
    %7405 = vmatpush2.bf16.msra.mxu0 %v7343
    %7406 = vmatprep.subr.bf16.mxu0 0
    %7407 = vmatpush2.bf16.msra.mxu0 %v7342
    %7408 = vmatprep.subr.bf16.mxu0 0
    %7409 = vmatpush2.bf16.msra.mxu0 %v7341
    %7410 = vmatprep.subr.bf16.mxu0 0
    %7411 = vmatpush2.bf16.msra.mxu0 %v7340
    %7412 = vmatprep.mubr.bf16.mxu0 %v7179
    %7413 = vmatmul.mubr.bf16.gmra.mxu0 %v7178
    %v7414 = vpop.f32.mrf.mxu0
    %v7415 = vadd.f32 %v7234, %v7414
    %v7416 = vpop.f32.mrf.mxu0
    %v7417 = vpop.f32.mrf.mxu0
    %v7418 = vpop.f32.mrf.mxu0
    %7419 = vdwg.mxu0
    %7420 = vmatprep.subr.bf16.mxu0 0
    %7421 = vmatpush1.bf16.msra.mxu0 %v7355
    %7422 = vmatprep.subr.bf16.mxu0 0
    %7423 = vmatpush1.bf16.msra.mxu0 %v7354
    %7424 = vmatprep.subr.bf16.mxu0 0
    %7425 = vmatpush1.bf16.msra.mxu0 %v7353
    %7426 = vmatprep.subr.bf16.mxu0 0
    %7427 = vmatpush1.bf16.msra.mxu0 %v7352
    %7428 = vmatprep.subr.bf16.mxu0 0
    %7429 = vmatpush1.bf16.msra.mxu0 %v7351
    %7430 = vmatprep.subr.bf16.mxu0 0
    %7431 = vmatpush1.bf16.msra.mxu0 %v7350
    %7432 = vmatprep.subr.bf16.mxu0 0
    %7433 = vmatpush1.bf16.msra.mxu0 %v7349
    %7434 = vmatprep.subr.bf16.mxu0 0
    %7435 = vmatpush1.bf16.msra.mxu0 %v7348
    %7436 = vmatprep.subr.bf16.mxu0 0
    %7437 = vmatpush2.bf16.msra.mxu0 0
    %7438 = vmatprep.subr.bf16.mxu0 0
    %7439 = vmatpush2.bf16.msra.mxu0 0
    %7440 = vmatprep.subr.bf16.mxu0 0
    %7441 = vmatpush2.bf16.msra.mxu0 0
    %7442 = vmatprep.subr.bf16.mxu0 0
    %7443 = vmatpush2.bf16.msra.mxu0 0
    %7444 = vmatprep.subr.bf16.mxu0 0
    %7445 = vmatpush2.bf16.msra.mxu0 0
    %7446 = vmatprep.subr.bf16.mxu0 0
    %7447 = vmatpush2.bf16.msra.mxu0 0
    %7448 = vmatprep.subr.bf16.mxu0 0
    %7449 = vmatpush2.bf16.msra.mxu0 0
    %7450 = vmatprep.subr.bf16.mxu0 0
    %7451 = vmatpush2.bf16.msra.mxu0 0
    %7452 = vmatprep.mubr.bf16.mxu0 0
    %7453 = vmatmul.mubr.bf16.gmra.mxu0 %v7180
    %v7454 = vpop.f32.mrf.mxu0
    %v7455 = vadd.f32 %v7415, %v7454
    %v7456 = vpop.f32.mrf.mxu0
    %v7457 = vpop.f32.mrf.mxu0
    %v7458 = vpop.f32.mrf.mxu0
    %7459 = vdwg.mxu0
    %v7460 = vmax.f32 %v7455, 0.0
    %v7461 = vpack.c.bf16 %v7460, %v7460
    %v7462 = vld [vmem:[#allocation12] sm:$0xf]
    %v7463 = vld [vmem:[#allocation12 + $0x4] sm:$0xf]
    %v7464 = vld [vmem:[#allocation12 + $0x8] sm:$0xf]
    %v7465 = vld [vmem:[#allocation12 + $0xc] sm:$0xf]
    %v7466 = vld [vmem:[#allocation12 + $0x10] sm:$0xf]
    %v7467 = vld [vmem:[#allocation12 + $0x14] sm:$0xf]
    %v7468 = vld [vmem:[#allocation12 + $0x18] sm:$0xf]
    %v7469 = vld [vmem:[#allocation12 + $0x1c] sm:$0xf]
    %v7470 = vld [vmem:[#allocation12 + $0x20] sm:$0xf]
    %v7471 = vld [vmem:[#allocation12 + $0x24] sm:$0xf]
    %v7472 = vld [vmem:[#allocation12 + $0x28] sm:$0xf]
    %v7473 = vld [vmem:[#allocation12 + $0x2c] sm:$0xf]
    %v7474 = vld [vmem:[#allocation12 + $0x30] sm:$0xf]
    %v7475 = vld [vmem:[#allocation12 + $0x34] sm:$0xf]
    %v7476 = vld [vmem:[#allocation12 + $0x38] sm:$0xf]
    %v7477 = vld [vmem:[#allocation12 + $0x3c] sm:$0xf]
    %v7478 = vld [vmem:[#allocation13] sm:$0x1]
    %v7480 = vlaneseq
    %v7481 = vshrl.u32 %v7480, 7
    %v7482 = vsub.s32 0, %v7481
    %v7483 = vrot.slane %v7478, %v7482
    %v7501 = vunpack.c.l.b16 %v7462
    %v7502 = vunpack.c.l.b16 %v7463
    %v7503 = vunpack.c.l.b16 %v7464
    %v7504 = vunpack.c.l.b16 %v7465
    %v7505 = vunpack.c.l.b16 %v7466
    %v7506 = vunpack.c.l.b16 %v7467
    %v7507 = vunpack.c.l.b16 %v7468
    %v7508 = vunpack.c.l.b16 %v7469
    %v7509 = vunpack.c.l.b16 %v7470
    %v7510 = vunpack.c.l.b16 %v7471
    %v7511 = vunpack.c.l.b16 %v7472
    %v7512 = vunpack.c.l.b16 %v7473
    %v7513 = vunpack.c.l.b16 %v7474
    %v7514 = vunpack.c.l.b16 %v7475
    %v7515 = vunpack.c.l.b16 %v7476
    %v7516 = vunpack.c.l.b16 %v7477
    %v7517 = vpack.c.b16 %v7502, %v7501
    %v7518 = vpack.c.b16 %v7504, %v7503
    %v7519 = vpack.c.b16 %v7506, %v7505
    %v7520 = vpack.c.b16 %v7508, %v7507
    %v7521 = vpack.c.b16 %v7510, %v7509
    %v7522 = vpack.c.b16 %v7512, %v7511
    %v7523 = vpack.c.b16 %v7514, %v7513
    %v7524 = vpack.c.b16 %v7516, %v7515
    %7533 = vmatprep.subr.bf16.mxu0 0
    %7534 = vmatpush1.bf16.msra.mxu0 %v7524
    %7535 = vmatprep.subr.bf16.mxu0 0
    %7536 = vmatpush1.bf16.msra.mxu0 %v7523
    %7537 = vmatprep.subr.bf16.mxu0 0
    %7538 = vmatpush1.bf16.msra.mxu0 %v7522
    %7539 = vmatprep.subr.bf16.mxu0 0
    %7540 = vmatpush1.bf16.msra.mxu0 %v7521
    %7541 = vmatprep.subr.bf16.mxu0 0
    %7542 = vmatpush1.bf16.msra.mxu0 %v7520
    %7543 = vmatprep.subr.bf16.mxu0 0
    %7544 = vmatpush1.bf16.msra.mxu0 %v7519
    %7545 = vmatprep.subr.bf16.mxu0 0
    %7546 = vmatpush1.bf16.msra.mxu0 %v7518
    %7547 = vmatprep.subr.bf16.mxu0 0
    %7548 = vmatpush1.bf16.msra.mxu0 %v7517
    %7549 = vmatprep.subr.bf16.mxu0 0
    %7550 = vmatpush2.bf16.msra.mxu0 0
    %7551 = vmatprep.subr.bf16.mxu0 0
    %7552 = vmatpush2.bf16.msra.mxu0 0
    %7553 = vmatprep.subr.bf16.mxu0 0
    %7554 = vmatpush2.bf16.msra.mxu0 0
    %7555 = vmatprep.subr.bf16.mxu0 0
    %7556 = vmatpush2.bf16.msra.mxu0 0
    %7557 = vmatprep.subr.bf16.mxu0 0
    %7558 = vmatpush2.bf16.msra.mxu0 0
    %7559 = vmatprep.subr.bf16.mxu0 0
    %7560 = vmatpush2.bf16.msra.mxu0 0
    %7561 = vmatprep.subr.bf16.mxu0 0
    %7562 = vmatpush2.bf16.msra.mxu0 0
    %7563 = vmatprep.subr.bf16.mxu0 0
    %7564 = vmatpush2.bf16.msra.mxu0 0
    %7565 = vmatprep.mubr.bf16.mxu0 0
    %7566 = vmatmul.mubr.bf16.gmra.mxu0 %v7461
    %v7567 = vpop.f32.mrf.mxu0
    %v7568 = vadd.f32 %v7483, %v7567
    %v7569 = vpop.f32.mrf.mxu0
    %v7570 = vpop.f32.mrf.mxu0
    %v7571 = vpop.f32.mrf.mxu0
    %7572 = vdwg.mxu0
    %v7573 = vlaneseq
    %v7574 = vand.u32 %v7573, 127
    %vm7575 = vcmp.lt.s32.totalorder %v7574, 10
    %v7576 = vsel %vm7575, %v7568, -1e+30
    %7577 = vmax.xlane.f32.xlu0 %v7576
    %v7578 = vpop.xlane.xlu0 %7577
    %v7579 = vsub.f32 %v7576, %v7578
    %v7580 = vmul.f32 %v7579, 1.442695
    %v7581 = vpow.pop %v7580
    %7582 = vadd.xlane.f32.xlu0 %v7581
    %v7583 = vpop.xlane.xlu0 %7582
    %v7584 = vlog2.pop %v7583
    %v7585 = vmul.f32 %v7584, 0.6931472
    %v7586 = vsub.f32 %v7579, %v7585
    %v7587 = vsel %vm7575, %v7586, 0.0
    %7588 = vst [vmem:[%s9] sm:$0xff] %v7587
    // Predicated region
    $region70: #{convnet_forward.1} parent=1 // pred_check
      _
    $region71: #{convnet_forward.1} parent=1 // pred_check_branch
      %7590 = sbr.rel (0) target = $region73
    $region72: #{convnet_forward.1} parent=1 // pred_region
      _
    $region73: #{convnet_forward.1} parent=1 // pred_fallthru
      _
    // Predicated region
    $region74: #{convnet_forward.1} parent=1 // pred_check
      _
    $region75: #{convnet_forward.1} parent=1 // pred_check_branch
      %7592 = sbr.rel (0) target = $region77
    $region76: #{convnet_forward.1} parent=1 // pred_region
      _
    $region77: #{convnet_forward.1} parent=1 // pred_fallthru
      _
    %7593 = vsyncpa [#allocation3], 1
    %7594 = vsyncpa [#allocation5], 1
    %7595 = vsyncpa [#allocation8], 1
    %7596 = vsyncpa [#allocation11], 1
    %7597 = vsyncpa [#allocation14], 1

</llo_original>
